<compile_context>
chip_gen: v5e
topology: v5e:2x2
jax: 0.10.0
libtpu: 0.0.40
codegen_flags: <defaults>
</compile_context>

<pallas_src>
import functools
import math

import jax
import jax.numpy as jnp
from jax.experimental import pallas as pl
from jax.experimental.pallas import tpu as pltpu


def _round_up(n, m):
    return ((n + m - 1) // m) * m


# ----------------------------------------------------------------------------
# Fused kernel: encoder MLP -> gumbel-softmax (alphabet=2) -> decoder MLP
# ----------------------------------------------------------------------------
def _vae_fused_kernel(
    x_ref, g_ref, enc_w_ref, enc_w4_ref, bias_ref, dec_w_hbm, dec_w4_hbm,
    logits_ref, out_ref,
    dec_w_vmem, dec_w4_vmem, dma_sem,
    *, inv_temp, in_pad, h_pad, lat_pad, out_pad,
):
    f32, bf16 = jnp.float32, jnp.bfloat16

    dec_cp = pltpu.make_async_copy(dec_w_hbm, dec_w_vmem, dma_sem.at[0])
    dec4_cp = pltpu.make_async_copy(dec_w4_hbm, dec_w4_vmem, dma_sem.at[1])

    # Kick off the decoder-weight DMAs immediately: they overlap with all of
    # the encoder compute below.  VMEM scratch persists across batch-tile grid
    # iterations, so only the first tile pays for the transfer.
    @pl.when(pl.program_id(0) == 0)
    def _():
        dec_cp.start()
        dec4_cp.start()

    def dense(h_bf16, w, bias_row, n_out, relu):
        acc = jnp.dot(h_bf16, w, preferred_element_type=f32)
        acc = acc + bias_ref[bias_row:bias_row + 1, 0:n_out]
        return jnp.maximum(acc, 0.0) if relu else acc

    # ---- encoder (Dropout layers == identity in eval mode) -----------------
    r1, r2, r3 = in_pad, in_pad + h_pad, in_pad + 2 * h_pad
    h = dense(x_ref[...].astype(bf16), enc_w_ref[0:r1, :], 0, h_pad, True).astype(bf16)
    h = dense(h, enc_w_ref[r1:r2, :], 1, h_pad, True).astype(bf16)
    h = dense(h, enc_w_ref[r2:r3, :], 2, h_pad, True).astype(bf16)
    logits = dense(h, enc_w4_ref[...], 3, lat_pad, False)          # (TB, lat_pad) f32
    logits_ref[...] = logits

    # ---- gumbel-softmax over adjacent lane pairs (alphabet_size == 2) ------
    # softmax over a pair == sigmoid of the temperature-scaled difference;
    # stays lane-dense (VPU/EUP/XLU), no tiny-last-dim reduction or masked
    # stores.  Gumbel noise g is precomputed in the wrapper.
    y = (logits + g_ref[...]) * inv_temp
    lane = jax.lax.broadcasted_iota(jnp.int32, y.shape, 1)
    nxt = pltpu.roll(y, shift=lat_pad - 1, axis=1)     # y[i+1] at lane i
    prv = pltpu.roll(y, shift=1, axis=1)               # y[i-1] at lane i
    partner = jnp.where((lane & 1) == 0, nxt, prv)
    # One-sided clamp avoids f32 exp overflow; at saturation z ~1e-26 vs 0.
    d = jnp.minimum(partner - y, 60.0)
    z = pl.reciprocal(1.0 + jnp.exp(d), approx=True)   # == softmax over the pair

    # ---- decoder (weights were prefetched under the encoder compute) -------
    @pl.when(pl.program_id(0) == 0)
    def _():
        dec_cp.wait()
        dec4_cp.wait()

    s1, s2, s3 = lat_pad, lat_pad + h_pad, lat_pad + 2 * h_pad
    h = dense(z.astype(bf16), dec_w_vmem[0:s1, :], 4, h_pad, True).astype(bf16)
    h = dense(h, dec_w_vmem[s1:s2, :], 5, h_pad, True).astype(bf16)
    h = dense(h, dec_w_vmem[s2:s3, :], 6, h_pad, True).astype(bf16)
    out_ref[...] = dense(h, dec_w4_vmem[...], 7, out_pad, False)   # (TB, out_pad) f32


# ----------------------------------------------------------------------------
# Parameter initialization (mirrors torch.nn.Linear defaults), coalesced into
# lane-padded slabs.  Zero padding keeps the math exact.
# ----------------------------------------------------------------------------
def _init_linear(key, fan_in, fan_out, pad_in, pad_out):
    kw, kb = jax.random.split(key)
    bound = 1.0 / math.sqrt(fan_in)
    w = jax.random.uniform(kw, (fan_in, fan_out), jnp.float32, -bound, bound)
    b = jax.random.uniform(kb, (fan_out,), jnp.float32, -bound, bound)
    w = jnp.pad(w, ((0, pad_in - fan_in), (0, pad_out - fan_out)))
    b = jnp.pad(b, (0, pad_out - fan_out))
    return w, b


def build_vae_params(key, input_dim, alphabet_size, n_latent, hidden=500):
    AL = alphabet_size * n_latent
    IN_PAD = _round_up(input_dim, 128)
    H_PAD = _round_up(hidden, 128)
    LAT_PAD = _round_up(AL, 128)
    OUT_PAD = _round_up(input_dim, 128)

    dims = [
        (input_dim, hidden, IN_PAD, H_PAD),    # enc 1
        (hidden, hidden, H_PAD, H_PAD),        # enc 2
        (hidden, hidden, H_PAD, H_PAD),        # enc 3
        (hidden, AL, H_PAD, LAT_PAD),          # enc 4
        (AL, hidden, LAT_PAD, H_PAD),          # dec 1
        (hidden, hidden, H_PAD, H_PAD),        # dec 2
        (hidden, hidden, H_PAD, H_PAD),        # dec 3
        (hidden, input_dim, H_PAD, OUT_PAD),   # dec 4
    ]
    keys = jax.random.split(key, 8)
    ws, bs = [], []
    for k, d in zip(keys, dims):
        w, b = _init_linear(k, *d)
        ws.append(w)
        bs.append(b)

    bias_pad = max(H_PAD, LAT_PAD, OUT_PAD)
    biases = jnp.stack([jnp.pad(b, (0, bias_pad - b.shape[0])) for b in bs])

    return dict(
        enc_w=jnp.concatenate(ws[0:3], axis=0).astype(jnp.bfloat16),   # (IN+2H, H)
        enc_w4=ws[3].astype(jnp.bfloat16),                             # (H, LAT)
        dec_w=jnp.concatenate(ws[4:7], axis=0).astype(jnp.bfloat16),   # (LAT+2H, H)
        dec_w4=ws[7].astype(jnp.bfloat16),                             # (H, OUT)
        biases=biases.astype(jnp.float32),                             # (8, 512)
    )


# ----------------------------------------------------------------------------
# Full forward pass (matches VAE.forward for model='fc', eval mode)
# ----------------------------------------------------------------------------
def vae_forward(x, params, noise_u, *, n_latent, alphabet_size, temperature,
                batch_tile=8, eps=1e-20):
    # TODO(synk): alphabet_size != 2 would need a grouped lane softmax.
    assert alphabet_size == 2, "fused sigmoid formulation requires alphabet_size == 2"
    B, input_dim = x.shape
    AL = n_latent * alphabet_size

    enc_w, enc_w4 = params["enc_w"], params["enc_w4"]
    dec_w, dec_w4 = params["dec_w"], params["dec_w4"]
    biases = params["biases"]
    H_PAD = enc_w.shape[1]
    IN_PAD = enc_w.shape[0] - 2 * H_PAD
    LAT_PAD = enc_w4.shape[1]
    OUT_PAD = dec_w4.shape[1]

    TB = batch_tile
    Bp = _round_up(B, TB)
    n_tiles = Bp // TB

    x_p = jnp.pad(x, ((0, Bp - B), (0, IN_PAD - input_dim))).astype(jnp.float32)
    # Gumbel noise precomputed in the wrapper (reference formula); padding
    # lanes/rows are 0 and hit zero decoder weight rows, so they are inert.
    g = -jnp.log(-jnp.log(noise_u.reshape(B, AL) + eps) + eps)
    g_p = jnp.pad(g, ((0, Bp - B), (0, LAT_PAD - AL))).astype(jnp.float32)

    kern = functools.partial(
        _vae_fused_kernel, inv_temp=1.0 / float(temperature),
        in_pad=IN_PAD, h_pad=H_PAD, lat_pad=LAT_PAD, out_pad=OUT_PAD)

    grid_spec = pltpu.PrefetchScalarGridSpec(
        num_scalar_prefetch=0,
        grid=(n_tiles,),
        in_specs=[
            pl.BlockSpec((TB, IN_PAD), lambda i: (i, 0)),    # x tile
            pl.BlockSpec((TB, LAT_PAD), lambda i: (i, 0)),   # gumbel noise tile
            pl.BlockSpec(enc_w.shape, lambda i: (0, 0)),     # encoder slab (VMEM-resident)
            pl.BlockSpec(enc_w4.shape, lambda i: (0, 0)),
            pl.BlockSpec(biases.shape, lambda i: (0, 0)),
            pl.BlockSpec(memory_space=pl.ANY),               # decoder slab (manual overlapped DMA)
            pl.BlockSpec(memory_space=pl.ANY),               # decoder layer-4 slab
        ],
        out_specs=(
            pl.BlockSpec((TB, LAT_PAD), lambda i: (i, 0)),
            pl.BlockSpec((TB, OUT_PAD), lambda i: (i, 0)),
        ),
        scratch_shapes=[
            pltpu.VMEM(dec_w.shape, jnp.bfloat16),
            pltpu.VMEM(dec_w4.shape, jnp.bfloat16),
            pltpu.SemaphoreType.DMA((2,)),
        ],
    )

    mm_flops = 2 * Bp * (
        IN_PAD * H_PAD + 2 * H_PAD * H_PAD + H_PAD * LAT_PAD        # encoder
        + LAT_PAD * H_PAD + 2 * H_PAD * H_PAD + H_PAD * OUT_PAD)    # decoder
    bytes_accessed = (
        2 * (enc_w.size + enc_w4.size + dec_w.size + dec_w4.size)   # bf16 weights
        + 4 * biases.size
        + 4 * (x_p.size + g_p.size + Bp * LAT_PAD + Bp * OUT_PAD))

    logits_p, out_p = pl.pallas_call(
        kern,
        grid_spec=grid_spec,
        out_shape=(
            jax.ShapeDtypeStruct((Bp, LAT_PAD), jnp.float32),
            jax.ShapeDtypeStruct((Bp, OUT_PAD), jnp.float32),
        ),
        compiler_params=pltpu.CompilerParams(
            # "arbitrary": the program_id==0-guarded decoder prefetch assumes a
            # single sequential pass over the batch tiles.
            # TODO(synk): for large batches on multi-TensorCore parts (v7x),
            # route the decoder slabs through the auto pipeline (index_map
            # (0,0)) instead and mark this axis "parallel" to use both cores.
            dimension_semantics=("arbitrary",),
            vmem_limit_bytes=32 * 1024 * 1024,
        ),
        cost_estimate=pl.CostEstimate(
            flops=int(mm_flops),
            transcendentals=int(Bp * LAT_PAD),
            bytes_accessed=int(bytes_accessed),
        ),
    )(x_p, g_p, enc_w, enc_w4, biases, dec_w, dec_w4)

    logits = logits_p[:B, :AL].reshape(B, n_latent, alphabet_size)
    # torch decoder: Flatten -> Unflatten(1, (1, A*L)) keeps a singleton dim.
    output = out_p[:B, :input_dim].reshape(B, 1, input_dim)
    return logits, output


# ----------------------------------------------------------------------------
# Pure-JAX f32 reference (same padded params / same noise) for validation.
# ----------------------------------------------------------------------------
def vae_reference(x, params, noise_u, *, n_latent, alphabet_size, temperature,
                  eps=1e-20):
    B, input_dim = x.shape
    AL = n_latent * alphabet_size
    enc_w = params["enc_w"].astype(jnp.float32)
    enc_w4 = params["enc_w4"].astype(jnp.float32)
    dec_w = params["dec_w"].astype(jnp.float32)
    dec_w4 = params["dec_w4"].astype(jnp.float32)
    b = params["biases"]
    H = enc_w.shape[1]
    IN_PAD = enc_w.shape[0] - 2 * H
    LAT_PAD = enc_w4.shape[1]

    x_p = jnp.pad(x, ((0, 0), (0, IN_PAD - input_dim)))
    h = jax.nn.relu(x_p @ enc_w[:IN_PAD] + b[0])
    h = jax.nn.relu(h @ enc_w[IN_PAD:IN_PAD + H] + b[1])
    h = jax.nn.relu(h @ enc_w[IN_PAD + H:] + b[2])
    logits = (h @ enc_w4 + b[3][:LAT_PAD])[:, :AL].reshape(B, n_latent, alphabet_size)

    g = -jnp.log(-jnp.log(noise_u + eps) + eps)
    z = jax.nn.softmax((logits + g) / temperature, axis=-1).reshape(B, AL)
    z_p = jnp.pad(z, ((0, 0), (0, LAT_PAD - AL)))
    h = jax.nn.relu(z_p @ dec_w[:LAT_PAD] + b[4])
    h = jax.nn.relu(h @ dec_w[LAT_PAD:LAT_PAD + H] + b[5])
    h = jax.nn.relu(h @ dec_w[LAT_PAD + H:] + b[6])
    out = (h @ dec_w4 + b[7][:dec_w4.shape[1]])[:, :input_dim].reshape(B, 1, input_dim)
    return logits, out


# ----------------------------------------------------------------------------
# Main
# ----------------------------------------------------------------------------
if __name__ == "__main__":
    B = 16                 # 2 batch tiles of 8 -> exercises the grid path
    INPUT_DIM = 32
    ALPHABET_SIZE = 2
    N_LATENT = 10
    TEMPERATURE = 1.0

    root = jax.random.PRNGKey(0)
    k_params, k_x, k_noise = jax.random.split(root, 3)

    params = build_vae_params(k_params, INPUT_DIM, ALPHABET_SIZE, N_LATENT)
    x = jax.random.normal(k_x, (B, INPUT_DIM), jnp.float32)
    noise_u = jax.random.uniform(
        k_noise, (B, N_LATENT, ALPHABET_SIZE), jnp.float32, 0.0, 1.0)

    logits, output = vae_forward(
        x, params, noise_u,
        n_latent=N_LATENT, alphabet_size=ALPHABET_SIZE, temperature=TEMPERATURE)
    jax.block_until_ready((logits, output))

    assert logits.shape == (B, N_LATENT, ALPHABET_SIZE), logits.shape
    assert output.shape == (B, 1, INPUT_DIM), output.shape
    assert bool(jnp.all(jnp.isfinite(logits))) and bool(jnp.all(jnp.isfinite(output)))

    ref_logits, ref_output = vae_reference(
        x, params, noise_u,
        n_latent=N_LATENT, alphabet_size=ALPHABET_SIZE, temperature=TEMPERATURE)
    # bf16 matmuls + approx reciprocal vs f32 reference -> loose tolerance.
    assert bool(jnp.allclose(logits, ref_logits, rtol=0.1, atol=0.1))
    assert bool(jnp.allclose(output, ref_output, rtol=0.1, atol=0.1))

    print("KERNEL_OK")
</pallas_src>

<mosaic_0001>
module attributes {stable_mosaic.version = 11 : i64} {
  func.func @_vae_fused_kernel(%arg0: i32, %arg1: memref<8x128xf32, #tpu.memory_space<vmem>>, %arg2: memref<8x128xf32, #tpu.memory_space<vmem>>, %arg3: memref<1152x512xbf16, #tpu.memory_space<vmem>>, %arg4: memref<512x128xbf16, #tpu.memory_space<vmem>>, %arg5: memref<8x512xf32, #tpu.memory_space<vmem>>, %arg6: memref<1152x512xbf16, #tpu.memory_space<any>>, %arg7: memref<512x128xbf16, #tpu.memory_space<any>>, %arg8: memref<8x128xf32, #tpu.memory_space<vmem>>, %arg9: memref<8x128xf32, #tpu.memory_space<vmem>>, %arg10: memref<1152x512xbf16, #tpu.memory_space<vmem>>, %arg11: memref<512x128xbf16, #tpu.memory_space<vmem>>, %arg12: memref<2x!tpu.dma_semaphore, #tpu.memory_space<semaphore_mem>>) attributes {dimension_semantics = [#tpu.dimension_semantics<arbitrary>], iteration_bounds = array<i64: 2>, scalar_prefetch = 0 : i64, scratch_operands = 3 : i64, tpu.core_type = #tpu.core_type<tc>, window_params = [{transform_indices = @transform_0, window_bounds = array<i64: 8, 128>}, {transform_indices = @transform_1, window_bounds = array<i64: 8, 128>}, {pipeline_mode = #tpu.pipeline_mode<synchronous>, transform_indices = @transform_2, window_bounds = array<i64: 1152, 512>}, {pipeline_mode = #tpu.pipeline_mode<synchronous>, transform_indices = @transform_3, window_bounds = array<i64: 512, 128>}, {pipeline_mode = #tpu.pipeline_mode<synchronous>, transform_indices = @transform_4, window_bounds = array<i64: 8, 512>}, {}, {}, {transform_indices = @transform_7, window_bounds = array<i64: 8, 128>}, {transform_indices = @transform_8, window_bounds = array<i64: 8, 128>}]} {
    %c0_i32 = arith.constant 0 : i32
    %0 = arith.cmpi eq, %arg0, %c0_i32 : i32
    %1 = arith.extui %0 : i1 to i32
    %c0_i32_0 = arith.constant 0 : i32
    %c1_i32 = arith.constant 1 : i32
    %c0_i32_1 = arith.constant 0 : i32
    %2 = arith.cmpi ne, %1, %c0_i32_1 : i32
    scf.if %2 {
      %88 = tpu.memref_slice %arg12[%c0_i32_0] : memref<2x!tpu.dma_semaphore, #tpu.memory_space<semaphore_mem>> -> memref<1x!tpu.dma_semaphore, #tpu.memory_space<semaphore_mem>>
      %89 = tpu.memref_squeeze %88 : memref<1x!tpu.dma_semaphore, #tpu.memory_space<semaphore_mem>> -> memref<!tpu.dma_semaphore, #tpu.memory_space<semaphore_mem>>
      tpu.enqueue_dma source(%arg6 : memref<1152x512xbf16, #tpu.memory_space<any>>) target(%arg10 : memref<1152x512xbf16, #tpu.memory_space<vmem>>) target_semaphore(%89 : memref<!tpu.dma_semaphore, #tpu.memory_space<semaphore_mem>>)
      %90 = tpu.memref_slice %arg12[%c1_i32] : memref<2x!tpu.dma_semaphore, #tpu.memory_space<semaphore_mem>> -> memref<1x!tpu.dma_semaphore, #tpu.memory_space<semaphore_mem>>
      %91 = tpu.memref_squeeze %90 : memref<1x!tpu.dma_semaphore, #tpu.memory_space<semaphore_mem>> -> memref<!tpu.dma_semaphore, #tpu.memory_space<semaphore_mem>>
      tpu.enqueue_dma source(%arg7 : memref<512x128xbf16, #tpu.memory_space<any>>) target(%arg11 : memref<512x128xbf16, #tpu.memory_space<vmem>>) target_semaphore(%91 : memref<!tpu.dma_semaphore, #tpu.memory_space<semaphore_mem>>)
    } else {
    }
    %c0 = arith.constant 0 : index
    %c0_2 = arith.constant 0 : index
    %3 = vector.load %arg1[%c0, %c0_2] : memref<8x128xf32, #tpu.memory_space<vmem>>, vector<8x128xf32>
    %4 = arith.truncf %3 : vector<8x128xf32> to vector<8x128xbf16>
    %c0_3 = arith.constant 0 : index
    %c0_4 = arith.constant 0 : index
    %5 = vector.load %arg3[%c0_3, %c0_4] : memref<1152x512xbf16, #tpu.memory_space<vmem>>, vector<128x512xbf16>
    %cst = arith.constant dense<0.000000e+00> : vector<8x512xf32>
    %6 = tpu.matmul %4, %5, %cst {dimension_numbers = #tpu.dot_dimension_numbers<[1], [0], [0], [1], [0, 0, 1, 1], [], []>} : vector<8x128xbf16>, vector<128x512xbf16>, vector<8x512xf32> -> vector<8x512xf32>
    %c0_5 = arith.constant 0 : index
    %c0_6 = arith.constant 0 : index
    %7 = vector.load %arg5[%c0_5, %c0_6] : memref<8x512xf32, #tpu.memory_space<vmem>>, vector<1x512xf32>
    %8 = vector.broadcast %7 : vector<1x512xf32> to vector<8x512xf32>
    %9 = arith.addf %6, %8 : vector<8x512xf32>
    %cst_7 = arith.constant 0.000000e+00 : f32
    %10 = vector.broadcast %cst_7 : f32 to vector<8x512xf32>
    %11 = arith.maximumf %9, %10 : vector<8x512xf32>
    %12 = arith.truncf %11 : vector<8x512xf32> to vector<8x512xbf16>
    %c128 = arith.constant 128 : index
    %c0_8 = arith.constant 0 : index
    %13 = vector.load %arg3[%c128, %c0_8] : memref<1152x512xbf16, #tpu.memory_space<vmem>>, vector<512x512xbf16>
    %cst_9 = arith.constant dense<0.000000e+00> : vector<8x512xf32>
    %14 = tpu.matmul %12, %13, %cst_9 {dimension_numbers = #tpu.dot_dimension_numbers<[1], [0], [0], [1], [0, 0, 1, 1], [], []>} : vector<8x512xbf16>, vector<512x512xbf16>, vector<8x512xf32> -> vector<8x512xf32>
    %c1 = arith.constant 1 : index
    %c0_10 = arith.constant 0 : index
    %15 = vector.load %arg5[%c1, %c0_10] : memref<8x512xf32, #tpu.memory_space<vmem>>, vector<1x512xf32>
    %16 = vector.broadcast %15 : vector<1x512xf32> to vector<8x512xf32>
    %17 = arith.addf %14, %16 : vector<8x512xf32>
    %cst_11 = arith.constant 0.000000e+00 : f32
    %18 = vector.broadcast %cst_11 : f32 to vector<8x512xf32>
    %19 = arith.maximumf %17, %18 : vector<8x512xf32>
    %20 = arith.truncf %19 : vector<8x512xf32> to vector<8x512xbf16>
    %c640 = arith.constant 640 : index
    %c0_12 = arith.constant 0 : index
    %21 = vector.load %arg3[%c640, %c0_12] : memref<1152x512xbf16, #tpu.memory_space<vmem>>, vector<512x512xbf16>
    %cst_13 = arith.constant dense<0.000000e+00> : vector<8x512xf32>
    %22 = tpu.matmul %20, %21, %cst_13 {dimension_numbers = #tpu.dot_dimension_numbers<[1], [0], [0], [1], [0, 0, 1, 1], [], []>} : vector<8x512xbf16>, vector<512x512xbf16>, vector<8x512xf32> -> vector<8x512xf32>
    %c2 = arith.constant 2 : index
    %c0_14 = arith.constant 0 : index
    %23 = vector.load %arg5[%c2, %c0_14] : memref<8x512xf32, #tpu.memory_space<vmem>>, vector<1x512xf32>
    %24 = vector.broadcast %23 : vector<1x512xf32> to vector<8x512xf32>
    %25 = arith.addf %22, %24 : vector<8x512xf32>
    %cst_15 = arith.constant 0.000000e+00 : f32
    %26 = vector.broadcast %cst_15 : f32 to vector<8x512xf32>
    %27 = arith.maximumf %25, %26 : vector<8x512xf32>
    %28 = arith.truncf %27 : vector<8x512xf32> to vector<8x512xbf16>
    %c0_16 = arith.constant 0 : index
    %c0_17 = arith.constant 0 : index
    %29 = vector.load %arg4[%c0_16, %c0_17] : memref<512x128xbf16, #tpu.memory_space<vmem>>, vector<512x128xbf16>
    %cst_18 = arith.constant dense<0.000000e+00> : vector<8x128xf32>
    %30 = tpu.matmul %28, %29, %cst_18 {dimension_numbers = #tpu.dot_dimension_numbers<[1], [0], [0], [1], [0, 0, 1, 1], [], []>} : vector<8x512xbf16>, vector<512x128xbf16>, vector<8x128xf32> -> vector<8x128xf32>
    %c3 = arith.constant 3 : index
    %c0_19 = arith.constant 0 : index
    %31 = vector.load %arg5[%c3, %c0_19] : memref<8x512xf32, #tpu.memory_space<vmem>>, vector<1x128xf32>
    %32 = vector.broadcast %31 : vector<1x128xf32> to vector<8x128xf32>
    %33 = arith.addf %30, %32 : vector<8x128xf32>
    %c0_20 = arith.constant 0 : index
    %c0_21 = arith.constant 0 : index
    %34 = vector.load %arg8[%c0_20, %c0_21] : memref<8x128xf32, #tpu.memory_space<vmem>>, vector<8x128xf32>
    tpu.vector_store %arg8[%c0_20, %c0_21], %33 {strides = array<i32>} : memref<8x128xf32, #tpu.memory_space<vmem>>, vector<8x128xf32>,
    %c0_22 = arith.constant 0 : index
    %c0_23 = arith.constant 0 : index
    %35 = vector.load %arg2[%c0_22, %c0_23] : memref<8x128xf32, #tpu.memory_space<vmem>>, vector<8x128xf32>
    %36 = arith.addf %33, %35 : vector<8x128xf32>
    %cst_24 = arith.constant 1.000000e+00 : f32
    %37 = vector.broadcast %cst_24 : f32 to vector<8x128xf32>
    %38 = arith.mulf %36, %37 : vector<8x128xf32>
    %39 = tpu.iota {dimensions = array<i32: 1>} : vector<8x128xi32>
    %c127_i32 = arith.constant 127 : i32
    %40 = tpu.dynamic_rotate %38 by %c127_i32 dim 1 : vector<8x128xf32>, i32 -> vector<8x128xf32>
    %c1_i32_25 = arith.constant 1 : i32
    %41 = tpu.dynamic_rotate %38 by %c1_i32_25 dim 1 : vector<8x128xf32>, i32 -> vector<8x128xf32>
    %c1_i32_26 = arith.constant 1 : i32
    %42 = vector.broadcast %c1_i32_26 : i32 to vector<8x128xi32>
    %43 = arith.andi %39, %42 : vector<8x128xi32>
    %c0_i32_27 = arith.constant 0 : i32
    %44 = vector.broadcast %c0_i32_27 : i32 to vector<8x128xi32>
    %45 = arith.cmpi eq, %43, %44 : vector<8x128xi32>
    %46 = arith.select %45, %40, %41 : vector<8x128xi1>, vector<8x128xf32>
    %47 = arith.subf %46, %38 : vector<8x128xf32>
    %cst_28 = arith.constant 6.000000e+01 : f32
    %48 = vector.broadcast %cst_28 : f32 to vector<8x128xf32>
    %49 = arith.minimumf %47, %48 : vector<8x128xf32>
    %50 = math.exp %49 : vector<8x128xf32>
    %cst_29 = arith.constant 1.000000e+00 : f32
    %51 = vector.broadcast %cst_29 : f32 to vector<8x128xf32>
    %52 = arith.addf %51, %50 : vector<8x128xf32>
    %53 = tpu.reciprocal %52 {approx = true} : vector<8x128xf32> -> vector<8x128xf32>
    %c0_i32_30 = arith.constant 0 : i32
    %54 = arith.cmpi eq, %arg0, %c0_i32_30 : i32
    %55 = arith.extui %54 : i1 to i32
    %c0_i32_31 = arith.constant 0 : i32
    %c1_i32_32 = arith.constant 1 : i32
    %c0_i32_33 = arith.constant 0 : i32
    %56 = arith.cmpi ne, %55, %c0_i32_33 : i32
    scf.if %56 {
      %88 = tpu.memref_slice %arg12[%c0_i32_31] : memref<2x!tpu.dma_semaphore, #tpu.memory_space<semaphore_mem>> -> memref<1x!tpu.dma_semaphore, #tpu.memory_space<semaphore_mem>>
      %89 = tpu.memref_squeeze %88 : memref<1x!tpu.dma_semaphore, #tpu.memory_space<semaphore_mem>> -> memref<!tpu.dma_semaphore, #tpu.memory_space<semaphore_mem>>
      tpu.wait_dma2 semaphore(%89 : memref<!tpu.dma_semaphore, #tpu.memory_space<semaphore_mem>>) src(%arg6 : memref<1152x512xbf16, #tpu.memory_space<any>>) dst(%arg10 : memref<1152x512xbf16, #tpu.memory_space<vmem>>)
      %90 = tpu.memref_slice %arg12[%c1_i32_32] : memref<2x!tpu.dma_semaphore, #tpu.memory_space<semaphore_mem>> -> memref<1x!tpu.dma_semaphore, #tpu.memory_space<semaphore_mem>>
      %91 = tpu.memref_squeeze %90 : memref<1x!tpu.dma_semaphore, #tpu.memory_space<semaphore_mem>> -> memref<!tpu.dma_semaphore, #tpu.memory_space<semaphore_mem>>
      tpu.wait_dma2 semaphore(%91 : memref<!tpu.dma_semaphore, #tpu.memory_space<semaphore_mem>>) src(%arg7 : memref<512x128xbf16, #tpu.memory_space<any>>) dst(%arg11 : memref<512x128xbf16, #tpu.memory_space<vmem>>)
    } else {
    }
    %57 = arith.truncf %53 : vector<8x128xf32> to vector<8x128xbf16>
    %c0_34 = arith.constant 0 : index
    %c0_35 = arith.constant 0 : index
    %58 = vector.load %arg10[%c0_34, %c0_35] : memref<1152x512xbf16, #tpu.memory_space<vmem>>, vector<128x512xbf16>
    %cst_36 = arith.constant dense<0.000000e+00> : vector<8x512xf32>
    %59 = tpu.matmul %57, %58, %cst_36 {dimension_numbers = #tpu.dot_dimension_numbers<[1], [0], [0], [1], [0, 0, 1, 1], [], []>} : vector<8x128xbf16>, vector<128x512xbf16>, vector<8x512xf32> -> vector<8x512xf32>
    %c4 = arith.constant 4 : index
    %c0_37 = arith.constant 0 : index
    %60 = vector.load %arg5[%c4, %c0_37] : memref<8x512xf32, #tpu.memory_space<vmem>>, vector<1x512xf32>
    %61 = vector.broadcast %60 : vector<1x512xf32> to vector<8x512xf32>
    %62 = arith.addf %59, %61 : vector<8x512xf32>
    %cst_38 = arith.constant 0.000000e+00 : f32
    %63 = vector.broadcast %cst_38 : f32 to vector<8x512xf32>
    %64 = arith.maximumf %62, %63 : vector<8x512xf32>
    %65 = arith.truncf %64 : vector<8x512xf32> to vector<8x512xbf16>
    %c128_39 = arith.constant 128 : index
    %c0_40 = arith.constant 0 : index
    %66 = vector.load %arg10[%c128_39, %c0_40] : memref<1152x512xbf16, #tpu.memory_space<vmem>>, vector<512x512xbf16>
    %cst_41 = arith.constant dense<0.000000e+00> : vector<8x512xf32>
    %67 = tpu.matmul %65, %66, %cst_41 {dimension_numbers = #tpu.dot_dimension_numbers<[1], [0], [0], [1], [0, 0, 1, 1], [], []>} : vector<8x512xbf16>, vector<512x512xbf16>, vector<8x512xf32> -> vector<8x512xf32>
    %c5 = arith.constant 5 : index
    %c0_42 = arith.constant 0 : index
    %68 = vector.load %arg5[%c5, %c0_42] : memref<8x512xf32, #tpu.memory_space<vmem>>, vector<1x512xf32>
    %69 = vector.broadcast %68 : vector<1x512xf32> to vector<8x512xf32>
    %70 = arith.addf %67, %69 : vector<8x512xf32>
    %cst_43 = arith.constant 0.000000e+00 : f32
    %71 = vector.broadcast %cst_43 : f32 to vector<8x512xf32>
    %72 = arith.maximumf %70, %71 : vector<8x512xf32>
    %73 = arith.truncf %72 : vector<8x512xf32> to vector<8x512xbf16>
    %c640_44 = arith.constant 640 : index
    %c0_45 = arith.constant 0 : index
    %74 = vector.load %arg10[%c640_44, %c0_45] : memref<1152x512xbf16, #tpu.memory_space<vmem>>, vector<512x512xbf16>
    %cst_46 = arith.constant dense<0.000000e+00> : vector<8x512xf32>
    %75 = tpu.matmul %73, %74, %cst_46 {dimension_numbers = #tpu.dot_dimension_numbers<[1], [0], [0], [1], [0, 0, 1, 1], [], []>} : vector<8x512xbf16>, vector<512x512xbf16>, vector<8x512xf32> -> vector<8x512xf32>
    %c6 = arith.constant 6 : index
    %c0_47 = arith.constant 0 : index
    %76 = vector.load %arg5[%c6, %c0_47] : memref<8x512xf32, #tpu.memory_space<vmem>>, vector<1x512xf32>
    %77 = vector.broadcast %76 : vector<1x512xf32> to vector<8x512xf32>
    %78 = arith.addf %75, %77 : vector<8x512xf32>
    %cst_48 = arith.constant 0.000000e+00 : f32
    %79 = vector.broadcast %cst_48 : f32 to vector<8x512xf32>
    %80 = arith.maximumf %78, %79 : vector<8x512xf32>
    %81 = arith.truncf %80 : vector<8x512xf32> to vector<8x512xbf16>
    %c0_49 = arith.constant 0 : index
    %c0_50 = arith.constant 0 : index
    %82 = vector.load %arg11[%c0_49, %c0_50] : memref<512x128xbf16, #tpu.memory_space<vmem>>, vector<512x128xbf16>
    %cst_51 = arith.constant dense<0.000000e+00> : vector<8x128xf32>
    %83 = tpu.matmul %81, %82, %cst_51 {dimension_numbers = #tpu.dot_dimension_numbers<[1], [0], [0], [1], [0, 0, 1, 1], [], []>} : vector<8x512xbf16>, vector<512x128xbf16>, vector<8x128xf32> -> vector<8x128xf32>
    %c7 = arith.constant 7 : index
    %c0_52 = arith.constant 0 : index
    %84 = vector.load %arg5[%c7, %c0_52] : memref<8x512xf32, #tpu.memory_space<vmem>>, vector<1x128xf32>
    %85 = vector.broadcast %84 : vector<1x128xf32> to vector<8x128xf32>
    %86 = arith.addf %83, %85 : vector<8x128xf32>
    %c0_53 = arith.constant 0 : index
    %c0_54 = arith.constant 0 : index
    %87 = vector.load %arg9[%c0_53, %c0_54] : memref<8x128xf32, #tpu.memory_space<vmem>>, vector<8x128xf32>
    tpu.vector_store %arg9[%c0_53, %c0_54], %86 {strides = array<i32>} : memref<8x128xf32, #tpu.memory_space<vmem>>, vector<8x128xf32>,
    return
  }
  func.func @transform_0(%arg0: i32) -> (i32, i32) {
    %c0_i32 = arith.constant 0 : i32
    %c0_i32_0 = arith.constant 0 : i32
    return %arg0, %c0_i32 : i32, i32
  }
  func.func @transform_1(%arg0: i32) -> (i32, i32) {
    %c0_i32 = arith.constant 0 : i32
    %c0_i32_0 = arith.constant 0 : i32
    return %arg0, %c0_i32 : i32, i32
  }
  func.func @transform_2(%arg0: i32) -> (i32, i32) {
    %c0_i32 = arith.constant 0 : i32
    %c0_i32_0 = arith.constant 0 : i32
    %c0_i32_1 = arith.constant 0 : i32
    return %c0_i32, %c0_i32_0 : i32, i32
  }
  func.func @transform_3(%arg0: i32) -> (i32, i32) {
    %c0_i32 = arith.constant 0 : i32
    %c0_i32_0 = arith.constant 0 : i32
    %c0_i32_1 = arith.constant 0 : i32
    return %c0_i32, %c0_i32_0 : i32, i32
  }
  func.func @transform_4(%arg0: i32) -> (i32, i32) {
    %c0_i32 = arith.constant 0 : i32
    %c0_i32_0 = arith.constant 0 : i32
    %c0_i32_1 = arith.constant 0 : i32
    return %c0_i32, %c0_i32_0 : i32, i32
  }
  func.func @transform_7(%arg0: i32) -> (i32, i32) {
    %c0_i32 = arith.constant 0 : i32
    %c0_i32_0 = arith.constant 0 : i32
    return %arg0, %c0_i32 : i32, i32
  }
  func.func @transform_8(%arg0: i32) -> (i32, i32) {
    %c0_i32 = arith.constant 0 : i32
    %c0_i32_0 = arith.constant 0 : i32
    return %arg0, %c0_i32 : i32, i32
  }
}

</mosaic_0001>

<llo_original>
// kernel: tpu_custom_call.1
$region0: #{tpu_custom_call.1}
  #allocation0 [shape = 'u32[]', space=smem, size = 0x4, offset = 0x4, fixed_abs, tag = 'smem constant byte address 0x4 - core index']
  #allocation1 [shape = 'u32[72,128]{1,0:T(1,128)}', space=vmem, size = 0x9000, scoped, tag = 'internal scratch']
  #allocation2 [shape = 'bf16[1152,512]{1,0:T(8,128)(2,1)}', space=vmem, size = 0x120000, scoped, tag = 'scratch operand']
  #allocation3 [shape = 'bf16[512,128]{1,0:T(8,128)(2,1)}', space=vmem, size = 0x20000, scoped, tag = 'scratch operand']
  #allocation4 [shape = 's32[2]{0}', space=sflag, size = 0x8, scoped, tag = 'scratch operand']
  #allocation17 [shape = 's32[]', space=sflag, size = 0x4, offset = 0, fixed_abs, tag = 'sflag constant byte address 0x0 - dummy sync flag']
  #allocation18 [shape = 's32[]', space=sflag, size = 0x4, offset = 0, fixed_abs, tag = 'sflag constant byte address 0x0 - dummy sync flag']
  #allocation19 [shape = 'u32[]', space=smem, size = 0x4, offset = 0x44, fixed_abs, tag = 'smem constant byte address 0x44 - assertion arg 0']
  #allocation20 [shape = 'u32[]', space=smem, size = 0x4, offset = 0x48, fixed_abs, tag = 'smem constant byte address 0x48 - assertion arg 1']
  #allocation21 [shape = 's32[]', space=sflag, size = 0x4, offset = 0, fixed_abs, tag = 'sflag constant byte address 0x0 - dummy sync flag']
  #allocation22 [shape = 's32[]', space=sflag, size = 0x4, offset = 0, fixed_abs, tag = 'sflag constant byte address 0x0 - dummy sync flag']
  %s0 = inlined_call_operand.hbm [shape: f32[16,128], index: 0, kind: input, shape index: {}]
  %s1 = inlined_call_operand.hbm [shape: f32[16,128], index: 1, kind: input, shape index: {}]
  %s2 = inlined_call_operand.hbm [shape: bf16[1152,512], index: 2, kind: input, shape index: {}]
  %s3 = inlined_call_operand.hbm [shape: bf16[512,128], index: 3, kind: input, shape index: {}]
  %s4 = inlined_call_operand.hbm [shape: f32[8,512], index: 4, kind: input, shape index: {}]
  %s5 = inlined_call_operand.hbm [shape: bf16[1152,512], index: 5, kind: input, shape index: {}]
  %s6 = inlined_call_operand.hbm [shape: bf16[512,128], index: 6, kind: input, shape index: {}]
  %s7 = inlined_call_operand.hbm [shape: f32[16,128], index: 7, kind: output, shape index: {0}]
  %s8 = inlined_call_operand.hbm [shape: f32[16,128], index: 8, kind: output, shape index: {1}]
  %9 = xla_tuple %s7, %s8
  %s10 = sld [smem:[#allocation0]]
  $region97: #{tpu_custom_call.1} parent=0
    _
  %s12 = ssub.s32 1, %s10
  %s13 = scalar_select 0, %s12, %s10
  $region1: #{tpu_custom_call.1} parent=0
    #allocation5 [shape = 'u8[8192]{0}', space=vmem, size = 0x2000, scoped, tag = 'input window, operand 0']
    #allocation6 [shape = 's32[2]{0}', space=sflag, size = 0x8, scoped, tag = 'scoped memory for tpu_custom_call.1']
    #allocation7 [shape = 's32[2]{0}', space=sflag, size = 0x8, scoped, tag = 'scoped memory for tpu_custom_call.1']
    #allocation8 [shape = 'u8[8192]{0}', space=vmem, size = 0x2000, scoped, tag = 'input window, operand 1']
    #allocation9 [shape = 's32[2]{0}', space=sflag, size = 0x8, scoped, tag = 'scoped memory for tpu_custom_call.1']
    #allocation10 [shape = 'u8[1179648]{0}', space=vmem, size = 0x120000, scoped, tag = 'input window, operand 2, single buffered']
    #allocation11 [shape = 'u8[131072]{0}', space=vmem, size = 0x20000, scoped, tag = 'input window, operand 3, single buffered']
    #allocation12 [shape = 's32[1]{0}', space=sflag, size = 0x4, scoped, tag = 'scoped memory for tpu_custom_call.1']
    #allocation13 [shape = 'u8[16384]{0}', space=vmem, size = 0x4000, scoped, tag = 'input window, operand 4, single buffered']
    #allocation14 [shape = 'u8[8192]{0}', space=vmem, size = 0x2000, scoped, tag = 'output window, operand 0']
    #allocation15 [shape = 'u8[8192]{0}', space=vmem, size = 0x2000, scoped, tag = 'output window, operand 1']
    #allocation16 [shape = 's32[2]{0}', space=sflag, size = 0x8, scoped, tag = 'scoped memory for tpu_custom_call.1']
    %14 = vsyncpa [#allocation6], 0
    %s15 = scalar_lea.sflag [#allocation6], 1
    %16 = vsyncpa %s15, 0
    %17 = vsyncpa [#allocation9], 0
    %s18 = scalar_lea.sflag [#allocation9], 1
    %19 = vsyncpa %s18, 0
    %20 = vsyncpa [#allocation12], 0
    %21 = vsyncpa [#allocation7], 0
    %s22 = scalar_lea.sflag [#allocation7], 1
    %23 = vsyncpa %s22, 0
    %24 = vsyncpa [#allocation16], 0
    %s25 = scalar_lea.sflag [#allocation16], 1
    %26 = vsyncpa %s25, 0
    loop: start=0, step=1, limit=4
    $region2: #{tpu_custom_call.1} parent=1 // loop_pre_header
      _
    $region3: #{tpu_custom_call.1} parent=1 // loop_header
      %s28 = sphi 0, %s32
      %p29 = scmp.ge.s32.totalorder %s28, 4
      %s38 = sphi 0, %s40
      %s41 = sphi 0, %s38
      %s42 = sphi 0, %s41
      %s58 = sphi 0, %s42
      %s64 = sphi 0, %s66
      %s67 = sphi 0, %s64
      %s68 = sphi 0, %s67
      %s84 = sphi 0, %s68
      %s88 = sphi 0, %s88
      %s90 = sphi 0, %s88
      %s91 = sphi 0, %s90
      %s105 = sphi 0, %s91
      %s109 = sphi 0, %s109
      %s111 = sphi 0, %s109
      %s112 = sphi 0, %s111
      %s126 = sphi 0, %s112
      %s130 = sphi 0, %s130
      %s132 = sphi 0, %s130
      %s133 = sphi 0, %s132
      %s147 = sphi 0, %s133
      %s153 = sphi 0, %s155
      %s156 = sphi 0, %s153
      %s157 = sphi 0, %s156
      %s173 = sphi 0, %s157
      %s179 = sphi 0, %s181
      %s182 = sphi 0, %s179
      %s183 = sphi 0, %s182
      %s199 = sphi 0, %s183
    $region4: #{tpu_custom_call.1} parent=1 // loop_header_branch
      %31 = sbr.rel (%p29) target = $region8
    $region5: #{tpu_custom_call.1} parent=1 // loop_body
      %s33 = ssub.s32 %s28, 1
      %s34 = ssub.s32 %s28, 2
      %s35 = sadd.s32 %s28, 1
      %s36 = ssub.s32 %s28, %s35
      %p37 = scmp.eq.s32.totalorder %s36, 0
      %s39 = sadd.s32 %s38, 1
      %s40 = scalar_select %p37, %s38, %s39
      %p43 = pneg %p37
      %p44 = scmp.eq.s32.totalorder %s28, 1
      %p45 = por %p43, %p44
      %p46 = scmp.ne.s32.totalorder %s38, %s41
      %p47 = scmp.eq.s32.totalorder %s28, 0
      %p48 = por %p46, %p47
      %p49 = scmp.ne.s32.totalorder %s38, %s41
      %p50 = scmp.eq.s32.totalorder %s33, 1
      %p51 = por %p49, %p50
      %p52 = scmp.ne.s32.totalorder %s41, %s42
      %p53 = scmp.eq.s32.totalorder %s33, 0
      %p54 = por %p52, %p53
      %p55 = scmp.ne.s32.totalorder %s41, %s42
      %p56 = scmp.eq.s32.totalorder %s34, 1
      %p57 = por %p55, %p56
      %p59 = scmp.ne.s32.totalorder %s42, %s58
      %p60 = scmp.eq.s32.totalorder %s34, 0
      %p61 = por %p59, %p60
      %s62 = ssub.s32 %s28, %s35
      %p63 = scmp.eq.s32.totalorder %s62, 0
      %s65 = sadd.s32 %s64, 1
      %s66 = scalar_select %p63, %s64, %s65
      %p69 = pneg %p63
      %p70 = scmp.eq.s32.totalorder %s28, 1
      %p71 = por %p69, %p70
      %p72 = scmp.ne.s32.totalorder %s64, %s67
      %p73 = scmp.eq.s32.totalorder %s28, 0
      %p74 = por %p72, %p73
      %p75 = scmp.ne.s32.totalorder %s64, %s67
      %p76 = scmp.eq.s32.totalorder %s33, 1
      %p77 = por %p75, %p76
      %p78 = scmp.ne.s32.totalorder %s67, %s68
      %p79 = scmp.eq.s32.totalorder %s33, 0
      %p80 = por %p78, %p79
      %p81 = scmp.ne.s32.totalorder %s67, %s68
      %p82 = scmp.eq.s32.totalorder %s34, 1
      %p83 = por %p81, %p82
      %p85 = scmp.ne.s32.totalorder %s68, %s84
      %p86 = scmp.eq.s32.totalorder %s34, 0
      %p87 = por %p85, %p86
      %s89 = sadd.s32 %s88, 1
      %p92 = scmp.eq.s32.totalorder %s28, 1
      %p93 = scmp.ne.s32.totalorder %s88, %s90
      %p94 = scmp.eq.s32.totalorder %s28, 0
      %p95 = por %p93, %p94
      %p96 = scmp.ne.s32.totalorder %s88, %s90
      %p97 = scmp.eq.s32.totalorder %s33, 1
      %p98 = por %p96, %p97
      %p99 = scmp.ne.s32.totalorder %s90, %s91
      %p100 = scmp.eq.s32.totalorder %s33, 0
      %p101 = por %p99, %p100
      %p102 = scmp.ne.s32.totalorder %s90, %s91
      %p103 = scmp.eq.s32.totalorder %s34, 1
      %p104 = por %p102, %p103
      %p106 = scmp.ne.s32.totalorder %s91, %s105
      %p107 = scmp.eq.s32.totalorder %s34, 0
      %p108 = por %p106, %p107
      %s110 = sadd.s32 %s109, 1
      %p113 = scmp.eq.s32.totalorder %s28, 1
      %p114 = scmp.ne.s32.totalorder %s109, %s111
      %p115 = scmp.eq.s32.totalorder %s28, 0
      %p116 = por %p114, %p115
      %p117 = scmp.ne.s32.totalorder %s109, %s111
      %p118 = scmp.eq.s32.totalorder %s33, 1
      %p119 = por %p117, %p118
      %p120 = scmp.ne.s32.totalorder %s111, %s112
      %p121 = scmp.eq.s32.totalorder %s33, 0
      %p122 = por %p120, %p121
      %p123 = scmp.ne.s32.totalorder %s111, %s112
      %p124 = scmp.eq.s32.totalorder %s34, 1
      %p125 = por %p123, %p124
      %p127 = scmp.ne.s32.totalorder %s112, %s126
      %p128 = scmp.eq.s32.totalorder %s34, 0
      %p129 = por %p127, %p128
      %s131 = sadd.s32 %s130, 1
      %p134 = scmp.eq.s32.totalorder %s28, 1
      %p135 = scmp.ne.s32.totalorder %s130, %s132
      %p136 = scmp.eq.s32.totalorder %s28, 0
      %p137 = por %p135, %p136
      %p138 = scmp.ne.s32.totalorder %s130, %s132
      %p139 = scmp.eq.s32.totalorder %s33, 1
      %p140 = por %p138, %p139
      %p141 = scmp.ne.s32.totalorder %s132, %s133
      %p142 = scmp.eq.s32.totalorder %s33, 0
      %p143 = por %p141, %p142
      %p144 = scmp.ne.s32.totalorder %s132, %s133
      %p145 = scmp.eq.s32.totalorder %s34, 1
      %p146 = por %p144, %p145
      %p148 = scmp.ne.s32.totalorder %s133, %s147
      %p149 = scmp.eq.s32.totalorder %s34, 0
      %p150 = por %p148, %p149
      %s151 = ssub.s32 %s28, %s35
      %p152 = scmp.eq.s32.totalorder %s151, 0
      %s154 = sadd.s32 %s153, 1
      %s155 = scalar_select %p152, %s153, %s154
      %p158 = pneg %p152
      %p159 = scmp.eq.s32.totalorder %s28, 1
      %p160 = por %p158, %p159
      %p161 = scmp.ne.s32.totalorder %s153, %s156
      %p162 = scmp.eq.s32.totalorder %s28, 0
      %p163 = por %p161, %p162
      %p164 = scmp.ne.s32.totalorder %s153, %s156
      %p165 = scmp.eq.s32.totalorder %s33, 1
      %p166 = por %p164, %p165
      %p167 = scmp.ne.s32.totalorder %s156, %s157
      %p168 = scmp.eq.s32.totalorder %s33, 0
      %p169 = por %p167, %p168
      %p170 = scmp.ne.s32.totalorder %s156, %s157
      %p171 = scmp.eq.s32.totalorder %s34, 1
      %p172 = por %p170, %p171
      %p174 = scmp.ne.s32.totalorder %s157, %s173
      %p175 = scmp.eq.s32.totalorder %s34, 0
      %p176 = por %p174, %p175
      %s177 = ssub.s32 %s28, %s35
      %p178 = scmp.eq.s32.totalorder %s177, 0
      %s180 = sadd.s32 %s179, 1
      %s181 = scalar_select %p178, %s179, %s180
      %p184 = pneg %p178
      %p185 = scmp.eq.s32.totalorder %s28, 1
      %p186 = por %p184, %p185
      %p187 = scmp.ne.s32.totalorder %s179, %s182
      %p188 = scmp.eq.s32.totalorder %s28, 0
      %p189 = por %p187, %p188
      %p190 = scmp.ne.s32.totalorder %s179, %s182
      %p191 = scmp.eq.s32.totalorder %s33, 1
      %p192 = por %p190, %p191
      %p193 = scmp.ne.s32.totalorder %s182, %s183
      %p194 = scmp.eq.s32.totalorder %s33, 0
      %p195 = por %p193, %p194
      %p196 = scmp.ne.s32.totalorder %s182, %s183
      %p197 = scmp.eq.s32.totalorder %s34, 1
      %p198 = por %p196, %p197
      %p200 = scmp.ne.s32.totalorder %s183, %s199
      %p201 = scmp.eq.s32.totalorder %s34, 0
      %p202 = por %p200, %p201
      %p203 = scmp.le.s32.totalorder 1, %s28
      %p204 = scmp.lt.s32.totalorder %s28, 3
      %p205 = pnand %p203, %p204
      %p206 = pneg %p205
      // Predicated region
      $region9: #{tpu_custom_call.1} parent=5 // pred_check
        _
      $region10: #{tpu_custom_call.1} parent=5 // pred_check_branch
        %208 = sbr.rel (%p205) target = $region12
      $region11: #{tpu_custom_call.1} parent=5 // pred_region
        %s209 = ssub.s32 %s28, 1
        // Predicated region
        $region13: #{tpu_custom_call.1} parent=11 // pred_check
          %p210 = pneg %p101
        $region14: #{tpu_custom_call.1} parent=11 // pred_check_branch
          %212 = sbr.rel (%p210) target = $region16
        $region15: #{tpu_custom_call.1} parent=11 // pred_region
          %214 = vsyncadd [#allocation9], 0
          %s215 = sshll.u32 %s2, 4
          %s216 = int_to_ptr.hbm [resolvable:$true] %s215
          %s217 = sshll.u32 [#allocation10], 4
          %s218 = int_to_ptr.vmem [resolvable:$true] %s217
          %223 = dma.hbm_to_vmem [thread:$0]  %s216, 36864, %s218, [#allocation9], 256, 256, 16
        $region16: #{tpu_custom_call.1} parent=11 // pred_fallthru
          _
        // Predicated region
        $region17: #{tpu_custom_call.1} parent=11 // pred_check
          %p224 = pneg %p122
        $region18: #{tpu_custom_call.1} parent=11 // pred_check_branch
          %226 = sbr.rel (%p224) target = $region20
        $region19: #{tpu_custom_call.1} parent=11 // pred_region
          %228 = vsyncadd [#allocation12], 0
          %s229 = sshll.u32 %s3, 4
          %s230 = int_to_ptr.hbm [resolvable:$true] %s229
          %s231 = sshll.u32 [#allocation11], 4
          %s232 = int_to_ptr.vmem [resolvable:$true] %s231
          %237 = dma.hbm_to_vmem [thread:$0]  %s230, 4096, %s232, [#allocation12], 64, 64, 4
        $region20: #{tpu_custom_call.1} parent=11 // pred_fallthru
          _
        // Predicated region
        $region21: #{tpu_custom_call.1} parent=11 // pred_check
          %p238 = pneg %p143
        $region22: #{tpu_custom_call.1} parent=11 // pred_check_branch
          %240 = sbr.rel (%p238) target = $region24
        $region23: #{tpu_custom_call.1} parent=11 // pred_region
          %242 = vsyncadd [#allocation12], 0
          %s244 = sshll.u32 %s4, 4
          %s245 = int_to_ptr.hbm [resolvable:$true] %s244
          %s246 = sshll.u32 [#allocation13], 4
          %s247 = int_to_ptr.vmem [resolvable:$true] %s246
          %249 = dma.hbm_to_vmem [thread:$0]  %s245, 512, %s247, [#allocation12]
        $region24: #{tpu_custom_call.1} parent=11 // pred_fallthru
          _
      $region12: #{tpu_custom_call.1} parent=5 // pred_fallthru
        _
      %p250 = scmp.lt.s32.totalorder %s28, 2
      // Predicated region
      $region25: #{tpu_custom_call.1} parent=5 // pred_check
        %p251 = pneg %p250
      $region26: #{tpu_custom_call.1} parent=5 // pred_check_branch
        %253 = sbr.rel (%p251) target = $region28
      $region27: #{tpu_custom_call.1} parent=5 // pred_region
        // Predicated region
        $region29: #{tpu_custom_call.1} parent=27 // pred_check
          %p254 = pneg %p48
        $region30: #{tpu_custom_call.1} parent=27 // pred_check_branch
          %256 = sbr.rel (%p254) target = $region32
        $region31: #{tpu_custom_call.1} parent=27 // pred_region
          %s257 = sand.u32 %s38, 1
          %s258 = scalar_lea.sflag [#allocation6], %s257
          %s259 = sand.u32 %s38, 1
          %s260 = smul.addr %s259, 8
          %s261 = scalar_lea.vmem [#allocation5], %s260
          %263 = vsyncadd %s258, 0
          %s264 = smul.addr %s28, 8
          %s265 = scalar_lea.hbm %s0, %s264
          %s267 = sshll.u32 %s265, 4
          %s268 = int_to_ptr.hbm [resolvable:$true] %s267
          %s269 = sshll.u32 %s261, 4
          %s270 = int_to_ptr.vmem [resolvable:$true] %s269
          %272 = dma.hbm_to_vmem [thread:$0]  %s268, 128, %s270, %s258
        $region32: #{tpu_custom_call.1} parent=27 // pred_fallthru
          _
        // Predicated region
        $region33: #{tpu_custom_call.1} parent=27 // pred_check
          %p273 = pneg %p74
        $region34: #{tpu_custom_call.1} parent=27 // pred_check_branch
          %275 = sbr.rel (%p273) target = $region36
        $region35: #{tpu_custom_call.1} parent=27 // pred_region
          %s276 = sand.u32 %s28, 1
          %s277 = scalar_lea.sflag [#allocation9], %s276
          %s278 = sand.u32 %s64, 1
          %s279 = smul.addr %s278, 8
          %s280 = scalar_lea.vmem [#allocation8], %s279
          %282 = vsyncadd %s277, 0
          %s283 = smul.addr %s28, 8
          %s284 = scalar_lea.hbm %s1, %s283
          %s286 = sshll.u32 %s284, 4
          %s287 = int_to_ptr.hbm [resolvable:$true] %s286
          %s288 = sshll.u32 %s280, 4
          %s289 = int_to_ptr.vmem [resolvable:$true] %s288
          %291 = dma.hbm_to_vmem [thread:$0]  %s287, 128, %s289, %s277
        $region36: #{tpu_custom_call.1} parent=27 // pred_fallthru
          _
      $region28: #{tpu_custom_call.1} parent=5 // pred_fallthru
        _
      %p292 = scmp.le.s32.totalorder 1, %s28
      %p293 = scmp.lt.s32.totalorder %s28, 3
      %p294 = pnand %p292, %p293
      %p295 = pneg %p294
      // Predicated region
      $region37: #{tpu_custom_call.1} parent=5 // pred_check
        _
      $region38: #{tpu_custom_call.1} parent=5 // pred_check_branch
        %297 = sbr.rel (%p294) target = $region40
      $region39: #{tpu_custom_call.1} parent=5 // pred_region
        %s298 = ssub.s32 %s28, 1
        %s299 = sand.u32 %s41, 1
        %s300 = scalar_lea.sflag [#allocation6], %s299
        %s301 = sand.u32 %s41, 1
        %s302 = smul.addr %s301, 8
        %s303 = scalar_lea.vmem [#allocation5], %s302
        // Predicated region
        $region41: #{tpu_custom_call.1} parent=39 // pred_check
          %p304 = pneg %p54
        $region42: #{tpu_custom_call.1} parent=39 // pred_check_branch
          %306 = sbr.rel (%p304) target = $region44
        $region43: #{tpu_custom_call.1} parent=39 // pred_region
          %308 = dma.done %s300, 128
        $region44: #{tpu_custom_call.1} parent=39 // pred_fallthru
          _
        %s309 = sand.u32 %s33, 1
        %s310 = scalar_lea.sflag [#allocation9], %s309
        %s311 = sand.u32 %s67, 1
        %s312 = smul.addr %s311, 8
        %s313 = scalar_lea.vmem [#allocation8], %s312
        // Predicated region
        $region45: #{tpu_custom_call.1} parent=39 // pred_check
          %p314 = pneg %p80
        $region46: #{tpu_custom_call.1} parent=39 // pred_check_branch
          %316 = sbr.rel (%p314) target = $region48
        $region47: #{tpu_custom_call.1} parent=39 // pred_region
          %318 = dma.done %s310, 128
        $region48: #{tpu_custom_call.1} parent=39 // pred_fallthru
          _
        // Predicated region
        $region49: #{tpu_custom_call.1} parent=39 // pred_check
          %p319 = pneg %p101
        $region50: #{tpu_custom_call.1} parent=39 // pred_check_branch
          %321 = sbr.rel (%p319) target = $region52
        $region51: #{tpu_custom_call.1} parent=39 // pred_region
          %323 = dma.done [#allocation9], 36864
        $region52: #{tpu_custom_call.1} parent=39 // pred_fallthru
          _
        // Predicated region
        $region53: #{tpu_custom_call.1} parent=39 // pred_check
          %p324 = pneg %p122
        $region54: #{tpu_custom_call.1} parent=39 // pred_check_branch
          %326 = sbr.rel (%p324) target = $region56
        $region55: #{tpu_custom_call.1} parent=39 // pred_region
          %328 = dma.done [#allocation12], 4096
        $region56: #{tpu_custom_call.1} parent=39 // pred_fallthru
          _
        // Predicated region
        $region57: #{tpu_custom_call.1} parent=39 // pred_check
          %p329 = pneg %p143
        $region58: #{tpu_custom_call.1} parent=39 // pred_check_branch
          %331 = sbr.rel (%p329) target = $region60
        $region59: #{tpu_custom_call.1} parent=39 // pred_region
          %333 = dma.done [#allocation12], 512
        $region60: #{tpu_custom_call.1} parent=39 // pred_fallthru
          _
        %s334 = sand.u32 %s41, 1
        %s335 = scalar_lea.sflag [#allocation6], %s334
        %s336 = sand.u32 %s41, 1
        %s337 = smul.addr %s336, 8
        %s338 = scalar_lea.vmem [#allocation5], %s337
        %p339 = pneg %p54
        %p340 = pneg %p51
        %s341 = sand.u32 %s33, 1
        %s342 = scalar_lea.sflag [#allocation9], %s341
        %s343 = sand.u32 %s67, 1
        %s344 = smul.addr %s343, 8
        %s345 = scalar_lea.vmem [#allocation8], %s344
        %p346 = pneg %p80
        %p347 = pneg %p77
        %p348 = pneg %p101
        %p349 = pneg %p98
        %p350 = pneg %p122
        %p351 = pneg %p119
        %p352 = pneg %p143
        %p353 = pneg %p140
        %p354 = pneg %p169
        %p355 = pneg %p166
        %s356 = sand.u32 %s156, 1
        %s357 = scalar_lea.sflag [#allocation7], %s356
        %s358 = sand.u32 %s156, 1
        %s359 = smul.addr %s358, 8
        %s360 = scalar_lea.vmem [#allocation14], %s359
        %p361 = pneg %p195
        %p362 = pneg %p192
        %s363 = sand.u32 %s182, 1
        %s364 = scalar_lea.sflag [#allocation16], %s363
        %s365 = sand.u32 %s182, 1
        %s366 = smul.addr %s365, 8
        %s367 = scalar_lea.vmem [#allocation15], %s366
        %p368 = scmp.eq.s32.totalorder %s33, 0
        // Predicated region
        $region61: #{tpu_custom_call.1} parent=39 // pred_check
          %p369 = pneg %p368
        $region62: #{tpu_custom_call.1} parent=39 // pred_check_branch
          %371 = sbr.rel (%p369) target = $region64
        $region63: #{tpu_custom_call.1} parent=39 // pred_region
          // Predicated region
          $region65: #{tpu_custom_call.1} parent=63 // pred_check
            _
          $region66: #{tpu_custom_call.1} parent=63 // pred_check_branch
            %373 = sbr.rel target = $region68
          $region67: #{tpu_custom_call.1} parent=63 // pred_region
            %374 = sst [smem:[#allocation19]] [#allocation18]
            %375 = sst [smem:[#allocation20]] [#allocation17]
          $region68: #{tpu_custom_call.1} parent=63 // pred_fallthru
            _
          %377 = shalt.err (0)
          %s379 = sshll.u32 %s5, 4
          %s380 = int_to_ptr.hbm [resolvable:$true] %s379
          %s381 = sshll.u32 [#allocation2], 4
          %s382 = int_to_ptr.vmem [resolvable:$true] %s381
          %384 = dma.hbm_to_vmem [thread:$0]  %s380, 36864, %s382, [#allocation4]
          %s385 = scalar_lea.sflag [#allocation4], 1
          // Predicated region
          $region69: #{tpu_custom_call.1} parent=63 // pred_check
            _
          $region70: #{tpu_custom_call.1} parent=63 // pred_check_branch
            %387 = sbr.rel target = $region72
          $region71: #{tpu_custom_call.1} parent=63 // pred_region
            %388 = sst [smem:[#allocation19]] [#allocation22]
            %389 = sst [smem:[#allocation20]] [#allocation21]
          $region72: #{tpu_custom_call.1} parent=63 // pred_fallthru
            _
          %391 = shalt.err (0)
          %s393 = sshll.u32 %s6, 4
          %s394 = int_to_ptr.hbm [resolvable:$true] %s393
          %s395 = sshll.u32 [#allocation3], 4
          %s396 = int_to_ptr.vmem [resolvable:$true] %s395
          %398 = dma.hbm_to_vmem [thread:$0]  %s394, 4096, %s396, %s385
        $region64: #{tpu_custom_call.1} parent=39 // pred_fallthru
          _
        %v399 = vld [vmem:[%s303] sm:$0xff]
        %v400 = vpack.c.bf16 %v399, %v399
        %v401 = vld [vmem:[#allocation10] sm:$0xff]
        %v402 = vld [vmem:[#allocation10 + $0x8] sm:$0xff]
        %v403 = vld [vmem:[#allocation10 + $0x10] sm:$0xff]
        %v404 = vld [vmem:[#allocation10 + $0x18] sm:$0xff]
        %v405 = vld [vmem:[#allocation10 + $0x20] sm:$0xff]
        %v406 = vld [vmem:[#allocation10 + $0x28] sm:$0xff]
        %v407 = vld [vmem:[#allocation10 + $0x30] sm:$0xff]
        %v408 = vld [vmem:[#allocation10 + $0x38] sm:$0xff]
        %v409 = vld [vmem:[#allocation10 + $0x40] sm:$0xff]
        %v410 = vld [vmem:[#allocation10 + $0x48] sm:$0xff]
        %v411 = vld [vmem:[#allocation10 + $0x50] sm:$0xff]
        %v412 = vld [vmem:[#allocation10 + $0x58] sm:$0xff]
        %v413 = vld [vmem:[#allocation10 + $0x60] sm:$0xff]
        %v414 = vld [vmem:[#allocation10 + $0x68] sm:$0xff]
        %v415 = vld [vmem:[#allocation10 + $0x70] sm:$0xff]
        %v416 = vld [vmem:[#allocation10 + $0x78] sm:$0xff]
        %v417 = vld [vmem:[#allocation10 + $0x80] sm:$0xff]
        %v418 = vld [vmem:[#allocation10 + $0x88] sm:$0xff]
        %v419 = vld [vmem:[#allocation10 + $0x90] sm:$0xff]
        %v420 = vld [vmem:[#allocation10 + $0x98] sm:$0xff]
        %v421 = vld [vmem:[#allocation10 + $0xa0] sm:$0xff]
        %v422 = vld [vmem:[#allocation10 + $0xa8] sm:$0xff]
        %v423 = vld [vmem:[#allocation10 + $0xb0] sm:$0xff]
        %v424 = vld [vmem:[#allocation10 + $0xb8] sm:$0xff]
        %v425 = vld [vmem:[#allocation10 + $0xc0] sm:$0xff]
        %v426 = vld [vmem:[#allocation10 + $0xc8] sm:$0xff]
        %v427 = vld [vmem:[#allocation10 + $0xd0] sm:$0xff]
        %v428 = vld [vmem:[#allocation10 + $0xd8] sm:$0xff]
        %v429 = vld [vmem:[#allocation10 + $0xe0] sm:$0xff]
        %v430 = vld [vmem:[#allocation10 + $0xe8] sm:$0xff]
        %v431 = vld [vmem:[#allocation10 + $0xf0] sm:$0xff]
        %v432 = vld [vmem:[#allocation10 + $0xf8] sm:$0xff]
        %v433 = vld [vmem:[#allocation13] ss:$8 sm:$0xf]
        %v435 = vperm.slane %v433, 0
        %v436 = vperm.slane %v433, 1
        %v437 = vperm.slane %v433, 2
        %v438 = vperm.slane %v433, 3
        %v475 = vunpack.c.l.b16 %v401
        %v476 = vunpack.c.h.b16 %v401
        %v477 = vunpack.c.l.b16 %v402
        %v478 = vunpack.c.h.b16 %v402
        %v479 = vunpack.c.l.b16 %v403
        %v480 = vunpack.c.h.b16 %v403
        %v481 = vunpack.c.l.b16 %v404
        %v482 = vunpack.c.h.b16 %v404
        %v483 = vunpack.c.l.b16 %v405
        %v484 = vunpack.c.h.b16 %v405
        %v485 = vunpack.c.l.b16 %v406
        %v486 = vunpack.c.h.b16 %v406
        %v487 = vunpack.c.l.b16 %v407
        %v488 = vunpack.c.h.b16 %v407
        %v489 = vunpack.c.l.b16 %v408
        %v490 = vunpack.c.h.b16 %v408
        %v491 = vunpack.c.l.b16 %v409
        %v492 = vunpack.c.h.b16 %v409
        %v493 = vunpack.c.l.b16 %v410
        %v494 = vunpack.c.h.b16 %v410
        %v495 = vunpack.c.l.b16 %v411
        %v496 = vunpack.c.h.b16 %v411
        %v497 = vunpack.c.l.b16 %v412
        %v498 = vunpack.c.h.b16 %v412
        %v499 = vunpack.c.l.b16 %v413
        %v500 = vunpack.c.h.b16 %v413
        %v501 = vunpack.c.l.b16 %v414
        %v502 = vunpack.c.h.b16 %v414
        %v503 = vunpack.c.l.b16 %v415
        %v504 = vunpack.c.h.b16 %v415
        %v505 = vunpack.c.l.b16 %v416
        %v506 = vunpack.c.h.b16 %v416
        %v507 = vunpack.c.l.b16 %v417
        %v508 = vunpack.c.h.b16 %v417
        %v509 = vunpack.c.l.b16 %v418
        %v510 = vunpack.c.h.b16 %v418
        %v511 = vunpack.c.l.b16 %v419
        %v512 = vunpack.c.h.b16 %v419
        %v513 = vunpack.c.l.b16 %v420
        %v514 = vunpack.c.h.b16 %v420
        %v515 = vunpack.c.l.b16 %v421
        %v516 = vunpack.c.h.b16 %v421
        %v517 = vunpack.c.l.b16 %v422
        %v518 = vunpack.c.h.b16 %v422
        %v519 = vunpack.c.l.b16 %v423
        %v520 = vunpack.c.h.b16 %v423
        %v521 = vunpack.c.l.b16 %v424
        %v522 = vunpack.c.h.b16 %v424
        %v523 = vunpack.c.l.b16 %v425
        %v524 = vunpack.c.h.b16 %v425
        %v525 = vunpack.c.l.b16 %v426
        %v526 = vunpack.c.h.b16 %v426
        %v527 = vunpack.c.l.b16 %v427
        %v528 = vunpack.c.h.b16 %v427
        %v529 = vunpack.c.l.b16 %v428
        %v530 = vunpack.c.h.b16 %v428
        %v531 = vunpack.c.l.b16 %v429
        %v532 = vunpack.c.h.b16 %v429
        %v533 = vunpack.c.l.b16 %v430
        %v534 = vunpack.c.h.b16 %v430
        %v535 = vunpack.c.l.b16 %v431
        %v536 = vunpack.c.h.b16 %v431
        %v537 = vunpack.c.l.b16 %v432
        %v538 = vunpack.c.h.b16 %v432
        %v539 = vpack.c.b16 %v479, %v475
        %v540 = vpack.c.b16 %v480, %v476
        %v541 = vpack.c.b16 %v481, %v477
        %v542 = vpack.c.b16 %v482, %v478
        %v543 = vpack.c.b16 %v487, %v483
        %v544 = vpack.c.b16 %v488, %v484
        %v545 = vpack.c.b16 %v489, %v485
        %v546 = vpack.c.b16 %v490, %v486
        %v547 = vpack.c.b16 %v495, %v491
        %v548 = vpack.c.b16 %v496, %v492
        %v549 = vpack.c.b16 %v497, %v493
        %v550 = vpack.c.b16 %v498, %v494
        %v551 = vpack.c.b16 %v503, %v499
        %v552 = vpack.c.b16 %v504, %v500
        %v553 = vpack.c.b16 %v505, %v501
        %v554 = vpack.c.b16 %v506, %v502
        %v555 = vpack.c.b16 %v511, %v507
        %v556 = vpack.c.b16 %v512, %v508
        %v557 = vpack.c.b16 %v513, %v509
        %v558 = vpack.c.b16 %v514, %v510
        %v559 = vpack.c.b16 %v519, %v515
        %v560 = vpack.c.b16 %v520, %v516
        %v561 = vpack.c.b16 %v521, %v517
        %v562 = vpack.c.b16 %v522, %v518
        %v563 = vpack.c.b16 %v527, %v523
        %v564 = vpack.c.b16 %v528, %v524
        %v565 = vpack.c.b16 %v529, %v525
        %v566 = vpack.c.b16 %v530, %v526
        %v567 = vpack.c.b16 %v535, %v531
        %v568 = vpack.c.b16 %v536, %v532
        %v569 = vpack.c.b16 %v537, %v533
        %v570 = vpack.c.b16 %v538, %v534
        %603 = vmatpush.bf16.msra.mxu0 %v567
        %604 = vmatpush.bf16.msra.mxu0 %v563
        %605 = vmatpush.bf16.msra.mxu0 %v559
        %606 = vmatpush.bf16.msra.mxu0 %v555
        %607 = vmatpush.bf16.msra.mxu0 %v551
        %608 = vmatpush.bf16.msra.mxu0 %v547
        %609 = vmatpush.bf16.msra.mxu0 %v543
        %610 = vmatpush.bf16.msra.mxu0 %v539
        %611 = vmatmul.bf16.gmra.mxu0 %v400
        %v612 = vpop.f32.mrf.mxu0
        %v613 = vadd.f32 %v435, %v612
        %v614 = vpop.f32.mrf.mxu0
        %615 = vdwg.mxu0
        %616 = vmatpush.bf16.msra.mxu0 %v568
        %617 = vmatpush.bf16.msra.mxu0 %v564
        %618 = vmatpush.bf16.msra.mxu0 %v560
        %619 = vmatpush.bf16.msra.mxu0 %v556
        %620 = vmatpush.bf16.msra.mxu0 %v552
        %621 = vmatpush.bf16.msra.mxu0 %v548
        %622 = vmatpush.bf16.msra.mxu0 %v544
        %623 = vmatpush.bf16.msra.mxu0 %v540
        %624 = vmatmul.bf16.gmra.mxu0 %v400
        %v625 = vpop.f32.mrf.mxu0
        %v626 = vadd.f32 %v436, %v625
        %v627 = vpop.f32.mrf.mxu0
        %628 = vdwg.mxu0
        %629 = vmatpush.bf16.msra.mxu0 %v569
        %630 = vmatpush.bf16.msra.mxu0 %v565
        %631 = vmatpush.bf16.msra.mxu0 %v561
        %632 = vmatpush.bf16.msra.mxu0 %v557
        %633 = vmatpush.bf16.msra.mxu0 %v553
        %634 = vmatpush.bf16.msra.mxu0 %v549
        %635 = vmatpush.bf16.msra.mxu0 %v545
        %636 = vmatpush.bf16.msra.mxu0 %v541
        %637 = vmatmul.bf16.gmra.mxu0 %v400
        %v638 = vpop.f32.mrf.mxu0
        %v639 = vadd.f32 %v437, %v638
        %v640 = vpop.f32.mrf.mxu0
        %641 = vdwg.mxu0
        %642 = vmatpush.bf16.msra.mxu0 %v570
        %643 = vmatpush.bf16.msra.mxu0 %v566
        %644 = vmatpush.bf16.msra.mxu0 %v562
        %645 = vmatpush.bf16.msra.mxu0 %v558
        %646 = vmatpush.bf16.msra.mxu0 %v554
        %647 = vmatpush.bf16.msra.mxu0 %v550
        %648 = vmatpush.bf16.msra.mxu0 %v546
        %649 = vmatpush.bf16.msra.mxu0 %v542
        %650 = vmatmul.bf16.gmra.mxu0 %v400
        %v651 = vpop.f32.mrf.mxu0
        %v652 = vadd.f32 %v438, %v651
        %v653 = vpop.f32.mrf.mxu0
        %654 = vdwg.mxu0
        %v655 = vmax.f32 %v613, 0.0
        %v656 = vmax.f32 %v626, 0.0
        %v657 = vmax.f32 %v639, 0.0
        %v658 = vmax.f32 %v652, 0.0
        %v659 = vpack.c.bf16 %v655, %v655
        %v660 = vpack.c.bf16 %v656, %v656
        %v661 = vpack.c.bf16 %v657, %v657
        %v662 = vpack.c.bf16 %v658, %v658
        %v663 = vld [vmem:[#allocation10 + $0x100] sm:$0xff]
        %v664 = vld [vmem:[#allocation10 + $0x108] sm:$0xff]
        %v665 = vld [vmem:[#allocation10 + $0x110] sm:$0xff]
        %v666 = vld [vmem:[#allocation10 + $0x118] sm:$0xff]
        %v667 = vld [vmem:[#allocation10 + $0x120] sm:$0xff]
        %v668 = vld [vmem:[#allocation10 + $0x128] sm:$0xff]
        %v669 = vld [vmem:[#allocation10 + $0x130] sm:$0xff]
        %v670 = vld [vmem:[#allocation10 + $0x138] sm:$0xff]
        %v671 = vld [vmem:[#allocation10 + $0x140] sm:$0xff]
        %v672 = vld [vmem:[#allocation10 + $0x148] sm:$0xff]
        %v673 = vld [vmem:[#allocation10 + $0x150] sm:$0xff]
        %v674 = vld [vmem:[#allocation10 + $0x158] sm:$0xff]
        %v675 = vld [vmem:[#allocation10 + $0x160] sm:$0xff]
        %v676 = vld [vmem:[#allocation10 + $0x168] sm:$0xff]
        %v677 = vld [vmem:[#allocation10 + $0x170] sm:$0xff]
        %v678 = vld [vmem:[#allocation10 + $0x178] sm:$0xff]
        %v679 = vld [vmem:[#allocation10 + $0x180] sm:$0xff]
        %v680 = vld [vmem:[#allocation10 + $0x188] sm:$0xff]
        %v681 = vld [vmem:[#allocation10 + $0x190] sm:$0xff]
        %v682 = vld [vmem:[#allocation10 + $0x198] sm:$0xff]
        %v683 = vld [vmem:[#allocation10 + $0x1a0] sm:$0xff]
        %v684 = vld [vmem:[#allocation10 + $0x1a8] sm:$0xff]
        %v685 = vld [vmem:[#allocation10 + $0x1b0] sm:$0xff]
        %v686 = vld [vmem:[#allocation10 + $0x1b8] sm:$0xff]
        %v687 = vld [vmem:[#allocation10 + $0x1c0] sm:$0xff]
        %v688 = vld [vmem:[#allocation10 + $0x1c8] sm:$0xff]
        %v689 = vld [vmem:[#allocation10 + $0x1d0] sm:$0xff]
        %v690 = vld [vmem:[#allocation10 + $0x1d8] sm:$0xff]
        %v691 = vld [vmem:[#allocation10 + $0x1e0] sm:$0xff]
        %v692 = vld [vmem:[#allocation10 + $0x1e8] sm:$0xff]
        %v693 = vld [vmem:[#allocation10 + $0x1f0] sm:$0xff]
        %v694 = vld [vmem:[#allocation10 + $0x1f8] sm:$0xff]
        %v695 = vld [vmem:[#allocation10 + $0x200] sm:$0xff]
        %v696 = vld [vmem:[#allocation10 + $0x208] sm:$0xff]
        %v697 = vld [vmem:[#allocation10 + $0x210] sm:$0xff]
        %v698 = vld [vmem:[#allocation10 + $0x218] sm:$0xff]
        %v699 = vld [vmem:[#allocation10 + $0x220] sm:$0xff]
        %v700 = vld [vmem:[#allocation10 + $0x228] sm:$0xff]
        %v701 = vld [vmem:[#allocation10 + $0x230] sm:$0xff]
        %v702 = vld [vmem:[#allocation10 + $0x238] sm:$0xff]
        %v703 = vld [vmem:[#allocation10 + $0x240] sm:$0xff]
        %v704 = vld [vmem:[#allocation10 + $0x248] sm:$0xff]
        %v705 = vld [vmem:[#allocation10 + $0x250] sm:$0xff]
        %v706 = vld [vmem:[#allocation10 + $0x258] sm:$0xff]
        %v707 = vld [vmem:[#allocation10 + $0x260] sm:$0xff]
        %v708 = vld [vmem:[#allocation10 + $0x268] sm:$0xff]
        %v709 = vld [vmem:[#allocation10 + $0x270] sm:$0xff]
        %v710 = vld [vmem:[#allocation10 + $0x278] sm:$0xff]
        %v711 = vld [vmem:[#allocation10 + $0x280] sm:$0xff]
        %v712 = vld [vmem:[#allocation10 + $0x288] sm:$0xff]
        %v713 = vld [vmem:[#allocation10 + $0x290] sm:$0xff]
        %v714 = vld [vmem:[#allocation10 + $0x298] sm:$0xff]
        %v715 = vld [vmem:[#allocation10 + $0x2a0] sm:$0xff]
        %v716 = vld [vmem:[#allocation10 + $0x2a8] sm:$0xff]
        %v717 = vld [vmem:[#allocation10 + $0x2b0] sm:$0xff]
        %v718 = vld [vmem:[#allocation10 + $0x2b8] sm:$0xff]
        %v719 = vld [vmem:[#allocation10 + $0x2c0] sm:$0xff]
        %v720 = vld [vmem:[#allocation10 + $0x2c8] sm:$0xff]
        %v721 = vld [vmem:[#allocation10 + $0x2d0] sm:$0xff]
        %v722 = vld [vmem:[#allocation10 + $0x2d8] sm:$0xff]
        %v723 = vld [vmem:[#allocation10 + $0x2e0] sm:$0xff]
        %v724 = vld [vmem:[#allocation10 + $0x2e8] sm:$0xff]
        %v725 = vld [vmem:[#allocation10 + $0x2f0] sm:$0xff]
        %v726 = vld [vmem:[#allocation10 + $0x2f8] sm:$0xff]
        %v727 = vld [vmem:[#allocation10 + $0x300] sm:$0xff]
        %v728 = vld [vmem:[#allocation10 + $0x308] sm:$0xff]
        %v729 = vld [vmem:[#allocation10 + $0x310] sm:$0xff]
        %v730 = vld [vmem:[#allocation10 + $0x318] sm:$0xff]
        %v731 = vld [vmem:[#allocation10 + $0x320] sm:$0xff]
        %v732 = vld [vmem:[#allocation10 + $0x328] sm:$0xff]
        %v733 = vld [vmem:[#allocation10 + $0x330] sm:$0xff]
        %v734 = vld [vmem:[#allocation10 + $0x338] sm:$0xff]
        %v735 = vld [vmem:[#allocation10 + $0x340] sm:$0xff]
        %v736 = vld [vmem:[#allocation10 + $0x348] sm:$0xff]
        %v737 = vld [vmem:[#allocation10 + $0x350] sm:$0xff]
        %v738 = vld [vmem:[#allocation10 + $0x358] sm:$0xff]
        %v739 = vld [vmem:[#allocation10 + $0x360] sm:$0xff]
        %v740 = vld [vmem:[#allocation10 + $0x368] sm:$0xff]
        %v741 = vld [vmem:[#allocation10 + $0x370] sm:$0xff]
        %v742 = vld [vmem:[#allocation10 + $0x378] sm:$0xff]
        %v743 = vld [vmem:[#allocation10 + $0x380] sm:$0xff]
        %v744 = vld [vmem:[#allocation10 + $0x388] sm:$0xff]
        %v745 = vld [vmem:[#allocation10 + $0x390] sm:$0xff]
        %v746 = vld [vmem:[#allocation10 + $0x398] sm:$0xff]
        %v747 = vld [vmem:[#allocation10 + $0x3a0] sm:$0xff]
        %v748 = vld [vmem:[#allocation10 + $0x3a8] sm:$0xff]
        %v749 = vld [vmem:[#allocation10 + $0x3b0] sm:$0xff]
        %v750 = vld [vmem:[#allocation10 + $0x3b8] sm:$0xff]
        %v751 = vld [vmem:[#allocation10 + $0x3c0] sm:$0xff]
        %v752 = vld [vmem:[#allocation10 + $0x3c8] sm:$0xff]
        %v753 = vld [vmem:[#allocation10 + $0x3d0] sm:$0xff]
        %v754 = vld [vmem:[#allocation10 + $0x3d8] sm:$0xff]
        %v755 = vld [vmem:[#allocation10 + $0x3e0] sm:$0xff]
        %v756 = vld [vmem:[#allocation10 + $0x3e8] sm:$0xff]
        %v757 = vld [vmem:[#allocation10 + $0x3f0] sm:$0xff]
        %v758 = vld [vmem:[#allocation10 + $0x3f8] sm:$0xff]
        %v759 = vld [vmem:[#allocation10 + $0x400] sm:$0xff]
        %v760 = vld [vmem:[#allocation10 + $0x408] sm:$0xff]
        %v761 = vld [vmem:[#allocation10 + $0x410] sm:$0xff]
        %v762 = vld [vmem:[#allocation10 + $0x418] sm:$0xff]
        %v763 = vld [vmem:[#allocation10 + $0x420] sm:$0xff]
        %v764 = vld [vmem:[#allocation10 + $0x428] sm:$0xff]
        %v765 = vld [vmem:[#allocation10 + $0x430] sm:$0xff]
        %v766 = vld [vmem:[#allocation10 + $0x438] sm:$0xff]
        %v767 = vld [vmem:[#allocation10 + $0x440] sm:$0xff]
        %v768 = vld [vmem:[#allocation10 + $0x448] sm:$0xff]
        %v769 = vld [vmem:[#allocation10 + $0x450] sm:$0xff]
        %v770 = vld [vmem:[#allocation10 + $0x458] sm:$0xff]
        %v771 = vld [vmem:[#allocation10 + $0x460] sm:$0xff]
        %v772 = vld [vmem:[#allocation10 + $0x468] sm:$0xff]
        %v773 = vld [vmem:[#allocation10 + $0x470] sm:$0xff]
        %v774 = vld [vmem:[#allocation10 + $0x478] sm:$0xff]
        %v775 = vld [vmem:[#allocation10 + $0x480] sm:$0xff]
        %v776 = vld [vmem:[#allocation10 + $0x488] sm:$0xff]
        %v777 = vld [vmem:[#allocation10 + $0x490] sm:$0xff]
        %v778 = vld [vmem:[#allocation10 + $0x498] sm:$0xff]
        %v779 = vld [vmem:[#allocation10 + $0x4a0] sm:$0xff]
        %v780 = vld [vmem:[#allocation10 + $0x4a8] sm:$0xff]
        %v781 = vld [vmem:[#allocation10 + $0x4b0] sm:$0xff]
        %v782 = vld [vmem:[#allocation10 + $0x4b8] sm:$0xff]
        %v783 = vld [vmem:[#allocation10 + $0x4c0] sm:$0xff]
        %v784 = vld [vmem:[#allocation10 + $0x4c8] sm:$0xff]
        %v785 = vld [vmem:[#allocation10 + $0x4d0] sm:$0xff]
        %v786 = vld [vmem:[#allocation10 + $0x4d8] sm:$0xff]
        %v787 = vld [vmem:[#allocation10 + $0x4e0] sm:$0xff]
        %v788 = vld [vmem:[#allocation10 + $0x4e8] sm:$0xff]
        %v789 = vld [vmem:[#allocation10 + $0x4f0] sm:$0xff]
        %v790 = vld [vmem:[#allocation10 + $0x4f8] sm:$0xff]
        %s791 = scalar_lea.vmem [#allocation13], 1
        %v792 = vld [vmem:[%s791] ss:$8 sm:$0xf]
        %v794 = vperm.slane %v792, 0
        %v795 = vperm.slane %v792, 1
        %v796 = vperm.slane %v792, 2
        %v797 = vperm.slane %v792, 3
        %v930 = vunpack.c.l.b16 %v663
        %v931 = vunpack.c.h.b16 %v663
        %v932 = vunpack.c.l.b16 %v664
        %v933 = vunpack.c.h.b16 %v664
        %v934 = vunpack.c.l.b16 %v665
        %v935 = vunpack.c.h.b16 %v665
        %v936 = vunpack.c.l.b16 %v666
        %v937 = vunpack.c.h.b16 %v666
        %v938 = vunpack.c.l.b16 %v667
        %v939 = vunpack.c.h.b16 %v667
        %v940 = vunpack.c.l.b16 %v668
        %v941 = vunpack.c.h.b16 %v668
        %v942 = vunpack.c.l.b16 %v669
        %v943 = vunpack.c.h.b16 %v669
        %v944 = vunpack.c.l.b16 %v670
        %v945 = vunpack.c.h.b16 %v670
        %v946 = vunpack.c.l.b16 %v671
        %v947 = vunpack.c.h.b16 %v671
        %v948 = vunpack.c.l.b16 %v672
        %v949 = vunpack.c.h.b16 %v672
        %v950 = vunpack.c.l.b16 %v673
        %v951 = vunpack.c.h.b16 %v673
        %v952 = vunpack.c.l.b16 %v674
        %v953 = vunpack.c.h.b16 %v674
        %v954 = vunpack.c.l.b16 %v675
        %v955 = vunpack.c.h.b16 %v675
        %v956 = vunpack.c.l.b16 %v676
        %v957 = vunpack.c.h.b16 %v676
        %v958 = vunpack.c.l.b16 %v677
        %v959 = vunpack.c.h.b16 %v677
        %v960 = vunpack.c.l.b16 %v678
        %v961 = vunpack.c.h.b16 %v678
        %v962 = vunpack.c.l.b16 %v679
        %v963 = vunpack.c.h.b16 %v679
        %v964 = vunpack.c.l.b16 %v680
        %v965 = vunpack.c.h.b16 %v680
        %v966 = vunpack.c.l.b16 %v681
        %v967 = vunpack.c.h.b16 %v681
        %v968 = vunpack.c.l.b16 %v682
        %v969 = vunpack.c.h.b16 %v682
        %v970 = vunpack.c.l.b16 %v683
        %v971 = vunpack.c.h.b16 %v683
        %v972 = vunpack.c.l.b16 %v684
        %v973 = vunpack.c.h.b16 %v684
        %v974 = vunpack.c.l.b16 %v685
        %v975 = vunpack.c.h.b16 %v685
        %v976 = vunpack.c.l.b16 %v686
        %v977 = vunpack.c.h.b16 %v686
        %v978 = vunpack.c.l.b16 %v687
        %v979 = vunpack.c.h.b16 %v687
        %v980 = vunpack.c.l.b16 %v688
        %v981 = vunpack.c.h.b16 %v688
        %v982 = vunpack.c.l.b16 %v689
        %v983 = vunpack.c.h.b16 %v689
        %v984 = vunpack.c.l.b16 %v690
        %v985 = vunpack.c.h.b16 %v690
        %v986 = vunpack.c.l.b16 %v691
        %v987 = vunpack.c.h.b16 %v691
        %v988 = vunpack.c.l.b16 %v692
        %v989 = vunpack.c.h.b16 %v692
        %v990 = vunpack.c.l.b16 %v693
        %v991 = vunpack.c.h.b16 %v693
        %v992 = vunpack.c.l.b16 %v694
        %v993 = vunpack.c.h.b16 %v694
        %v994 = vunpack.c.l.b16 %v695
        %v995 = vunpack.c.h.b16 %v695
        %v996 = vunpack.c.l.b16 %v696
        %v997 = vunpack.c.h.b16 %v696
        %v998 = vunpack.c.l.b16 %v697
        %v999 = vunpack.c.h.b16 %v697
        %v1000 = vunpack.c.l.b16 %v698
        %v1001 = vunpack.c.h.b16 %v698
        %v1002 = vunpack.c.l.b16 %v699
        %v1003 = vunpack.c.h.b16 %v699
        %v1004 = vunpack.c.l.b16 %v700
        %v1005 = vunpack.c.h.b16 %v700
        %v1006 = vunpack.c.l.b16 %v701
        %v1007 = vunpack.c.h.b16 %v701
        %v1008 = vunpack.c.l.b16 %v702
        %v1009 = vunpack.c.h.b16 %v702
        %v1010 = vunpack.c.l.b16 %v703
        %v1011 = vunpack.c.h.b16 %v703
        %v1012 = vunpack.c.l.b16 %v704
        %v1013 = vunpack.c.h.b16 %v704
        %v1014 = vunpack.c.l.b16 %v705
        %v1015 = vunpack.c.h.b16 %v705
        %v1016 = vunpack.c.l.b16 %v706
        %v1017 = vunpack.c.h.b16 %v706
        %v1018 = vunpack.c.l.b16 %v707
        %v1019 = vunpack.c.h.b16 %v707
        %v1020 = vunpack.c.l.b16 %v708
        %v1021 = vunpack.c.h.b16 %v708
        %v1022 = vunpack.c.l.b16 %v709
        %v1023 = vunpack.c.h.b16 %v709
        %v1024 = vunpack.c.l.b16 %v710
        %v1025 = vunpack.c.h.b16 %v710
        %v1026 = vunpack.c.l.b16 %v711
        %v1027 = vunpack.c.h.b16 %v711
        %v1028 = vunpack.c.l.b16 %v712
        %v1029 = vunpack.c.h.b16 %v712
        %v1030 = vunpack.c.l.b16 %v713
        %v1031 = vunpack.c.h.b16 %v713
        %v1032 = vunpack.c.l.b16 %v714
        %v1033 = vunpack.c.h.b16 %v714
        %v1034 = vunpack.c.l.b16 %v715
        %v1035 = vunpack.c.h.b16 %v715
        %v1036 = vunpack.c.l.b16 %v716
        %v1037 = vunpack.c.h.b16 %v716
        %v1038 = vunpack.c.l.b16 %v717
        %v1039 = vunpack.c.h.b16 %v717
        %v1040 = vunpack.c.l.b16 %v718
        %v1041 = vunpack.c.h.b16 %v718
        %v1042 = vunpack.c.l.b16 %v719
        %v1043 = vunpack.c.h.b16 %v719
        %v1044 = vunpack.c.l.b16 %v720
        %v1045 = vunpack.c.h.b16 %v720
        %v1046 = vunpack.c.l.b16 %v721
        %v1047 = vunpack.c.h.b16 %v721
        %v1048 = vunpack.c.l.b16 %v722
        %v1049 = vunpack.c.h.b16 %v722
        %v1050 = vunpack.c.l.b16 %v723
        %v1051 = vunpack.c.h.b16 %v723
        %v1052 = vunpack.c.l.b16 %v724
        %v1053 = vunpack.c.h.b16 %v724
        %v1054 = vunpack.c.l.b16 %v725
        %v1055 = vunpack.c.h.b16 %v725
        %v1056 = vunpack.c.l.b16 %v726
        %v1057 = vunpack.c.h.b16 %v726
        %v1058 = vunpack.c.l.b16 %v727
        %v1059 = vunpack.c.h.b16 %v727
        %v1060 = vunpack.c.l.b16 %v728
        %v1061 = vunpack.c.h.b16 %v728
        %v1062 = vunpack.c.l.b16 %v729
        %v1063 = vunpack.c.h.b16 %v729
        %v1064 = vunpack.c.l.b16 %v730
        %v1065 = vunpack.c.h.b16 %v730
        %v1066 = vunpack.c.l.b16 %v731
        %v1067 = vunpack.c.h.b16 %v731
        %v1068 = vunpack.c.l.b16 %v732
        %v1069 = vunpack.c.h.b16 %v732
        %v1070 = vunpack.c.l.b16 %v733
        %v1071 = vunpack.c.h.b16 %v733
        %v1072 = vunpack.c.l.b16 %v734
        %v1073 = vunpack.c.h.b16 %v734
        %v1074 = vunpack.c.l.b16 %v735
        %v1075 = vunpack.c.h.b16 %v735
        %v1076 = vunpack.c.l.b16 %v736
        %v1077 = vunpack.c.h.b16 %v736
        %v1078 = vunpack.c.l.b16 %v737
        %v1079 = vunpack.c.h.b16 %v737
        %v1080 = vunpack.c.l.b16 %v738
        %v1081 = vunpack.c.h.b16 %v738
        %v1082 = vunpack.c.l.b16 %v739
        %v1083 = vunpack.c.h.b16 %v739
        %v1084 = vunpack.c.l.b16 %v740
        %v1085 = vunpack.c.h.b16 %v740
        %v1086 = vunpack.c.l.b16 %v741
        %v1087 = vunpack.c.h.b16 %v741
        %v1088 = vunpack.c.l.b16 %v742
        %v1089 = vunpack.c.h.b16 %v742
        %v1090 = vunpack.c.l.b16 %v743
        %v1091 = vunpack.c.h.b16 %v743
        %v1092 = vunpack.c.l.b16 %v744
        %v1093 = vunpack.c.h.b16 %v744
        %v1094 = vunpack.c.l.b16 %v745
        %v1095 = vunpack.c.h.b16 %v745
        %v1096 = vunpack.c.l.b16 %v746
        %v1097 = vunpack.c.h.b16 %v746
        %v1098 = vunpack.c.l.b16 %v747
        %v1099 = vunpack.c.h.b16 %v747
        %v1100 = vunpack.c.l.b16 %v748
        %v1101 = vunpack.c.h.b16 %v748
        %v1102 = vunpack.c.l.b16 %v749
        %v1103 = vunpack.c.h.b16 %v749
        %v1104 = vunpack.c.l.b16 %v750
        %v1105 = vunpack.c.h.b16 %v750
        %v1106 = vunpack.c.l.b16 %v751
        %v1107 = vunpack.c.h.b16 %v751
        %v1108 = vunpack.c.l.b16 %v752
        %v1109 = vunpack.c.h.b16 %v752
        %v1110 = vunpack.c.l.b16 %v753
        %v1111 = vunpack.c.h.b16 %v753
        %v1112 = vunpack.c.l.b16 %v754
        %v1113 = vunpack.c.h.b16 %v754
        %v1114 = vunpack.c.l.b16 %v755
        %v1115 = vunpack.c.h.b16 %v755
        %v1116 = vunpack.c.l.b16 %v756
        %v1117 = vunpack.c.h.b16 %v756
        %v1118 = vunpack.c.l.b16 %v757
        %v1119 = vunpack.c.h.b16 %v757
        %v1120 = vunpack.c.l.b16 %v758
        %v1121 = vunpack.c.h.b16 %v758
        %v1122 = vunpack.c.l.b16 %v759
        %v1123 = vunpack.c.h.b16 %v759
        %v1124 = vunpack.c.l.b16 %v760
        %v1125 = vunpack.c.h.b16 %v760
        %v1126 = vunpack.c.l.b16 %v761
        %v1127 = vunpack.c.h.b16 %v761
        %v1128 = vunpack.c.l.b16 %v762
        %v1129 = vunpack.c.h.b16 %v762
        %v1130 = vunpack.c.l.b16 %v763
        %v1131 = vunpack.c.h.b16 %v763
        %v1132 = vunpack.c.l.b16 %v764
        %v1133 = vunpack.c.h.b16 %v764
        %v1134 = vunpack.c.l.b16 %v765
        %v1135 = vunpack.c.h.b16 %v765
        %v1136 = vunpack.c.l.b16 %v766
        %v1137 = vunpack.c.h.b16 %v766
        %v1138 = vunpack.c.l.b16 %v767
        %v1139 = vunpack.c.h.b16 %v767
        %v1140 = vunpack.c.l.b16 %v768
        %v1141 = vunpack.c.h.b16 %v768
        %v1142 = vunpack.c.l.b16 %v769
        %v1143 = vunpack.c.h.b16 %v769
        %v1144 = vunpack.c.l.b16 %v770
        %v1145 = vunpack.c.h.b16 %v770
        %v1146 = vunpack.c.l.b16 %v771
        %v1147 = vunpack.c.h.b16 %v771
        %v1148 = vunpack.c.l.b16 %v772
        %v1149 = vunpack.c.h.b16 %v772
        %v1150 = vunpack.c.l.b16 %v773
        %v1151 = vunpack.c.h.b16 %v773
        %v1152 = vunpack.c.l.b16 %v774
        %v1153 = vunpack.c.h.b16 %v774
        %v1154 = vunpack.c.l.b16 %v775
        %v1155 = vunpack.c.h.b16 %v775
        %v1156 = vunpack.c.l.b16 %v776
        %v1157 = vunpack.c.h.b16 %v776
        %v1158 = vunpack.c.l.b16 %v777
        %v1159 = vunpack.c.h.b16 %v777
        %v1160 = vunpack.c.l.b16 %v778
        %v1161 = vunpack.c.h.b16 %v778
        %v1162 = vunpack.c.l.b16 %v779
        %v1163 = vunpack.c.h.b16 %v779
        %v1164 = vunpack.c.l.b16 %v780
        %v1165 = vunpack.c.h.b16 %v780
        %v1166 = vunpack.c.l.b16 %v781
        %v1167 = vunpack.c.h.b16 %v781
        %v1168 = vunpack.c.l.b16 %v782
        %v1169 = vunpack.c.h.b16 %v782
        %v1170 = vunpack.c.l.b16 %v783
        %v1171 = vunpack.c.h.b16 %v783
        %v1172 = vunpack.c.l.b16 %v784
        %v1173 = vunpack.c.h.b16 %v784
        %v1174 = vunpack.c.l.b16 %v785
        %v1175 = vunpack.c.h.b16 %v785
        %v1176 = vunpack.c.l.b16 %v786
        %v1177 = vunpack.c.h.b16 %v786
        %v1178 = vunpack.c.l.b16 %v787
        %v1179 = vunpack.c.h.b16 %v787
        %v1180 = vunpack.c.l.b16 %v788
        %v1181 = vunpack.c.h.b16 %v788
        %v1182 = vunpack.c.l.b16 %v789
        %v1183 = vunpack.c.h.b16 %v789
        %v1184 = vunpack.c.l.b16 %v790
        %v1185 = vunpack.c.h.b16 %v790
        %v1186 = vpack.c.b16 %v934, %v930
        %v1187 = vpack.c.b16 %v935, %v931
        %v1188 = vpack.c.b16 %v936, %v932
        %v1189 = vpack.c.b16 %v937, %v933
        %v1190 = vpack.c.b16 %v942, %v938
        %v1191 = vpack.c.b16 %v943, %v939
        %v1192 = vpack.c.b16 %v944, %v940
        %v1193 = vpack.c.b16 %v945, %v941
        %v1194 = vpack.c.b16 %v950, %v946
        %v1195 = vpack.c.b16 %v951, %v947
        %v1196 = vpack.c.b16 %v952, %v948
        %v1197 = vpack.c.b16 %v953, %v949
        %v1198 = vpack.c.b16 %v958, %v954
        %v1199 = vpack.c.b16 %v959, %v955
        %v1200 = vpack.c.b16 %v960, %v956
        %v1201 = vpack.c.b16 %v961, %v957
        %v1202 = vpack.c.b16 %v966, %v962
        %v1203 = vpack.c.b16 %v967, %v963
        %v1204 = vpack.c.b16 %v968, %v964
        %v1205 = vpack.c.b16 %v969, %v965
        %v1206 = vpack.c.b16 %v974, %v970
        %v1207 = vpack.c.b16 %v975, %v971
        %v1208 = vpack.c.b16 %v976, %v972
        %v1209 = vpack.c.b16 %v977, %v973
        %v1210 = vpack.c.b16 %v982, %v978
        %v1211 = vpack.c.b16 %v983, %v979
        %v1212 = vpack.c.b16 %v984, %v980
        %v1213 = vpack.c.b16 %v985, %v981
        %v1214 = vpack.c.b16 %v990, %v986
        %v1215 = vpack.c.b16 %v991, %v987
        %v1216 = vpack.c.b16 %v992, %v988
        %v1217 = vpack.c.b16 %v993, %v989
        %v1218 = vpack.c.b16 %v998, %v994
        %v1219 = vpack.c.b16 %v999, %v995
        %v1220 = vpack.c.b16 %v1000, %v996
        %v1221 = vpack.c.b16 %v1001, %v997
        %v1222 = vpack.c.b16 %v1006, %v1002
        %v1223 = vpack.c.b16 %v1007, %v1003
        %v1224 = vpack.c.b16 %v1008, %v1004
        %v1225 = vpack.c.b16 %v1009, %v1005
        %v1226 = vpack.c.b16 %v1014, %v1010
        %v1227 = vpack.c.b16 %v1015, %v1011
        %v1228 = vpack.c.b16 %v1016, %v1012
        %v1229 = vpack.c.b16 %v1017, %v1013
        %v1230 = vpack.c.b16 %v1022, %v1018
        %v1231 = vpack.c.b16 %v1023, %v1019
        %v1232 = vpack.c.b16 %v1024, %v1020
        %v1233 = vpack.c.b16 %v1025, %v1021
        %v1234 = vpack.c.b16 %v1030, %v1026
        %v1235 = vpack.c.b16 %v1031, %v1027
        %v1236 = vpack.c.b16 %v1032, %v1028
        %v1237 = vpack.c.b16 %v1033, %v1029
        %v1238 = vpack.c.b16 %v1038, %v1034
        %v1239 = vpack.c.b16 %v1039, %v1035
        %v1240 = vpack.c.b16 %v1040, %v1036
        %v1241 = vpack.c.b16 %v1041, %v1037
        %v1242 = vpack.c.b16 %v1046, %v1042
        %v1243 = vpack.c.b16 %v1047, %v1043
        %v1244 = vpack.c.b16 %v1048, %v1044
        %v1245 = vpack.c.b16 %v1049, %v1045
        %v1246 = vpack.c.b16 %v1054, %v1050
        %v1247 = vpack.c.b16 %v1055, %v1051
        %v1248 = vpack.c.b16 %v1056, %v1052
        %v1249 = vpack.c.b16 %v1057, %v1053
        %v1250 = vpack.c.b16 %v1062, %v1058
        %v1251 = vpack.c.b16 %v1063, %v1059
        %v1252 = vpack.c.b16 %v1064, %v1060
        %v1253 = vpack.c.b16 %v1065, %v1061
        %v1254 = vpack.c.b16 %v1070, %v1066
        %v1255 = vpack.c.b16 %v1071, %v1067
        %v1256 = vpack.c.b16 %v1072, %v1068
        %v1257 = vpack.c.b16 %v1073, %v1069
        %v1258 = vpack.c.b16 %v1078, %v1074
        %v1259 = vpack.c.b16 %v1079, %v1075
        %v1260 = vpack.c.b16 %v1080, %v1076
        %v1261 = vpack.c.b16 %v1081, %v1077
        %v1262 = vpack.c.b16 %v1086, %v1082
        %v1263 = vpack.c.b16 %v1087, %v1083
        %v1264 = vpack.c.b16 %v1088, %v1084
        %v1265 = vpack.c.b16 %v1089, %v1085
        %v1266 = vpack.c.b16 %v1094, %v1090
        %v1267 = vpack.c.b16 %v1095, %v1091
        %v1268 = vpack.c.b16 %v1096, %v1092
        %v1269 = vpack.c.b16 %v1097, %v1093
        %v1270 = vpack.c.b16 %v1102, %v1098
        %v1271 = vpack.c.b16 %v1103, %v1099
        %v1272 = vpack.c.b16 %v1104, %v1100
        %v1273 = vpack.c.b16 %v1105, %v1101
        %v1274 = vpack.c.b16 %v1110, %v1106
        %v1275 = vpack.c.b16 %v1111, %v1107
        %v1276 = vpack.c.b16 %v1112, %v1108
        %v1277 = vpack.c.b16 %v1113, %v1109
        %v1278 = vpack.c.b16 %v1118, %v1114
        %v1279 = vpack.c.b16 %v1119, %v1115
        %v1280 = vpack.c.b16 %v1120, %v1116
        %v1281 = vpack.c.b16 %v1121, %v1117
        %v1282 = vpack.c.b16 %v1126, %v1122
        %v1283 = vpack.c.b16 %v1127, %v1123
        %v1284 = vpack.c.b16 %v1128, %v1124
        %v1285 = vpack.c.b16 %v1129, %v1125
        %v1286 = vpack.c.b16 %v1134, %v1130
        %v1287 = vpack.c.b16 %v1135, %v1131
        %v1288 = vpack.c.b16 %v1136, %v1132
        %v1289 = vpack.c.b16 %v1137, %v1133
        %v1290 = vpack.c.b16 %v1142, %v1138
        %v1291 = vpack.c.b16 %v1143, %v1139
        %v1292 = vpack.c.b16 %v1144, %v1140
        %v1293 = vpack.c.b16 %v1145, %v1141
        %v1294 = vpack.c.b16 %v1150, %v1146
        %v1295 = vpack.c.b16 %v1151, %v1147
        %v1296 = vpack.c.b16 %v1152, %v1148
        %v1297 = vpack.c.b16 %v1153, %v1149
        %v1298 = vpack.c.b16 %v1158, %v1154
        %v1299 = vpack.c.b16 %v1159, %v1155
        %v1300 = vpack.c.b16 %v1160, %v1156
        %v1301 = vpack.c.b16 %v1161, %v1157
        %v1302 = vpack.c.b16 %v1166, %v1162
        %v1303 = vpack.c.b16 %v1167, %v1163
        %v1304 = vpack.c.b16 %v1168, %v1164
        %v1305 = vpack.c.b16 %v1169, %v1165
        %v1306 = vpack.c.b16 %v1174, %v1170
        %v1307 = vpack.c.b16 %v1175, %v1171
        %v1308 = vpack.c.b16 %v1176, %v1172
        %v1309 = vpack.c.b16 %v1177, %v1173
        %v1310 = vpack.c.b16 %v1182, %v1178
        %v1311 = vpack.c.b16 %v1183, %v1179
        %v1312 = vpack.c.b16 %v1184, %v1180
        %v1313 = vpack.c.b16 %v1185, %v1181
        %1442 = vmatpush.bf16.msra.mxu0 %v1214
        %1443 = vmatpush.bf16.msra.mxu0 %v1210
        %1444 = vmatpush.bf16.msra.mxu0 %v1206
        %1445 = vmatpush.bf16.msra.mxu0 %v1202
        %1446 = vmatpush.bf16.msra.mxu0 %v1198
        %1447 = vmatpush.bf16.msra.mxu0 %v1194
        %1448 = vmatpush.bf16.msra.mxu0 %v1190
        %1449 = vmatpush.bf16.msra.mxu0 %v1186
        %1450 = vmatmul.bf16.gmra.mxu0 %v659
        %v1451 = vpop.f32.mrf.mxu0
        %v1452 = vadd.f32 %v794, %v1451
        %v1453 = vpop.f32.mrf.mxu0
        %1454 = vdwg.mxu0
        %1455 = vmatpush.bf16.msra.mxu0 %v1246
        %1456 = vmatpush.bf16.msra.mxu0 %v1242
        %1457 = vmatpush.bf16.msra.mxu0 %v1238
        %1458 = vmatpush.bf16.msra.mxu0 %v1234
        %1459 = vmatpush.bf16.msra.mxu0 %v1230
        %1460 = vmatpush.bf16.msra.mxu0 %v1226
        %1461 = vmatpush.bf16.msra.mxu0 %v1222
        %1462 = vmatpush.bf16.msra.mxu0 %v1218
        %1463 = vmatmul.bf16.gmra.mxu0 %v660
        %v1464 = vpop.f32.mrf.mxu0
        %v1465 = vadd.f32 %v1452, %v1464
        %v1466 = vpop.f32.mrf.mxu0
        %1467 = vdwg.mxu0
        %1468 = vmatpush.bf16.msra.mxu0 %v1278
        %1469 = vmatpush.bf16.msra.mxu0 %v1274
        %1470 = vmatpush.bf16.msra.mxu0 %v1270
        %1471 = vmatpush.bf16.msra.mxu0 %v1266
        %1472 = vmatpush.bf16.msra.mxu0 %v1262
        %1473 = vmatpush.bf16.msra.mxu0 %v1258
        %1474 = vmatpush.bf16.msra.mxu0 %v1254
        %1475 = vmatpush.bf16.msra.mxu0 %v1250
        %1476 = vmatmul.bf16.gmra.mxu0 %v661
        %v1477 = vpop.f32.mrf.mxu0
        %v1478 = vadd.f32 %v1465, %v1477
        %v1479 = vpop.f32.mrf.mxu0
        %1480 = vdwg.mxu0
        %1481 = vmatpush.bf16.msra.mxu0 %v1310
        %1482 = vmatpush.bf16.msra.mxu0 %v1306
        %1483 = vmatpush.bf16.msra.mxu0 %v1302
        %1484 = vmatpush.bf16.msra.mxu0 %v1298
        %1485 = vmatpush.bf16.msra.mxu0 %v1294
        %1486 = vmatpush.bf16.msra.mxu0 %v1290
        %1487 = vmatpush.bf16.msra.mxu0 %v1286
        %1488 = vmatpush.bf16.msra.mxu0 %v1282
        %1489 = vmatmul.bf16.gmra.mxu0 %v662
        %v1490 = vpop.f32.mrf.mxu0
        %v1491 = vadd.f32 %v1478, %v1490
        %v1492 = vpop.f32.mrf.mxu0
        %1493 = vdwg.mxu0
        %1494 = vmatpush.bf16.msra.mxu0 %v1215
        %1495 = vmatpush.bf16.msra.mxu0 %v1211
        %1496 = vmatpush.bf16.msra.mxu0 %v1207
        %1497 = vmatpush.bf16.msra.mxu0 %v1203
        %1498 = vmatpush.bf16.msra.mxu0 %v1199
        %1499 = vmatpush.bf16.msra.mxu0 %v1195
        %1500 = vmatpush.bf16.msra.mxu0 %v1191
        %1501 = vmatpush.bf16.msra.mxu0 %v1187
        %1502 = vmatmul.bf16.gmra.mxu0 %v659
        %v1503 = vpop.f32.mrf.mxu0
        %v1504 = vadd.f32 %v795, %v1503
        %v1505 = vpop.f32.mrf.mxu0
        %1506 = vdwg.mxu0
        %1507 = vmatpush.bf16.msra.mxu0 %v1247
        %1508 = vmatpush.bf16.msra.mxu0 %v1243
        %1509 = vmatpush.bf16.msra.mxu0 %v1239
        %1510 = vmatpush.bf16.msra.mxu0 %v1235
        %1511 = vmatpush.bf16.msra.mxu0 %v1231
        %1512 = vmatpush.bf16.msra.mxu0 %v1227
        %1513 = vmatpush.bf16.msra.mxu0 %v1223
        %1514 = vmatpush.bf16.msra.mxu0 %v1219
        %1515 = vmatmul.bf16.gmra.mxu0 %v660
        %v1516 = vpop.f32.mrf.mxu0
        %v1517 = vadd.f32 %v1504, %v1516
        %v1518 = vpop.f32.mrf.mxu0
        %1519 = vdwg.mxu0
        %1520 = vmatpush.bf16.msra.mxu0 %v1279
        %1521 = vmatpush.bf16.msra.mxu0 %v1275
        %1522 = vmatpush.bf16.msra.mxu0 %v1271
        %1523 = vmatpush.bf16.msra.mxu0 %v1267
        %1524 = vmatpush.bf16.msra.mxu0 %v1263
        %1525 = vmatpush.bf16.msra.mxu0 %v1259
        %1526 = vmatpush.bf16.msra.mxu0 %v1255
        %1527 = vmatpush.bf16.msra.mxu0 %v1251
        %1528 = vmatmul.bf16.gmra.mxu0 %v661
        %v1529 = vpop.f32.mrf.mxu0
        %v1530 = vadd.f32 %v1517, %v1529
        %v1531 = vpop.f32.mrf.mxu0
        %1532 = vdwg.mxu0
        %1533 = vmatpush.bf16.msra.mxu0 %v1311
        %1534 = vmatpush.bf16.msra.mxu0 %v1307
        %1535 = vmatpush.bf16.msra.mxu0 %v1303
        %1536 = vmatpush.bf16.msra.mxu0 %v1299
        %1537 = vmatpush.bf16.msra.mxu0 %v1295
        %1538 = vmatpush.bf16.msra.mxu0 %v1291
        %1539 = vmatpush.bf16.msra.mxu0 %v1287
        %1540 = vmatpush.bf16.msra.mxu0 %v1283
        %1541 = vmatmul.bf16.gmra.mxu0 %v662
        %v1542 = vpop.f32.mrf.mxu0
        %v1543 = vadd.f32 %v1530, %v1542
        %v1544 = vpop.f32.mrf.mxu0
        %1545 = vdwg.mxu0
        %1546 = vmatpush.bf16.msra.mxu0 %v1216
        %1547 = vmatpush.bf16.msra.mxu0 %v1212
        %1548 = vmatpush.bf16.msra.mxu0 %v1208
        %1549 = vmatpush.bf16.msra.mxu0 %v1204
        %1550 = vmatpush.bf16.msra.mxu0 %v1200
        %1551 = vmatpush.bf16.msra.mxu0 %v1196
        %1552 = vmatpush.bf16.msra.mxu0 %v1192
        %1553 = vmatpush.bf16.msra.mxu0 %v1188
        %1554 = vmatmul.bf16.gmra.mxu0 %v659
        %v1555 = vpop.f32.mrf.mxu0
        %v1556 = vadd.f32 %v796, %v1555
        %v1557 = vpop.f32.mrf.mxu0
        %1558 = vdwg.mxu0
        %1559 = vmatpush.bf16.msra.mxu0 %v1248
        %1560 = vmatpush.bf16.msra.mxu0 %v1244
        %1561 = vmatpush.bf16.msra.mxu0 %v1240
        %1562 = vmatpush.bf16.msra.mxu0 %v1236
        %1563 = vmatpush.bf16.msra.mxu0 %v1232
        %1564 = vmatpush.bf16.msra.mxu0 %v1228
        %1565 = vmatpush.bf16.msra.mxu0 %v1224
        %1566 = vmatpush.bf16.msra.mxu0 %v1220
        %1567 = vmatmul.bf16.gmra.mxu0 %v660
        %v1568 = vpop.f32.mrf.mxu0
        %v1569 = vadd.f32 %v1556, %v1568
        %v1570 = vpop.f32.mrf.mxu0
        %1571 = vdwg.mxu0
        %1572 = vmatpush.bf16.msra.mxu0 %v1280
        %1573 = vmatpush.bf16.msra.mxu0 %v1276
        %1574 = vmatpush.bf16.msra.mxu0 %v1272
        %1575 = vmatpush.bf16.msra.mxu0 %v1268
        %1576 = vmatpush.bf16.msra.mxu0 %v1264
        %1577 = vmatpush.bf16.msra.mxu0 %v1260
        %1578 = vmatpush.bf16.msra.mxu0 %v1256
        %1579 = vmatpush.bf16.msra.mxu0 %v1252
        %1580 = vmatmul.bf16.gmra.mxu0 %v661
        %v1581 = vpop.f32.mrf.mxu0
        %v1582 = vadd.f32 %v1569, %v1581
        %v1583 = vpop.f32.mrf.mxu0
        %1584 = vdwg.mxu0
        %1585 = vmatpush.bf16.msra.mxu0 %v1312
        %1586 = vmatpush.bf16.msra.mxu0 %v1308
        %1587 = vmatpush.bf16.msra.mxu0 %v1304
        %1588 = vmatpush.bf16.msra.mxu0 %v1300
        %1589 = vmatpush.bf16.msra.mxu0 %v1296
        %1590 = vmatpush.bf16.msra.mxu0 %v1292
        %1591 = vmatpush.bf16.msra.mxu0 %v1288
        %1592 = vmatpush.bf16.msra.mxu0 %v1284
        %1593 = vmatmul.bf16.gmra.mxu0 %v662
        %v1594 = vpop.f32.mrf.mxu0
        %v1595 = vadd.f32 %v1582, %v1594
        %v1596 = vpop.f32.mrf.mxu0
        %1597 = vdwg.mxu0
        %1598 = vmatpush.bf16.msra.mxu0 %v1217
        %1599 = vmatpush.bf16.msra.mxu0 %v1213
        %1600 = vmatpush.bf16.msra.mxu0 %v1209
        %1601 = vmatpush.bf16.msra.mxu0 %v1205
        %1602 = vmatpush.bf16.msra.mxu0 %v1201
        %1603 = vmatpush.bf16.msra.mxu0 %v1197
        %1604 = vmatpush.bf16.msra.mxu0 %v1193
        %1605 = vmatpush.bf16.msra.mxu0 %v1189
        %1606 = vmatmul.bf16.gmra.mxu0 %v659
        %v1607 = vpop.f32.mrf.mxu0
        %v1608 = vadd.f32 %v797, %v1607
        %v1609 = vpop.f32.mrf.mxu0
        %1610 = vdwg.mxu0
        %1611 = vmatpush.bf16.msra.mxu0 %v1249
        %1612 = vmatpush.bf16.msra.mxu0 %v1245
        %1613 = vmatpush.bf16.msra.mxu0 %v1241
        %1614 = vmatpush.bf16.msra.mxu0 %v1237
        %1615 = vmatpush.bf16.msra.mxu0 %v1233
        %1616 = vmatpush.bf16.msra.mxu0 %v1229
        %1617 = vmatpush.bf16.msra.mxu0 %v1225
        %1618 = vmatpush.bf16.msra.mxu0 %v1221
        %1619 = vmatmul.bf16.gmra.mxu0 %v660
        %v1620 = vpop.f32.mrf.mxu0
        %v1621 = vadd.f32 %v1608, %v1620
        %v1622 = vpop.f32.mrf.mxu0
        %1623 = vdwg.mxu0
        %1624 = vmatpush.bf16.msra.mxu0 %v1281
        %1625 = vmatpush.bf16.msra.mxu0 %v1277
        %1626 = vmatpush.bf16.msra.mxu0 %v1273
        %1627 = vmatpush.bf16.msra.mxu0 %v1269
        %1628 = vmatpush.bf16.msra.mxu0 %v1265
        %1629 = vmatpush.bf16.msra.mxu0 %v1261
        %1630 = vmatpush.bf16.msra.mxu0 %v1257
        %1631 = vmatpush.bf16.msra.mxu0 %v1253
        %1632 = vmatmul.bf16.gmra.mxu0 %v661
        %v1633 = vpop.f32.mrf.mxu0
        %v1634 = vadd.f32 %v1621, %v1633
        %v1635 = vpop.f32.mrf.mxu0
        %1636 = vdwg.mxu0
        %1637 = vmatpush.bf16.msra.mxu0 %v1313
        %1638 = vmatpush.bf16.msra.mxu0 %v1309
        %1639 = vmatpush.bf16.msra.mxu0 %v1305
        %1640 = vmatpush.bf16.msra.mxu0 %v1301
        %1641 = vmatpush.bf16.msra.mxu0 %v1297
        %1642 = vmatpush.bf16.msra.mxu0 %v1293
        %1643 = vmatpush.bf16.msra.mxu0 %v1289
        %1644 = vmatpush.bf16.msra.mxu0 %v1285
        %1645 = vmatmul.bf16.gmra.mxu0 %v662
        %v1646 = vpop.f32.mrf.mxu0
        %v1647 = vadd.f32 %v1634, %v1646
        %v1648 = vpop.f32.mrf.mxu0
        %1649 = vdwg.mxu0
        %v1650 = vmax.f32 %v1491, 0.0
        %v1651 = vmax.f32 %v1543, 0.0
        %v1652 = vmax.f32 %v1595, 0.0
        %v1653 = vmax.f32 %v1647, 0.0
        %v1654 = vpack.c.bf16 %v1650, %v1650
        %v1655 = vpack.c.bf16 %v1651, %v1651
        %v1656 = vpack.c.bf16 %v1652, %v1652
        %v1657 = vpack.c.bf16 %v1653, %v1653
        %v1658 = vld [vmem:[#allocation10 + $0x500] sm:$0xff]
        %v1659 = vld [vmem:[#allocation10 + $0x508] sm:$0xff]
        %v1660 = vld [vmem:[#allocation10 + $0x510] sm:$0xff]
        %v1661 = vld [vmem:[#allocation10 + $0x518] sm:$0xff]
        %v1662 = vld [vmem:[#allocation10 + $0x520] sm:$0xff]
        %v1663 = vld [vmem:[#allocation10 + $0x528] sm:$0xff]
        %v1664 = vld [vmem:[#allocation10 + $0x530] sm:$0xff]
        %v1665 = vld [vmem:[#allocation10 + $0x538] sm:$0xff]
        %v1666 = vld [vmem:[#allocation10 + $0x540] sm:$0xff]
        %v1667 = vld [vmem:[#allocation10 + $0x548] sm:$0xff]
        %v1668 = vld [vmem:[#allocation10 + $0x550] sm:$0xff]
        %v1669 = vld [vmem:[#allocation10 + $0x558] sm:$0xff]
        %v1670 = vld [vmem:[#allocation10 + $0x560] sm:$0xff]
        %v1671 = vld [vmem:[#allocation10 + $0x568] sm:$0xff]
        %v1672 = vld [vmem:[#allocation10 + $0x570] sm:$0xff]
        %v1673 = vld [vmem:[#allocation10 + $0x578] sm:$0xff]
        %v1674 = vld [vmem:[#allocation10 + $0x580] sm:$0xff]
        %v1675 = vld [vmem:[#allocation10 + $0x588] sm:$0xff]
        %v1676 = vld [vmem:[#allocation10 + $0x590] sm:$0xff]
        %v1677 = vld [vmem:[#allocation10 + $0x598] sm:$0xff]
        %v1678 = vld [vmem:[#allocation10 + $0x5a0] sm:$0xff]
        %v1679 = vld [vmem:[#allocation10 + $0x5a8] sm:$0xff]
        %v1680 = vld [vmem:[#allocation10 + $0x5b0] sm:$0xff]
        %v1681 = vld [vmem:[#allocation10 + $0x5b8] sm:$0xff]
        %v1682 = vld [vmem:[#allocation10 + $0x5c0] sm:$0xff]
        %v1683 = vld [vmem:[#allocation10 + $0x5c8] sm:$0xff]
        %v1684 = vld [vmem:[#allocation10 + $0x5d0] sm:$0xff]
        %v1685 = vld [vmem:[#allocation10 + $0x5d8] sm:$0xff]
        %v1686 = vld [vmem:[#allocation10 + $0x5e0] sm:$0xff]
        %v1687 = vld [vmem:[#allocation10 + $0x5e8] sm:$0xff]
        %v1688 = vld [vmem:[#allocation10 + $0x5f0] sm:$0xff]
        %v1689 = vld [vmem:[#allocation10 + $0x5f8] sm:$0xff]
        %v1690 = vld [vmem:[#allocation10 + $0x600] sm:$0xff]
        %v1691 = vld [vmem:[#allocation10 + $0x608] sm:$0xff]
        %v1692 = vld [vmem:[#allocation10 + $0x610] sm:$0xff]
        %v1693 = vld [vmem:[#allocation10 + $0x618] sm:$0xff]
        %v1694 = vld [vmem:[#allocation10 + $0x620] sm:$0xff]
        %v1695 = vld [vmem:[#allocation10 + $0x628] sm:$0xff]
        %v1696 = vld [vmem:[#allocation10 + $0x630] sm:$0xff]
        %v1697 = vld [vmem:[#allocation10 + $0x638] sm:$0xff]
        %v1698 = vld [vmem:[#allocation10 + $0x640] sm:$0xff]
        %v1699 = vld [vmem:[#allocation10 + $0x648] sm:$0xff]
        %v1700 = vld [vmem:[#allocation10 + $0x650] sm:$0xff]
        %v1701 = vld [vmem:[#allocation10 + $0x658] sm:$0xff]
        %v1702 = vld [vmem:[#allocation10 + $0x660] sm:$0xff]
        %v1703 = vld [vmem:[#allocation10 + $0x668] sm:$0xff]
        %v1704 = vld [vmem:[#allocation10 + $0x670] sm:$0xff]
        %v1705 = vld [vmem:[#allocation10 + $0x678] sm:$0xff]
        %v1706 = vld [vmem:[#allocation10 + $0x680] sm:$0xff]
        %v1707 = vld [vmem:[#allocation10 + $0x688] sm:$0xff]
        %v1708 = vld [vmem:[#allocation10 + $0x690] sm:$0xff]
        %v1709 = vld [vmem:[#allocation10 + $0x698] sm:$0xff]
        %v1710 = vld [vmem:[#allocation10 + $0x6a0] sm:$0xff]
        %v1711 = vld [vmem:[#allocation10 + $0x6a8] sm:$0xff]
        %v1712 = vld [vmem:[#allocation10 + $0x6b0] sm:$0xff]
        %v1713 = vld [vmem:[#allocation10 + $0x6b8] sm:$0xff]
        %v1714 = vld [vmem:[#allocation10 + $0x6c0] sm:$0xff]
        %v1715 = vld [vmem:[#allocation10 + $0x6c8] sm:$0xff]
        %v1716 = vld [vmem:[#allocation10 + $0x6d0] sm:$0xff]
        %v1717 = vld [vmem:[#allocation10 + $0x6d8] sm:$0xff]
        %v1718 = vld [vmem:[#allocation10 + $0x6e0] sm:$0xff]
        %v1719 = vld [vmem:[#allocation10 + $0x6e8] sm:$0xff]
        %v1720 = vld [vmem:[#allocation10 + $0x6f0] sm:$0xff]
        %v1721 = vld [vmem:[#allocation10 + $0x6f8] sm:$0xff]
        %v1722 = vld [vmem:[#allocation10 + $0x700] sm:$0xff]
        %v1723 = vld [vmem:[#allocation10 + $0x708] sm:$0xff]
        %v1724 = vld [vmem:[#allocation10 + $0x710] sm:$0xff]
        %v1725 = vld [vmem:[#allocation10 + $0x718] sm:$0xff]
        %v1726 = vld [vmem:[#allocation10 + $0x720] sm:$0xff]
        %v1727 = vld [vmem:[#allocation10 + $0x728] sm:$0xff]
        %v1728 = vld [vmem:[#allocation10 + $0x730] sm:$0xff]
        %v1729 = vld [vmem:[#allocation10 + $0x738] sm:$0xff]
        %v1730 = vld [vmem:[#allocation10 + $0x740] sm:$0xff]
        %v1731 = vld [vmem:[#allocation10 + $0x748] sm:$0xff]
        %v1732 = vld [vmem:[#allocation10 + $0x750] sm:$0xff]
        %v1733 = vld [vmem:[#allocation10 + $0x758] sm:$0xff]
        %v1734 = vld [vmem:[#allocation10 + $0x760] sm:$0xff]
        %v1735 = vld [vmem:[#allocation10 + $0x768] sm:$0xff]
        %v1736 = vld [vmem:[#allocation10 + $0x770] sm:$0xff]
        %v1737 = vld [vmem:[#allocation10 + $0x778] sm:$0xff]
        %v1738 = vld [vmem:[#allocation10 + $0x780] sm:$0xff]
        %v1739 = vld [vmem:[#allocation10 + $0x788] sm:$0xff]
        %v1740 = vld [vmem:[#allocation10 + $0x790] sm:$0xff]
        %v1741 = vld [vmem:[#allocation10 + $0x798] sm:$0xff]
        %v1742 = vld [vmem:[#allocation10 + $0x7a0] sm:$0xff]
        %v1743 = vld [vmem:[#allocation10 + $0x7a8] sm:$0xff]
        %v1744 = vld [vmem:[#allocation10 + $0x7b0] sm:$0xff]
        %v1745 = vld [vmem:[#allocation10 + $0x7b8] sm:$0xff]
        %v1746 = vld [vmem:[#allocation10 + $0x7c0] sm:$0xff]
        %v1747 = vld [vmem:[#allocation10 + $0x7c8] sm:$0xff]
        %v1748 = vld [vmem:[#allocation10 + $0x7d0] sm:$0xff]
        %v1749 = vld [vmem:[#allocation10 + $0x7d8] sm:$0xff]
        %v1750 = vld [vmem:[#allocation10 + $0x7e0] sm:$0xff]
        %v1751 = vld [vmem:[#allocation10 + $0x7e8] sm:$0xff]
        %v1752 = vld [vmem:[#allocation10 + $0x7f0] sm:$0xff]
        %v1753 = vld [vmem:[#allocation10 + $0x7f8] sm:$0xff]
        %v1754 = vld [vmem:[#allocation10 + $0x800] sm:$0xff]
        %v1755 = vld [vmem:[#allocation10 + $0x808] sm:$0xff]
        %v1756 = vld [vmem:[#allocation10 + $0x810] sm:$0xff]
        %v1757 = vld [vmem:[#allocation10 + $0x818] sm:$0xff]
        %v1758 = vld [vmem:[#allocation10 + $0x820] sm:$0xff]
        %v1759 = vld [vmem:[#allocation10 + $0x828] sm:$0xff]
        %v1760 = vld [vmem:[#allocation10 + $0x830] sm:$0xff]
        %v1761 = vld [vmem:[#allocation10 + $0x838] sm:$0xff]
        %v1762 = vld [vmem:[#allocation10 + $0x840] sm:$0xff]
        %v1763 = vld [vmem:[#allocation10 + $0x848] sm:$0xff]
        %v1764 = vld [vmem:[#allocation10 + $0x850] sm:$0xff]
        %v1765 = vld [vmem:[#allocation10 + $0x858] sm:$0xff]
        %v1766 = vld [vmem:[#allocation10 + $0x860] sm:$0xff]
        %v1767 = vld [vmem:[#allocation10 + $0x868] sm:$0xff]
        %v1768 = vld [vmem:[#allocation10 + $0x870] sm:$0xff]
        %v1769 = vld [vmem:[#allocation10 + $0x878] sm:$0xff]
        %v1770 = vld [vmem:[#allocation10 + $0x880] sm:$0xff]
        %v1771 = vld [vmem:[#allocation10 + $0x888] sm:$0xff]
        %v1772 = vld [vmem:[#allocation10 + $0x890] sm:$0xff]
        %v1773 = vld [vmem:[#allocation10 + $0x898] sm:$0xff]
        %v1774 = vld [vmem:[#allocation10 + $0x8a0] sm:$0xff]
        %v1775 = vld [vmem:[#allocation10 + $0x8a8] sm:$0xff]
        %v1776 = vld [vmem:[#allocation10 + $0x8b0] sm:$0xff]
        %v1777 = vld [vmem:[#allocation10 + $0x8b8] sm:$0xff]
        %v1778 = vld [vmem:[#allocation10 + $0x8c0] sm:$0xff]
        %v1779 = vld [vmem:[#allocation10 + $0x8c8] sm:$0xff]
        %v1780 = vld [vmem:[#allocation10 + $0x8d0] sm:$0xff]
        %v1781 = vld [vmem:[#allocation10 + $0x8d8] sm:$0xff]
        %v1782 = vld [vmem:[#allocation10 + $0x8e0] sm:$0xff]
        %v1783 = vld [vmem:[#allocation10 + $0x8e8] sm:$0xff]
        %v1784 = vld [vmem:[#allocation10 + $0x8f0] sm:$0xff]
        %v1785 = vld [vmem:[#allocation10 + $0x8f8] sm:$0xff]
        %s1786 = scalar_lea.vmem [#allocation13], 2
        %v1787 = vld [vmem:[%s1786] ss:$8 sm:$0xf]
        %v1789 = vperm.slane %v1787, 0
        %v1790 = vperm.slane %v1787, 1
        %v1791 = vperm.slane %v1787, 2
        %v1792 = vperm.slane %v1787, 3
        %v1925 = vunpack.c.l.b16 %v1658
        %v1926 = vunpack.c.h.b16 %v1658
        %v1927 = vunpack.c.l.b16 %v1659
        %v1928 = vunpack.c.h.b16 %v1659
        %v1929 = vunpack.c.l.b16 %v1660
        %v1930 = vunpack.c.h.b16 %v1660
        %v1931 = vunpack.c.l.b16 %v1661
        %v1932 = vunpack.c.h.b16 %v1661
        %v1933 = vunpack.c.l.b16 %v1662
        %v1934 = vunpack.c.h.b16 %v1662
        %v1935 = vunpack.c.l.b16 %v1663
        %v1936 = vunpack.c.h.b16 %v1663
        %v1937 = vunpack.c.l.b16 %v1664
        %v1938 = vunpack.c.h.b16 %v1664
        %v1939 = vunpack.c.l.b16 %v1665
        %v1940 = vunpack.c.h.b16 %v1665
        %v1941 = vunpack.c.l.b16 %v1666
        %v1942 = vunpack.c.h.b16 %v1666
        %v1943 = vunpack.c.l.b16 %v1667
        %v1944 = vunpack.c.h.b16 %v1667
        %v1945 = vunpack.c.l.b16 %v1668
        %v1946 = vunpack.c.h.b16 %v1668
        %v1947 = vunpack.c.l.b16 %v1669
        %v1948 = vunpack.c.h.b16 %v1669
        %v1949 = vunpack.c.l.b16 %v1670
        %v1950 = vunpack.c.h.b16 %v1670
        %v1951 = vunpack.c.l.b16 %v1671
        %v1952 = vunpack.c.h.b16 %v1671
        %v1953 = vunpack.c.l.b16 %v1672
        %v1954 = vunpack.c.h.b16 %v1672
        %v1955 = vunpack.c.l.b16 %v1673
        %v1956 = vunpack.c.h.b16 %v1673
        %v1957 = vunpack.c.l.b16 %v1674
        %v1958 = vunpack.c.h.b16 %v1674
        %v1959 = vunpack.c.l.b16 %v1675
        %v1960 = vunpack.c.h.b16 %v1675
        %v1961 = vunpack.c.l.b16 %v1676
        %v1962 = vunpack.c.h.b16 %v1676
        %v1963 = vunpack.c.l.b16 %v1677
        %v1964 = vunpack.c.h.b16 %v1677
        %v1965 = vunpack.c.l.b16 %v1678
        %v1966 = vunpack.c.h.b16 %v1678
        %v1967 = vunpack.c.l.b16 %v1679
        %v1968 = vunpack.c.h.b16 %v1679
        %v1969 = vunpack.c.l.b16 %v1680
        %v1970 = vunpack.c.h.b16 %v1680
        %v1971 = vunpack.c.l.b16 %v1681
        %v1972 = vunpack.c.h.b16 %v1681
        %v1973 = vunpack.c.l.b16 %v1682
        %v1974 = vunpack.c.h.b16 %v1682
        %v1975 = vunpack.c.l.b16 %v1683
        %v1976 = vunpack.c.h.b16 %v1683
        %v1977 = vunpack.c.l.b16 %v1684
        %v1978 = vunpack.c.h.b16 %v1684
        %v1979 = vunpack.c.l.b16 %v1685
        %v1980 = vunpack.c.h.b16 %v1685
        %v1981 = vunpack.c.l.b16 %v1686
        %v1982 = vunpack.c.h.b16 %v1686
        %v1983 = vunpack.c.l.b16 %v1687
        %v1984 = vunpack.c.h.b16 %v1687
        %v1985 = vunpack.c.l.b16 %v1688
        %v1986 = vunpack.c.h.b16 %v1688
        %v1987 = vunpack.c.l.b16 %v1689
        %v1988 = vunpack.c.h.b16 %v1689
        %v1989 = vunpack.c.l.b16 %v1690
        %v1990 = vunpack.c.h.b16 %v1690
        %v1991 = vunpack.c.l.b16 %v1691
        %v1992 = vunpack.c.h.b16 %v1691
        %v1993 = vunpack.c.l.b16 %v1692
        %v1994 = vunpack.c.h.b16 %v1692
        %v1995 = vunpack.c.l.b16 %v1693
        %v1996 = vunpack.c.h.b16 %v1693
        %v1997 = vunpack.c.l.b16 %v1694
        %v1998 = vunpack.c.h.b16 %v1694
        %v1999 = vunpack.c.l.b16 %v1695
        %v2000 = vunpack.c.h.b16 %v1695
        %v2001 = vunpack.c.l.b16 %v1696
        %v2002 = vunpack.c.h.b16 %v1696
        %v2003 = vunpack.c.l.b16 %v1697
        %v2004 = vunpack.c.h.b16 %v1697
        %v2005 = vunpack.c.l.b16 %v1698
        %v2006 = vunpack.c.h.b16 %v1698
        %v2007 = vunpack.c.l.b16 %v1699
        %v2008 = vunpack.c.h.b16 %v1699
        %v2009 = vunpack.c.l.b16 %v1700
        %v2010 = vunpack.c.h.b16 %v1700
        %v2011 = vunpack.c.l.b16 %v1701
        %v2012 = vunpack.c.h.b16 %v1701
        %v2013 = vunpack.c.l.b16 %v1702
        %v2014 = vunpack.c.h.b16 %v1702
        %v2015 = vunpack.c.l.b16 %v1703
        %v2016 = vunpack.c.h.b16 %v1703
        %v2017 = vunpack.c.l.b16 %v1704
        %v2018 = vunpack.c.h.b16 %v1704
        %v2019 = vunpack.c.l.b16 %v1705
        %v2020 = vunpack.c.h.b16 %v1705
        %v2021 = vunpack.c.l.b16 %v1706
        %v2022 = vunpack.c.h.b16 %v1706
        %v2023 = vunpack.c.l.b16 %v1707
        %v2024 = vunpack.c.h.b16 %v1707
        %v2025 = vunpack.c.l.b16 %v1708
        %v2026 = vunpack.c.h.b16 %v1708
        %v2027 = vunpack.c.l.b16 %v1709
        %v2028 = vunpack.c.h.b16 %v1709
        %v2029 = vunpack.c.l.b16 %v1710
        %v2030 = vunpack.c.h.b16 %v1710
        %v2031 = vunpack.c.l.b16 %v1711
        %v2032 = vunpack.c.h.b16 %v1711
        %v2033 = vunpack.c.l.b16 %v1712
        %v2034 = vunpack.c.h.b16 %v1712
        %v2035 = vunpack.c.l.b16 %v1713
        %v2036 = vunpack.c.h.b16 %v1713
        %v2037 = vunpack.c.l.b16 %v1714
        %v2038 = vunpack.c.h.b16 %v1714
        %v2039 = vunpack.c.l.b16 %v1715
        %v2040 = vunpack.c.h.b16 %v1715
        %v2041 = vunpack.c.l.b16 %v1716
        %v2042 = vunpack.c.h.b16 %v1716
        %v2043 = vunpack.c.l.b16 %v1717
        %v2044 = vunpack.c.h.b16 %v1717
        %v2045 = vunpack.c.l.b16 %v1718
        %v2046 = vunpack.c.h.b16 %v1718
        %v2047 = vunpack.c.l.b16 %v1719
        %v2048 = vunpack.c.h.b16 %v1719
        %v2049 = vunpack.c.l.b16 %v1720
        %v2050 = vunpack.c.h.b16 %v1720
        %v2051 = vunpack.c.l.b16 %v1721
        %v2052 = vunpack.c.h.b16 %v1721
        %v2053 = vunpack.c.l.b16 %v1722
        %v2054 = vunpack.c.h.b16 %v1722
        %v2055 = vunpack.c.l.b16 %v1723
        %v2056 = vunpack.c.h.b16 %v1723
        %v2057 = vunpack.c.l.b16 %v1724
        %v2058 = vunpack.c.h.b16 %v1724
        %v2059 = vunpack.c.l.b16 %v1725
        %v2060 = vunpack.c.h.b16 %v1725
        %v2061 = vunpack.c.l.b16 %v1726
        %v2062 = vunpack.c.h.b16 %v1726
        %v2063 = vunpack.c.l.b16 %v1727
        %v2064 = vunpack.c.h.b16 %v1727
        %v2065 = vunpack.c.l.b16 %v1728
        %v2066 = vunpack.c.h.b16 %v1728
        %v2067 = vunpack.c.l.b16 %v1729
        %v2068 = vunpack.c.h.b16 %v1729
        %v2069 = vunpack.c.l.b16 %v1730
        %v2070 = vunpack.c.h.b16 %v1730
        %v2071 = vunpack.c.l.b16 %v1731
        %v2072 = vunpack.c.h.b16 %v1731
        %v2073 = vunpack.c.l.b16 %v1732
        %v2074 = vunpack.c.h.b16 %v1732
        %v2075 = vunpack.c.l.b16 %v1733
        %v2076 = vunpack.c.h.b16 %v1733
        %v2077 = vunpack.c.l.b16 %v1734
        %v2078 = vunpack.c.h.b16 %v1734
        %v2079 = vunpack.c.l.b16 %v1735
        %v2080 = vunpack.c.h.b16 %v1735
        %v2081 = vunpack.c.l.b16 %v1736
        %v2082 = vunpack.c.h.b16 %v1736
        %v2083 = vunpack.c.l.b16 %v1737
        %v2084 = vunpack.c.h.b16 %v1737
        %v2085 = vunpack.c.l.b16 %v1738
        %v2086 = vunpack.c.h.b16 %v1738
        %v2087 = vunpack.c.l.b16 %v1739
        %v2088 = vunpack.c.h.b16 %v1739
        %v2089 = vunpack.c.l.b16 %v1740
        %v2090 = vunpack.c.h.b16 %v1740
        %v2091 = vunpack.c.l.b16 %v1741
        %v2092 = vunpack.c.h.b16 %v1741
        %v2093 = vunpack.c.l.b16 %v1742
        %v2094 = vunpack.c.h.b16 %v1742
        %v2095 = vunpack.c.l.b16 %v1743
        %v2096 = vunpack.c.h.b16 %v1743
        %v2097 = vunpack.c.l.b16 %v1744
        %v2098 = vunpack.c.h.b16 %v1744
        %v2099 = vunpack.c.l.b16 %v1745
        %v2100 = vunpack.c.h.b16 %v1745
        %v2101 = vunpack.c.l.b16 %v1746
        %v2102 = vunpack.c.h.b16 %v1746
        %v2103 = vunpack.c.l.b16 %v1747
        %v2104 = vunpack.c.h.b16 %v1747
        %v2105 = vunpack.c.l.b16 %v1748
        %v2106 = vunpack.c.h.b16 %v1748
        %v2107 = vunpack.c.l.b16 %v1749
        %v2108 = vunpack.c.h.b16 %v1749
        %v2109 = vunpack.c.l.b16 %v1750
        %v2110 = vunpack.c.h.b16 %v1750
        %v2111 = vunpack.c.l.b16 %v1751
        %v2112 = vunpack.c.h.b16 %v1751
        %v2113 = vunpack.c.l.b16 %v1752
        %v2114 = vunpack.c.h.b16 %v1752
        %v2115 = vunpack.c.l.b16 %v1753
        %v2116 = vunpack.c.h.b16 %v1753
        %v2117 = vunpack.c.l.b16 %v1754
        %v2118 = vunpack.c.h.b16 %v1754
        %v2119 = vunpack.c.l.b16 %v1755
        %v2120 = vunpack.c.h.b16 %v1755
        %v2121 = vunpack.c.l.b16 %v1756
        %v2122 = vunpack.c.h.b16 %v1756
        %v2123 = vunpack.c.l.b16 %v1757
        %v2124 = vunpack.c.h.b16 %v1757
        %v2125 = vunpack.c.l.b16 %v1758
        %v2126 = vunpack.c.h.b16 %v1758
        %v2127 = vunpack.c.l.b16 %v1759
        %v2128 = vunpack.c.h.b16 %v1759
        %v2129 = vunpack.c.l.b16 %v1760
        %v2130 = vunpack.c.h.b16 %v1760
        %v2131 = vunpack.c.l.b16 %v1761
        %v2132 = vunpack.c.h.b16 %v1761
        %v2133 = vunpack.c.l.b16 %v1762
        %v2134 = vunpack.c.h.b16 %v1762
        %v2135 = vunpack.c.l.b16 %v1763
        %v2136 = vunpack.c.h.b16 %v1763
        %v2137 = vunpack.c.l.b16 %v1764
        %v2138 = vunpack.c.h.b16 %v1764
        %v2139 = vunpack.c.l.b16 %v1765
        %v2140 = vunpack.c.h.b16 %v1765
        %v2141 = vunpack.c.l.b16 %v1766
        %v2142 = vunpack.c.h.b16 %v1766
        %v2143 = vunpack.c.l.b16 %v1767
        %v2144 = vunpack.c.h.b16 %v1767
        %v2145 = vunpack.c.l.b16 %v1768
        %v2146 = vunpack.c.h.b16 %v1768
        %v2147 = vunpack.c.l.b16 %v1769
        %v2148 = vunpack.c.h.b16 %v1769
        %v2149 = vunpack.c.l.b16 %v1770
        %v2150 = vunpack.c.h.b16 %v1770
        %v2151 = vunpack.c.l.b16 %v1771
        %v2152 = vunpack.c.h.b16 %v1771
        %v2153 = vunpack.c.l.b16 %v1772
        %v2154 = vunpack.c.h.b16 %v1772
        %v2155 = vunpack.c.l.b16 %v1773
        %v2156 = vunpack.c.h.b16 %v1773
        %v2157 = vunpack.c.l.b16 %v1774
        %v2158 = vunpack.c.h.b16 %v1774
        %v2159 = vunpack.c.l.b16 %v1775
        %v2160 = vunpack.c.h.b16 %v1775
        %v2161 = vunpack.c.l.b16 %v1776
        %v2162 = vunpack.c.h.b16 %v1776
        %v2163 = vunpack.c.l.b16 %v1777
        %v2164 = vunpack.c.h.b16 %v1777
        %v2165 = vunpack.c.l.b16 %v1778
        %v2166 = vunpack.c.h.b16 %v1778
        %v2167 = vunpack.c.l.b16 %v1779
        %v2168 = vunpack.c.h.b16 %v1779
        %v2169 = vunpack.c.l.b16 %v1780
        %v2170 = vunpack.c.h.b16 %v1780
        %v2171 = vunpack.c.l.b16 %v1781
        %v2172 = vunpack.c.h.b16 %v1781
        %v2173 = vunpack.c.l.b16 %v1782
        %v2174 = vunpack.c.h.b16 %v1782
        %v2175 = vunpack.c.l.b16 %v1783
        %v2176 = vunpack.c.h.b16 %v1783
        %v2177 = vunpack.c.l.b16 %v1784
        %v2178 = vunpack.c.h.b16 %v1784
        %v2179 = vunpack.c.l.b16 %v1785
        %v2180 = vunpack.c.h.b16 %v1785
        %v2181 = vpack.c.b16 %v1929, %v1925
        %v2182 = vpack.c.b16 %v1930, %v1926
        %v2183 = vpack.c.b16 %v1931, %v1927
        %v2184 = vpack.c.b16 %v1932, %v1928
        %v2185 = vpack.c.b16 %v1937, %v1933
        %v2186 = vpack.c.b16 %v1938, %v1934
        %v2187 = vpack.c.b16 %v1939, %v1935
        %v2188 = vpack.c.b16 %v1940, %v1936
        %v2189 = vpack.c.b16 %v1945, %v1941
        %v2190 = vpack.c.b16 %v1946, %v1942
        %v2191 = vpack.c.b16 %v1947, %v1943
        %v2192 = vpack.c.b16 %v1948, %v1944
        %v2193 = vpack.c.b16 %v1953, %v1949
        %v2194 = vpack.c.b16 %v1954, %v1950
        %v2195 = vpack.c.b16 %v1955, %v1951
        %v2196 = vpack.c.b16 %v1956, %v1952
        %v2197 = vpack.c.b16 %v1961, %v1957
        %v2198 = vpack.c.b16 %v1962, %v1958
        %v2199 = vpack.c.b16 %v1963, %v1959
        %v2200 = vpack.c.b16 %v1964, %v1960
        %v2201 = vpack.c.b16 %v1969, %v1965
        %v2202 = vpack.c.b16 %v1970, %v1966
        %v2203 = vpack.c.b16 %v1971, %v1967
        %v2204 = vpack.c.b16 %v1972, %v1968
        %v2205 = vpack.c.b16 %v1977, %v1973
        %v2206 = vpack.c.b16 %v1978, %v1974
        %v2207 = vpack.c.b16 %v1979, %v1975
        %v2208 = vpack.c.b16 %v1980, %v1976
        %v2209 = vpack.c.b16 %v1985, %v1981
        %v2210 = vpack.c.b16 %v1986, %v1982
        %v2211 = vpack.c.b16 %v1987, %v1983
        %v2212 = vpack.c.b16 %v1988, %v1984
        %v2213 = vpack.c.b16 %v1993, %v1989
        %v2214 = vpack.c.b16 %v1994, %v1990
        %v2215 = vpack.c.b16 %v1995, %v1991
        %v2216 = vpack.c.b16 %v1996, %v1992
        %v2217 = vpack.c.b16 %v2001, %v1997
        %v2218 = vpack.c.b16 %v2002, %v1998
        %v2219 = vpack.c.b16 %v2003, %v1999
        %v2220 = vpack.c.b16 %v2004, %v2000
        %v2221 = vpack.c.b16 %v2009, %v2005
        %v2222 = vpack.c.b16 %v2010, %v2006
        %v2223 = vpack.c.b16 %v2011, %v2007
        %v2224 = vpack.c.b16 %v2012, %v2008
        %v2225 = vpack.c.b16 %v2017, %v2013
        %v2226 = vpack.c.b16 %v2018, %v2014
        %v2227 = vpack.c.b16 %v2019, %v2015
        %v2228 = vpack.c.b16 %v2020, %v2016
        %v2229 = vpack.c.b16 %v2025, %v2021
        %v2230 = vpack.c.b16 %v2026, %v2022
        %v2231 = vpack.c.b16 %v2027, %v2023
        %v2232 = vpack.c.b16 %v2028, %v2024
        %v2233 = vpack.c.b16 %v2033, %v2029
        %v2234 = vpack.c.b16 %v2034, %v2030
        %v2235 = vpack.c.b16 %v2035, %v2031
        %v2236 = vpack.c.b16 %v2036, %v2032
        %v2237 = vpack.c.b16 %v2041, %v2037
        %v2238 = vpack.c.b16 %v2042, %v2038
        %v2239 = vpack.c.b16 %v2043, %v2039
        %v2240 = vpack.c.b16 %v2044, %v2040
        %v2241 = vpack.c.b16 %v2049, %v2045
        %v2242 = vpack.c.b16 %v2050, %v2046
        %v2243 = vpack.c.b16 %v2051, %v2047
        %v2244 = vpack.c.b16 %v2052, %v2048
        %v2245 = vpack.c.b16 %v2057, %v2053
        %v2246 = vpack.c.b16 %v2058, %v2054
        %v2247 = vpack.c.b16 %v2059, %v2055
        %v2248 = vpack.c.b16 %v2060, %v2056
        %v2249 = vpack.c.b16 %v2065, %v2061
        %v2250 = vpack.c.b16 %v2066, %v2062
        %v2251 = vpack.c.b16 %v2067, %v2063
        %v2252 = vpack.c.b16 %v2068, %v2064
        %v2253 = vpack.c.b16 %v2073, %v2069
        %v2254 = vpack.c.b16 %v2074, %v2070
        %v2255 = vpack.c.b16 %v2075, %v2071
        %v2256 = vpack.c.b16 %v2076, %v2072
        %v2257 = vpack.c.b16 %v2081, %v2077
        %v2258 = vpack.c.b16 %v2082, %v2078
        %v2259 = vpack.c.b16 %v2083, %v2079
        %v2260 = vpack.c.b16 %v2084, %v2080
        %v2261 = vpack.c.b16 %v2089, %v2085
        %v2262 = vpack.c.b16 %v2090, %v2086
        %v2263 = vpack.c.b16 %v2091, %v2087
        %v2264 = vpack.c.b16 %v2092, %v2088
        %v2265 = vpack.c.b16 %v2097, %v2093
        %v2266 = vpack.c.b16 %v2098, %v2094
        %v2267 = vpack.c.b16 %v2099, %v2095
        %v2268 = vpack.c.b16 %v2100, %v2096
        %v2269 = vpack.c.b16 %v2105, %v2101
        %v2270 = vpack.c.b16 %v2106, %v2102
        %v2271 = vpack.c.b16 %v2107, %v2103
        %v2272 = vpack.c.b16 %v2108, %v2104
        %v2273 = vpack.c.b16 %v2113, %v2109
        %v2274 = vpack.c.b16 %v2114, %v2110
        %v2275 = vpack.c.b16 %v2115, %v2111
        %v2276 = vpack.c.b16 %v2116, %v2112
        %v2277 = vpack.c.b16 %v2121, %v2117
        %v2278 = vpack.c.b16 %v2122, %v2118
        %v2279 = vpack.c.b16 %v2123, %v2119
        %v2280 = vpack.c.b16 %v2124, %v2120
        %v2281 = vpack.c.b16 %v2129, %v2125
        %v2282 = vpack.c.b16 %v2130, %v2126
        %v2283 = vpack.c.b16 %v2131, %v2127
        %v2284 = vpack.c.b16 %v2132, %v2128
        %v2285 = vpack.c.b16 %v2137, %v2133
        %v2286 = vpack.c.b16 %v2138, %v2134
        %v2287 = vpack.c.b16 %v2139, %v2135
        %v2288 = vpack.c.b16 %v2140, %v2136
        %v2289 = vpack.c.b16 %v2145, %v2141
        %v2290 = vpack.c.b16 %v2146, %v2142
        %v2291 = vpack.c.b16 %v2147, %v2143
        %v2292 = vpack.c.b16 %v2148, %v2144
        %v2293 = vpack.c.b16 %v2153, %v2149
        %v2294 = vpack.c.b16 %v2154, %v2150
        %v2295 = vpack.c.b16 %v2155, %v2151
        %v2296 = vpack.c.b16 %v2156, %v2152
        %v2297 = vpack.c.b16 %v2161, %v2157
        %v2298 = vpack.c.b16 %v2162, %v2158
        %v2299 = vpack.c.b16 %v2163, %v2159
        %v2300 = vpack.c.b16 %v2164, %v2160
        %v2301 = vpack.c.b16 %v2169, %v2165
        %v2302 = vpack.c.b16 %v2170, %v2166
        %v2303 = vpack.c.b16 %v2171, %v2167
        %v2304 = vpack.c.b16 %v2172, %v2168
        %v2305 = vpack.c.b16 %v2177, %v2173
        %v2306 = vpack.c.b16 %v2178, %v2174
        %v2307 = vpack.c.b16 %v2179, %v2175
        %v2308 = vpack.c.b16 %v2180, %v2176
        %2437 = vmatpush.bf16.msra.mxu0 %v2209
        %2438 = vmatpush.bf16.msra.mxu0 %v2205
        %2439 = vmatpush.bf16.msra.mxu0 %v2201
        %2440 = vmatpush.bf16.msra.mxu0 %v2197
        %2441 = vmatpush.bf16.msra.mxu0 %v2193
        %2442 = vmatpush.bf16.msra.mxu0 %v2189
        %2443 = vmatpush.bf16.msra.mxu0 %v2185
        %2444 = vmatpush.bf16.msra.mxu0 %v2181
        %2445 = vmatmul.bf16.gmra.mxu0 %v1654
        %v2446 = vpop.f32.mrf.mxu0
        %v2447 = vadd.f32 %v1789, %v2446
        %v2448 = vpop.f32.mrf.mxu0
        %2449 = vdwg.mxu0
        %2450 = vmatpush.bf16.msra.mxu0 %v2241
        %2451 = vmatpush.bf16.msra.mxu0 %v2237
        %2452 = vmatpush.bf16.msra.mxu0 %v2233
        %2453 = vmatpush.bf16.msra.mxu0 %v2229
        %2454 = vmatpush.bf16.msra.mxu0 %v2225
        %2455 = vmatpush.bf16.msra.mxu0 %v2221
        %2456 = vmatpush.bf16.msra.mxu0 %v2217
        %2457 = vmatpush.bf16.msra.mxu0 %v2213
        %2458 = vmatmul.bf16.gmra.mxu0 %v1655
        %v2459 = vpop.f32.mrf.mxu0
        %v2460 = vadd.f32 %v2447, %v2459
        %v2461 = vpop.f32.mrf.mxu0
        %2462 = vdwg.mxu0
        %2463 = vmatpush.bf16.msra.mxu0 %v2273
        %2464 = vmatpush.bf16.msra.mxu0 %v2269
        %2465 = vmatpush.bf16.msra.mxu0 %v2265
        %2466 = vmatpush.bf16.msra.mxu0 %v2261
        %2467 = vmatpush.bf16.msra.mxu0 %v2257
        %2468 = vmatpush.bf16.msra.mxu0 %v2253
        %2469 = vmatpush.bf16.msra.mxu0 %v2249
        %2470 = vmatpush.bf16.msra.mxu0 %v2245
        %2471 = vmatmul.bf16.gmra.mxu0 %v1656
        %v2472 = vpop.f32.mrf.mxu0
        %v2473 = vadd.f32 %v2460, %v2472
        %v2474 = vpop.f32.mrf.mxu0
        %2475 = vdwg.mxu0
        %2476 = vmatpush.bf16.msra.mxu0 %v2305
        %2477 = vmatpush.bf16.msra.mxu0 %v2301
        %2478 = vmatpush.bf16.msra.mxu0 %v2297
        %2479 = vmatpush.bf16.msra.mxu0 %v2293
        %2480 = vmatpush.bf16.msra.mxu0 %v2289
        %2481 = vmatpush.bf16.msra.mxu0 %v2285
        %2482 = vmatpush.bf16.msra.mxu0 %v2281
        %2483 = vmatpush.bf16.msra.mxu0 %v2277
        %2484 = vmatmul.bf16.gmra.mxu0 %v1657
        %v2485 = vpop.f32.mrf.mxu0
        %v2486 = vadd.f32 %v2473, %v2485
        %v2487 = vpop.f32.mrf.mxu0
        %2488 = vdwg.mxu0
        %2489 = vmatpush.bf16.msra.mxu0 %v2210
        %2490 = vmatpush.bf16.msra.mxu0 %v2206
        %2491 = vmatpush.bf16.msra.mxu0 %v2202
        %2492 = vmatpush.bf16.msra.mxu0 %v2198
        %2493 = vmatpush.bf16.msra.mxu0 %v2194
        %2494 = vmatpush.bf16.msra.mxu0 %v2190
        %2495 = vmatpush.bf16.msra.mxu0 %v2186
        %2496 = vmatpush.bf16.msra.mxu0 %v2182
        %2497 = vmatmul.bf16.gmra.mxu0 %v1654
        %v2498 = vpop.f32.mrf.mxu0
        %v2499 = vadd.f32 %v1790, %v2498
        %v2500 = vpop.f32.mrf.mxu0
        %2501 = vdwg.mxu0
        %2502 = vmatpush.bf16.msra.mxu0 %v2242
        %2503 = vmatpush.bf16.msra.mxu0 %v2238
        %2504 = vmatpush.bf16.msra.mxu0 %v2234
        %2505 = vmatpush.bf16.msra.mxu0 %v2230
        %2506 = vmatpush.bf16.msra.mxu0 %v2226
        %2507 = vmatpush.bf16.msra.mxu0 %v2222
        %2508 = vmatpush.bf16.msra.mxu0 %v2218
        %2509 = vmatpush.bf16.msra.mxu0 %v2214
        %2510 = vmatmul.bf16.gmra.mxu0 %v1655
        %v2511 = vpop.f32.mrf.mxu0
        %v2512 = vadd.f32 %v2499, %v2511
        %v2513 = vpop.f32.mrf.mxu0
        %2514 = vdwg.mxu0
        %2515 = vmatpush.bf16.msra.mxu0 %v2274
        %2516 = vmatpush.bf16.msra.mxu0 %v2270
        %2517 = vmatpush.bf16.msra.mxu0 %v2266
        %2518 = vmatpush.bf16.msra.mxu0 %v2262
        %2519 = vmatpush.bf16.msra.mxu0 %v2258
        %2520 = vmatpush.bf16.msra.mxu0 %v2254
        %2521 = vmatpush.bf16.msra.mxu0 %v2250
        %2522 = vmatpush.bf16.msra.mxu0 %v2246
        %2523 = vmatmul.bf16.gmra.mxu0 %v1656
        %v2524 = vpop.f32.mrf.mxu0
        %v2525 = vadd.f32 %v2512, %v2524
        %v2526 = vpop.f32.mrf.mxu0
        %2527 = vdwg.mxu0
        %2528 = vmatpush.bf16.msra.mxu0 %v2306
        %2529 = vmatpush.bf16.msra.mxu0 %v2302
        %2530 = vmatpush.bf16.msra.mxu0 %v2298
        %2531 = vmatpush.bf16.msra.mxu0 %v2294
        %2532 = vmatpush.bf16.msra.mxu0 %v2290
        %2533 = vmatpush.bf16.msra.mxu0 %v2286
        %2534 = vmatpush.bf16.msra.mxu0 %v2282
        %2535 = vmatpush.bf16.msra.mxu0 %v2278
        %2536 = vmatmul.bf16.gmra.mxu0 %v1657
        %v2537 = vpop.f32.mrf.mxu0
        %v2538 = vadd.f32 %v2525, %v2537
        %v2539 = vpop.f32.mrf.mxu0
        %2540 = vdwg.mxu0
        %2541 = vmatpush.bf16.msra.mxu0 %v2211
        %2542 = vmatpush.bf16.msra.mxu0 %v2207
        %2543 = vmatpush.bf16.msra.mxu0 %v2203
        %2544 = vmatpush.bf16.msra.mxu0 %v2199
        %2545 = vmatpush.bf16.msra.mxu0 %v2195
        %2546 = vmatpush.bf16.msra.mxu0 %v2191
        %2547 = vmatpush.bf16.msra.mxu0 %v2187
        %2548 = vmatpush.bf16.msra.mxu0 %v2183
        %2549 = vmatmul.bf16.gmra.mxu0 %v1654
        %v2550 = vpop.f32.mrf.mxu0
        %v2551 = vadd.f32 %v1791, %v2550
        %v2552 = vpop.f32.mrf.mxu0
        %2553 = vdwg.mxu0
        %2554 = vmatpush.bf16.msra.mxu0 %v2243
        %2555 = vmatpush.bf16.msra.mxu0 %v2239
        %2556 = vmatpush.bf16.msra.mxu0 %v2235
        %2557 = vmatpush.bf16.msra.mxu0 %v2231
        %2558 = vmatpush.bf16.msra.mxu0 %v2227
        %2559 = vmatpush.bf16.msra.mxu0 %v2223
        %2560 = vmatpush.bf16.msra.mxu0 %v2219
        %2561 = vmatpush.bf16.msra.mxu0 %v2215
        %2562 = vmatmul.bf16.gmra.mxu0 %v1655
        %v2563 = vpop.f32.mrf.mxu0
        %v2564 = vadd.f32 %v2551, %v2563
        %v2565 = vpop.f32.mrf.mxu0
        %2566 = vdwg.mxu0
        %2567 = vmatpush.bf16.msra.mxu0 %v2275
        %2568 = vmatpush.bf16.msra.mxu0 %v2271
        %2569 = vmatpush.bf16.msra.mxu0 %v2267
        %2570 = vmatpush.bf16.msra.mxu0 %v2263
        %2571 = vmatpush.bf16.msra.mxu0 %v2259
        %2572 = vmatpush.bf16.msra.mxu0 %v2255
        %2573 = vmatpush.bf16.msra.mxu0 %v2251
        %2574 = vmatpush.bf16.msra.mxu0 %v2247
        %2575 = vmatmul.bf16.gmra.mxu0 %v1656
        %v2576 = vpop.f32.mrf.mxu0
        %v2577 = vadd.f32 %v2564, %v2576
        %v2578 = vpop.f32.mrf.mxu0
        %2579 = vdwg.mxu0
        %2580 = vmatpush.bf16.msra.mxu0 %v2307
        %2581 = vmatpush.bf16.msra.mxu0 %v2303
        %2582 = vmatpush.bf16.msra.mxu0 %v2299
        %2583 = vmatpush.bf16.msra.mxu0 %v2295
        %2584 = vmatpush.bf16.msra.mxu0 %v2291
        %2585 = vmatpush.bf16.msra.mxu0 %v2287
        %2586 = vmatpush.bf16.msra.mxu0 %v2283
        %2587 = vmatpush.bf16.msra.mxu0 %v2279
        %2588 = vmatmul.bf16.gmra.mxu0 %v1657
        %v2589 = vpop.f32.mrf.mxu0
        %v2590 = vadd.f32 %v2577, %v2589
        %v2591 = vpop.f32.mrf.mxu0
        %2592 = vdwg.mxu0
        %2593 = vmatpush.bf16.msra.mxu0 %v2212
        %2594 = vmatpush.bf16.msra.mxu0 %v2208
        %2595 = vmatpush.bf16.msra.mxu0 %v2204
        %2596 = vmatpush.bf16.msra.mxu0 %v2200
        %2597 = vmatpush.bf16.msra.mxu0 %v2196
        %2598 = vmatpush.bf16.msra.mxu0 %v2192
        %2599 = vmatpush.bf16.msra.mxu0 %v2188
        %2600 = vmatpush.bf16.msra.mxu0 %v2184
        %2601 = vmatmul.bf16.gmra.mxu0 %v1654
        %v2602 = vpop.f32.mrf.mxu0
        %v2603 = vadd.f32 %v1792, %v2602
        %v2604 = vpop.f32.mrf.mxu0
        %2605 = vdwg.mxu0
        %2606 = vmatpush.bf16.msra.mxu0 %v2244
        %2607 = vmatpush.bf16.msra.mxu0 %v2240
        %2608 = vmatpush.bf16.msra.mxu0 %v2236
        %2609 = vmatpush.bf16.msra.mxu0 %v2232
        %2610 = vmatpush.bf16.msra.mxu0 %v2228
        %2611 = vmatpush.bf16.msra.mxu0 %v2224
        %2612 = vmatpush.bf16.msra.mxu0 %v2220
        %2613 = vmatpush.bf16.msra.mxu0 %v2216
        %2614 = vmatmul.bf16.gmra.mxu0 %v1655
        %v2615 = vpop.f32.mrf.mxu0
        %v2616 = vadd.f32 %v2603, %v2615
        %v2617 = vpop.f32.mrf.mxu0
        %2618 = vdwg.mxu0
        %2619 = vmatpush.bf16.msra.mxu0 %v2276
        %2620 = vmatpush.bf16.msra.mxu0 %v2272
        %2621 = vmatpush.bf16.msra.mxu0 %v2268
        %2622 = vmatpush.bf16.msra.mxu0 %v2264
        %2623 = vmatpush.bf16.msra.mxu0 %v2260
        %2624 = vmatpush.bf16.msra.mxu0 %v2256
        %2625 = vmatpush.bf16.msra.mxu0 %v2252
        %2626 = vmatpush.bf16.msra.mxu0 %v2248
        %2627 = vmatmul.bf16.gmra.mxu0 %v1656
        %v2628 = vpop.f32.mrf.mxu0
        %v2629 = vadd.f32 %v2616, %v2628
        %v2630 = vpop.f32.mrf.mxu0
        %2631 = vdwg.mxu0
        %2632 = vmatpush.bf16.msra.mxu0 %v2308
        %2633 = vmatpush.bf16.msra.mxu0 %v2304
        %2634 = vmatpush.bf16.msra.mxu0 %v2300
        %2635 = vmatpush.bf16.msra.mxu0 %v2296
        %2636 = vmatpush.bf16.msra.mxu0 %v2292
        %2637 = vmatpush.bf16.msra.mxu0 %v2288
        %2638 = vmatpush.bf16.msra.mxu0 %v2284
        %2639 = vmatpush.bf16.msra.mxu0 %v2280
        %2640 = vmatmul.bf16.gmra.mxu0 %v1657
        %v2641 = vpop.f32.mrf.mxu0
        %v2642 = vadd.f32 %v2629, %v2641
        %v2643 = vpop.f32.mrf.mxu0
        %2644 = vdwg.mxu0
        %v2645 = vmax.f32 %v2486, 0.0
        %v2646 = vmax.f32 %v2538, 0.0
        %v2647 = vmax.f32 %v2590, 0.0
        %v2648 = vmax.f32 %v2642, 0.0
        %v2649 = vpack.c.bf16 %v2645, %v2645
        %v2650 = vpack.c.bf16 %v2646, %v2646
        %v2651 = vpack.c.bf16 %v2647, %v2647
        %v2652 = vpack.c.bf16 %v2648, %v2648
        %v2653 = vld [vmem:[#allocation11] sm:$0xf]
        %v2654 = vld [vmem:[#allocation11 + $0x4] sm:$0xf]
        %v2655 = vld [vmem:[#allocation11 + $0x8] sm:$0xf]
        %v2656 = vld [vmem:[#allocation11 + $0xc] sm:$0xf]
        %v2657 = vld [vmem:[#allocation11 + $0x10] sm:$0xf]
        %v2658 = vld [vmem:[#allocation11 + $0x14] sm:$0xf]
        %v2659 = vld [vmem:[#allocation11 + $0x18] sm:$0xf]
        %v2660 = vld [vmem:[#allocation11 + $0x1c] sm:$0xf]
        %v2661 = vld [vmem:[#allocation11 + $0x20] sm:$0xf]
        %v2662 = vld [vmem:[#allocation11 + $0x24] sm:$0xf]
        %v2663 = vld [vmem:[#allocation11 + $0x28] sm:$0xf]
        %v2664 = vld [vmem:[#allocation11 + $0x2c] sm:$0xf]
        %v2665 = vld [vmem:[#allocation11 + $0x30] sm:$0xf]
        %v2666 = vld [vmem:[#allocation11 + $0x34] sm:$0xf]
        %v2667 = vld [vmem:[#allocation11 + $0x38] sm:$0xf]
        %v2668 = vld [vmem:[#allocation11 + $0x3c] sm:$0xf]
        %v2669 = vld [vmem:[#allocation11 + $0x40] sm:$0xf]
        %v2670 = vld [vmem:[#allocation11 + $0x44] sm:$0xf]
        %v2671 = vld [vmem:[#allocation11 + $0x48] sm:$0xf]
        %v2672 = vld [vmem:[#allocation11 + $0x4c] sm:$0xf]
        %v2673 = vld [vmem:[#allocation11 + $0x50] sm:$0xf]
        %v2674 = vld [vmem:[#allocation11 + $0x54] sm:$0xf]
        %v2675 = vld [vmem:[#allocation11 + $0x58] sm:$0xf]
        %v2676 = vld [vmem:[#allocation11 + $0x5c] sm:$0xf]
        %v2677 = vld [vmem:[#allocation11 + $0x60] sm:$0xf]
        %v2678 = vld [vmem:[#allocation11 + $0x64] sm:$0xf]
        %v2679 = vld [vmem:[#allocation11 + $0x68] sm:$0xf]
        %v2680 = vld [vmem:[#allocation11 + $0x6c] sm:$0xf]
        %v2681 = vld [vmem:[#allocation11 + $0x70] sm:$0xf]
        %v2682 = vld [vmem:[#allocation11 + $0x74] sm:$0xf]
        %v2683 = vld [vmem:[#allocation11 + $0x78] sm:$0xf]
        %v2684 = vld [vmem:[#allocation11 + $0x7c] sm:$0xf]
        %v2685 = vld [vmem:[#allocation11 + $0x80] sm:$0xf]
        %v2686 = vld [vmem:[#allocation11 + $0x84] sm:$0xf]
        %v2687 = vld [vmem:[#allocation11 + $0x88] sm:$0xf]
        %v2688 = vld [vmem:[#allocation11 + $0x8c] sm:$0xf]
        %v2689 = vld [vmem:[#allocation11 + $0x90] sm:$0xf]
        %v2690 = vld [vmem:[#allocation11 + $0x94] sm:$0xf]
        %v2691 = vld [vmem:[#allocation11 + $0x98] sm:$0xf]
        %v2692 = vld [vmem:[#allocation11 + $0x9c] sm:$0xf]
        %v2693 = vld [vmem:[#allocation11 + $0xa0] sm:$0xf]
        %v2694 = vld [vmem:[#allocation11 + $0xa4] sm:$0xf]
        %v2695 = vld [vmem:[#allocation11 + $0xa8] sm:$0xf]
        %v2696 = vld [vmem:[#allocation11 + $0xac] sm:$0xf]
        %v2697 = vld [vmem:[#allocation11 + $0xb0] sm:$0xf]
        %v2698 = vld [vmem:[#allocation11 + $0xb4] sm:$0xf]
        %v2699 = vld [vmem:[#allocation11 + $0xb8] sm:$0xf]
        %v2700 = vld [vmem:[#allocation11 + $0xbc] sm:$0xf]
        %v2701 = vld [vmem:[#allocation11 + $0xc0] sm:$0xf]
        %v2702 = vld [vmem:[#allocation11 + $0xc4] sm:$0xf]
        %v2703 = vld [vmem:[#allocation11 + $0xc8] sm:$0xf]
        %v2704 = vld [vmem:[#allocation11 + $0xcc] sm:$0xf]
        %v2705 = vld [vmem:[#allocation11 + $0xd0] sm:$0xf]
        %v2706 = vld [vmem:[#allocation11 + $0xd4] sm:$0xf]
        %v2707 = vld [vmem:[#allocation11 + $0xd8] sm:$0xf]
        %v2708 = vld [vmem:[#allocation11 + $0xdc] sm:$0xf]
        %v2709 = vld [vmem:[#allocation11 + $0xe0] sm:$0xf]
        %v2710 = vld [vmem:[#allocation11 + $0xe4] sm:$0xf]
        %v2711 = vld [vmem:[#allocation11 + $0xe8] sm:$0xf]
        %v2712 = vld [vmem:[#allocation11 + $0xec] sm:$0xf]
        %v2713 = vld [vmem:[#allocation11 + $0xf0] sm:$0xf]
        %v2714 = vld [vmem:[#allocation11 + $0xf4] sm:$0xf]
        %v2715 = vld [vmem:[#allocation11 + $0xf8] sm:$0xf]
        %v2716 = vld [vmem:[#allocation11 + $0xfc] sm:$0xf]
        %v2717 = vld [vmem:[#allocation13 + $0x3] ss:$0 sm:$0xff]
        %v2782 = vunpack.c.l.b16 %v2653
        %v2783 = vunpack.c.l.b16 %v2654
        %v2784 = vunpack.c.l.b16 %v2655
        %v2785 = vunpack.c.l.b16 %v2656
        %v2786 = vunpack.c.l.b16 %v2657
        %v2787 = vunpack.c.l.b16 %v2658
        %v2788 = vunpack.c.l.b16 %v2659
        %v2789 = vunpack.c.l.b16 %v2660
        %v2790 = vunpack.c.l.b16 %v2661
        %v2791 = vunpack.c.l.b16 %v2662
        %v2792 = vunpack.c.l.b16 %v2663
        %v2793 = vunpack.c.l.b16 %v2664
        %v2794 = vunpack.c.l.b16 %v2665
        %v2795 = vunpack.c.l.b16 %v2666
        %v2796 = vunpack.c.l.b16 %v2667
        %v2797 = vunpack.c.l.b16 %v2668
        %v2798 = vunpack.c.l.b16 %v2669
        %v2799 = vunpack.c.l.b16 %v2670
        %v2800 = vunpack.c.l.b16 %v2671
        %v2801 = vunpack.c.l.b16 %v2672
        %v2802 = vunpack.c.l.b16 %v2673
        %v2803 = vunpack.c.l.b16 %v2674
        %v2804 = vunpack.c.l.b16 %v2675
        %v2805 = vunpack.c.l.b16 %v2676
        %v2806 = vunpack.c.l.b16 %v2677
        %v2807 = vunpack.c.l.b16 %v2678
        %v2808 = vunpack.c.l.b16 %v2679
        %v2809 = vunpack.c.l.b16 %v2680
        %v2810 = vunpack.c.l.b16 %v2681
        %v2811 = vunpack.c.l.b16 %v2682
        %v2812 = vunpack.c.l.b16 %v2683
        %v2813 = vunpack.c.l.b16 %v2684
        %v2814 = vunpack.c.l.b16 %v2685
        %v2815 = vunpack.c.l.b16 %v2686
        %v2816 = vunpack.c.l.b16 %v2687
        %v2817 = vunpack.c.l.b16 %v2688
        %v2818 = vunpack.c.l.b16 %v2689
        %v2819 = vunpack.c.l.b16 %v2690
        %v2820 = vunpack.c.l.b16 %v2691
        %v2821 = vunpack.c.l.b16 %v2692
        %v2822 = vunpack.c.l.b16 %v2693
        %v2823 = vunpack.c.l.b16 %v2694
        %v2824 = vunpack.c.l.b16 %v2695
        %v2825 = vunpack.c.l.b16 %v2696
        %v2826 = vunpack.c.l.b16 %v2697
        %v2827 = vunpack.c.l.b16 %v2698
        %v2828 = vunpack.c.l.b16 %v2699
        %v2829 = vunpack.c.l.b16 %v2700
        %v2830 = vunpack.c.l.b16 %v2701
        %v2831 = vunpack.c.l.b16 %v2702
        %v2832 = vunpack.c.l.b16 %v2703
        %v2833 = vunpack.c.l.b16 %v2704
        %v2834 = vunpack.c.l.b16 %v2705
        %v2835 = vunpack.c.l.b16 %v2706
        %v2836 = vunpack.c.l.b16 %v2707
        %v2837 = vunpack.c.l.b16 %v2708
        %v2838 = vunpack.c.l.b16 %v2709
        %v2839 = vunpack.c.l.b16 %v2710
        %v2840 = vunpack.c.l.b16 %v2711
        %v2841 = vunpack.c.l.b16 %v2712
        %v2842 = vunpack.c.l.b16 %v2713
        %v2843 = vunpack.c.l.b16 %v2714
        %v2844 = vunpack.c.l.b16 %v2715
        %v2845 = vunpack.c.l.b16 %v2716
        %v2846 = vpack.c.b16 %v2783, %v2782
        %v2847 = vpack.c.b16 %v2785, %v2784
        %v2848 = vpack.c.b16 %v2787, %v2786
        %v2849 = vpack.c.b16 %v2789, %v2788
        %v2850 = vpack.c.b16 %v2791, %v2790
        %v2851 = vpack.c.b16 %v2793, %v2792
        %v2852 = vpack.c.b16 %v2795, %v2794
        %v2853 = vpack.c.b16 %v2797, %v2796
        %v2854 = vpack.c.b16 %v2799, %v2798
        %v2855 = vpack.c.b16 %v2801, %v2800
        %v2856 = vpack.c.b16 %v2803, %v2802
        %v2857 = vpack.c.b16 %v2805, %v2804
        %v2858 = vpack.c.b16 %v2807, %v2806
        %v2859 = vpack.c.b16 %v2809, %v2808
        %v2860 = vpack.c.b16 %v2811, %v2810
        %v2861 = vpack.c.b16 %v2813, %v2812
        %v2862 = vpack.c.b16 %v2815, %v2814
        %v2863 = vpack.c.b16 %v2817, %v2816
        %v2864 = vpack.c.b16 %v2819, %v2818
        %v2865 = vpack.c.b16 %v2821, %v2820
        %v2866 = vpack.c.b16 %v2823, %v2822
        %v2867 = vpack.c.b16 %v2825, %v2824
        %v2868 = vpack.c.b16 %v2827, %v2826
        %v2869 = vpack.c.b16 %v2829, %v2828
        %v2870 = vpack.c.b16 %v2831, %v2830
        %v2871 = vpack.c.b16 %v2833, %v2832
        %v2872 = vpack.c.b16 %v2835, %v2834
        %v2873 = vpack.c.b16 %v2837, %v2836
        %v2874 = vpack.c.b16 %v2839, %v2838
        %v2875 = vpack.c.b16 %v2841, %v2840
        %v2876 = vpack.c.b16 %v2843, %v2842
        %v2877 = vpack.c.b16 %v2845, %v2844
        %2910 = vmatpush.bf16.msra.mxu0 %v2853
        %2911 = vmatpush.bf16.msra.mxu0 %v2852
        %2912 = vmatpush.bf16.msra.mxu0 %v2851
        %2913 = vmatpush.bf16.msra.mxu0 %v2850
        %2914 = vmatpush.bf16.msra.mxu0 %v2849
        %2915 = vmatpush.bf16.msra.mxu0 %v2848
        %2916 = vmatpush.bf16.msra.mxu0 %v2847
        %2917 = vmatpush.bf16.msra.mxu0 %v2846
        %2918 = vmatmul.bf16.gmra.mxu0 %v2649
        %v2919 = vpop.f32.mrf.mxu0
        %v2920 = vadd.f32 %v2717, %v2919
        %v2921 = vpop.f32.mrf.mxu0
        %2922 = vdwg.mxu0
        %2923 = vmatpush.bf16.msra.mxu0 %v2861
        %2924 = vmatpush.bf16.msra.mxu0 %v2860
        %2925 = vmatpush.bf16.msra.mxu0 %v2859
        %2926 = vmatpush.bf16.msra.mxu0 %v2858
        %2927 = vmatpush.bf16.msra.mxu0 %v2857
        %2928 = vmatpush.bf16.msra.mxu0 %v2856
        %2929 = vmatpush.bf16.msra.mxu0 %v2855
        %2930 = vmatpush.bf16.msra.mxu0 %v2854
        %2931 = vmatmul.bf16.gmra.mxu0 %v2650
        %v2932 = vpop.f32.mrf.mxu0
        %v2933 = vadd.f32 %v2920, %v2932
        %v2934 = vpop.f32.mrf.mxu0
        %2935 = vdwg.mxu0
        %2936 = vmatpush.bf16.msra.mxu0 %v2869
        %2937 = vmatpush.bf16.msra.mxu0 %v2868
        %2938 = vmatpush.bf16.msra.mxu0 %v2867
        %2939 = vmatpush.bf16.msra.mxu0 %v2866
        %2940 = vmatpush.bf16.msra.mxu0 %v2865
        %2941 = vmatpush.bf16.msra.mxu0 %v2864
        %2942 = vmatpush.bf16.msra.mxu0 %v2863
        %2943 = vmatpush.bf16.msra.mxu0 %v2862
        %2944 = vmatmul.bf16.gmra.mxu0 %v2651
        %v2945 = vpop.f32.mrf.mxu0
        %v2946 = vadd.f32 %v2933, %v2945
        %v2947 = vpop.f32.mrf.mxu0
        %2948 = vdwg.mxu0
        %2949 = vmatpush.bf16.msra.mxu0 %v2877
        %2950 = vmatpush.bf16.msra.mxu0 %v2876
        %2951 = vmatpush.bf16.msra.mxu0 %v2875
        %2952 = vmatpush.bf16.msra.mxu0 %v2874
        %2953 = vmatpush.bf16.msra.mxu0 %v2873
        %2954 = vmatpush.bf16.msra.mxu0 %v2872
        %2955 = vmatpush.bf16.msra.mxu0 %v2871
        %2956 = vmatpush.bf16.msra.mxu0 %v2870
        %2957 = vmatmul.bf16.gmra.mxu0 %v2652
        %v2958 = vpop.f32.mrf.mxu0
        %v2959 = vadd.f32 %v2946, %v2958
        %v2960 = vpop.f32.mrf.mxu0
        %2961 = vdwg.mxu0
        %2962 = vst [vmem:[%s360] sm:$0xff] %v2959
        %v2963 = vld [vmem:[%s313] sm:$0xff]
        %v2964 = vadd.f32 %v2959, %v2963
        %v2965 = vlaneseq
        %v2966 = vand.u32 %v2965, 127
        %2967 = vrot.lane.b32.xlu0 %v2964, 127
        %v2968 = vpop.permute.xlu0 %2967
        %2969 = vrot.lane.b32.xlu0 %v2964, 1
        %v2970 = vpop.permute.xlu0 %2969
        %v2971 = vand.u32 %v2966, 1
        %vm2972 = vcmp.eq.s32.totalorder %v2971, 0
        %v2973 = vsel %vm2972, %v2968, %v2970
        %v2974 = vsub.f32 %v2973, %v2964
        %v2975 = vmin.f32 %v2974, 60.0
        %v2976 = vmul.f32 %v2975, 1.442695
        %v2977 = vpow.pop %v2976
        %v2978 = vadd.f32 %v2977, 1.0
        %v2979 = vrcp.pop %v2978
        // Predicated region
        $region73: #{tpu_custom_call.1} parent=39 // pred_check
          %p2980 = pneg %p368
        $region74: #{tpu_custom_call.1} parent=39 // pred_check_branch
          %2982 = sbr.rel (%p2980) target = $region76
        $region75: #{tpu_custom_call.1} parent=39 // pred_region
          %s2983 = smul.u32 4, 144
          %s2984 = smul.u32 %s2983, 4
          %s2985 = sshll.u32 %s2984, 4
          %2986 = dma.done [#allocation4], %s2985
          %s2987 = scalar_lea.sflag [#allocation4], 1
          %s2988 = smul.u32 4, 64
          %s2989 = smul.u32 %s2988, 1
          %s2990 = sshll.u32 %s2989, 4
          %2991 = dma.done %s2987, %s2990
        $region76: #{tpu_custom_call.1} parent=39 // pred_fallthru
          _
        %v2992 = vpack.c.bf16 %v2979, %v2979
        %v2993 = vld [vmem:[#allocation2] sm:$0xff]
        %v2994 = vld [vmem:[#allocation2 + $0x8] sm:$0xff]
        %v2995 = vld [vmem:[#allocation2 + $0x10] sm:$0xff]
        %v2996 = vld [vmem:[#allocation2 + $0x18] sm:$0xff]
        %v2997 = vld [vmem:[#allocation2 + $0x20] sm:$0xff]
        %v2998 = vld [vmem:[#allocation2 + $0x28] sm:$0xff]
        %v2999 = vld [vmem:[#allocation2 + $0x30] sm:$0xff]
        %v3000 = vld [vmem:[#allocation2 + $0x38] sm:$0xff]
        %v3001 = vld [vmem:[#allocation2 + $0x40] sm:$0xff]
        %v3002 = vld [vmem:[#allocation2 + $0x48] sm:$0xff]
        %v3003 = vld [vmem:[#allocation2 + $0x50] sm:$0xff]
        %v3004 = vld [vmem:[#allocation2 + $0x58] sm:$0xff]
        %v3005 = vld [vmem:[#allocation2 + $0x60] sm:$0xff]
        %v3006 = vld [vmem:[#allocation2 + $0x68] sm:$0xff]
        %v3007 = vld [vmem:[#allocation2 + $0x70] sm:$0xff]
        %v3008 = vld [vmem:[#allocation2 + $0x78] sm:$0xff]
        %v3009 = vld [vmem:[#allocation2 + $0x80] sm:$0xff]
        %v3010 = vld [vmem:[#allocation2 + $0x88] sm:$0xff]
        %v3011 = vld [vmem:[#allocation2 + $0x90] sm:$0xff]
        %v3012 = vld [vmem:[#allocation2 + $0x98] sm:$0xff]
        %v3013 = vld [vmem:[#allocation2 + $0xa0] sm:$0xff]
        %v3014 = vld [vmem:[#allocation2 + $0xa8] sm:$0xff]
        %v3015 = vld [vmem:[#allocation2 + $0xb0] sm:$0xff]
        %v3016 = vld [vmem:[#allocation2 + $0xb8] sm:$0xff]
        %v3017 = vld [vmem:[#allocation2 + $0xc0] sm:$0xff]
        %v3018 = vld [vmem:[#allocation2 + $0xc8] sm:$0xff]
        %v3019 = vld [vmem:[#allocation2 + $0xd0] sm:$0xff]
        %v3020 = vld [vmem:[#allocation2 + $0xd8] sm:$0xff]
        %v3021 = vld [vmem:[#allocation2 + $0xe0] sm:$0xff]
        %v3022 = vld [vmem:[#allocation2 + $0xe8] sm:$0xff]
        %v3023 = vld [vmem:[#allocation2 + $0xf0] sm:$0xff]
        %v3024 = vld [vmem:[#allocation2 + $0xf8] sm:$0xff]
        %s3025 = scalar_lea.vmem [#allocation13], 4
        %v3026 = vld [vmem:[%s3025] ss:$8 sm:$0xf]
        %v3028 = vperm.slane %v3026, 0
        %v3029 = vperm.slane %v3026, 1
        %v3030 = vperm.slane %v3026, 2
        %v3031 = vperm.slane %v3026, 3
        %v3068 = vunpack.c.l.b16 %v2993
        %v3069 = vunpack.c.h.b16 %v2993
        %v3070 = vunpack.c.l.b16 %v2994
        %v3071 = vunpack.c.h.b16 %v2994
        %v3072 = vunpack.c.l.b16 %v2995
        %v3073 = vunpack.c.h.b16 %v2995
        %v3074 = vunpack.c.l.b16 %v2996
        %v3075 = vunpack.c.h.b16 %v2996
        %v3076 = vunpack.c.l.b16 %v2997
        %v3077 = vunpack.c.h.b16 %v2997
        %v3078 = vunpack.c.l.b16 %v2998
        %v3079 = vunpack.c.h.b16 %v2998
        %v3080 = vunpack.c.l.b16 %v2999
        %v3081 = vunpack.c.h.b16 %v2999
        %v3082 = vunpack.c.l.b16 %v3000
        %v3083 = vunpack.c.h.b16 %v3000
        %v3084 = vunpack.c.l.b16 %v3001
        %v3085 = vunpack.c.h.b16 %v3001
        %v3086 = vunpack.c.l.b16 %v3002
        %v3087 = vunpack.c.h.b16 %v3002
        %v3088 = vunpack.c.l.b16 %v3003
        %v3089 = vunpack.c.h.b16 %v3003
        %v3090 = vunpack.c.l.b16 %v3004
        %v3091 = vunpack.c.h.b16 %v3004
        %v3092 = vunpack.c.l.b16 %v3005
        %v3093 = vunpack.c.h.b16 %v3005
        %v3094 = vunpack.c.l.b16 %v3006
        %v3095 = vunpack.c.h.b16 %v3006
        %v3096 = vunpack.c.l.b16 %v3007
        %v3097 = vunpack.c.h.b16 %v3007
        %v3098 = vunpack.c.l.b16 %v3008
        %v3099 = vunpack.c.h.b16 %v3008
        %v3100 = vunpack.c.l.b16 %v3009
        %v3101 = vunpack.c.h.b16 %v3009
        %v3102 = vunpack.c.l.b16 %v3010
        %v3103 = vunpack.c.h.b16 %v3010
        %v3104 = vunpack.c.l.b16 %v3011
        %v3105 = vunpack.c.h.b16 %v3011
        %v3106 = vunpack.c.l.b16 %v3012
        %v3107 = vunpack.c.h.b16 %v3012
        %v3108 = vunpack.c.l.b16 %v3013
        %v3109 = vunpack.c.h.b16 %v3013
        %v3110 = vunpack.c.l.b16 %v3014
        %v3111 = vunpack.c.h.b16 %v3014
        %v3112 = vunpack.c.l.b16 %v3015
        %v3113 = vunpack.c.h.b16 %v3015
        %v3114 = vunpack.c.l.b16 %v3016
        %v3115 = vunpack.c.h.b16 %v3016
        %v3116 = vunpack.c.l.b16 %v3017
        %v3117 = vunpack.c.h.b16 %v3017
        %v3118 = vunpack.c.l.b16 %v3018
        %v3119 = vunpack.c.h.b16 %v3018
        %v3120 = vunpack.c.l.b16 %v3019
        %v3121 = vunpack.c.h.b16 %v3019
        %v3122 = vunpack.c.l.b16 %v3020
        %v3123 = vunpack.c.h.b16 %v3020
        %v3124 = vunpack.c.l.b16 %v3021
        %v3125 = vunpack.c.h.b16 %v3021
        %v3126 = vunpack.c.l.b16 %v3022
        %v3127 = vunpack.c.h.b16 %v3022
        %v3128 = vunpack.c.l.b16 %v3023
        %v3129 = vunpack.c.h.b16 %v3023
        %v3130 = vunpack.c.l.b16 %v3024
        %v3131 = vunpack.c.h.b16 %v3024
        %v3132 = vpack.c.b16 %v3072, %v3068
        %v3133 = vpack.c.b16 %v3073, %v3069
        %v3134 = vpack.c.b16 %v3074, %v3070
        %v3135 = vpack.c.b16 %v3075, %v3071
        %v3136 = vpack.c.b16 %v3080, %v3076
        %v3137 = vpack.c.b16 %v3081, %v3077
        %v3138 = vpack.c.b16 %v3082, %v3078
        %v3139 = vpack.c.b16 %v3083, %v3079
        %v3140 = vpack.c.b16 %v3088, %v3084
        %v3141 = vpack.c.b16 %v3089, %v3085
        %v3142 = vpack.c.b16 %v3090, %v3086
        %v3143 = vpack.c.b16 %v3091, %v3087
        %v3144 = vpack.c.b16 %v3096, %v3092
        %v3145 = vpack.c.b16 %v3097, %v3093
        %v3146 = vpack.c.b16 %v3098, %v3094
        %v3147 = vpack.c.b16 %v3099, %v3095
        %v3148 = vpack.c.b16 %v3104, %v3100
        %v3149 = vpack.c.b16 %v3105, %v3101
        %v3150 = vpack.c.b16 %v3106, %v3102
        %v3151 = vpack.c.b16 %v3107, %v3103
        %v3152 = vpack.c.b16 %v3112, %v3108
        %v3153 = vpack.c.b16 %v3113, %v3109
        %v3154 = vpack.c.b16 %v3114, %v3110
        %v3155 = vpack.c.b16 %v3115, %v3111
        %v3156 = vpack.c.b16 %v3120, %v3116
        %v3157 = vpack.c.b16 %v3121, %v3117
        %v3158 = vpack.c.b16 %v3122, %v3118
        %v3159 = vpack.c.b16 %v3123, %v3119
        %v3160 = vpack.c.b16 %v3128, %v3124
        %v3161 = vpack.c.b16 %v3129, %v3125
        %v3162 = vpack.c.b16 %v3130, %v3126
        %v3163 = vpack.c.b16 %v3131, %v3127
        %3196 = vmatpush.bf16.msra.mxu0 %v3160
        %3197 = vmatpush.bf16.msra.mxu0 %v3156
        %3198 = vmatpush.bf16.msra.mxu0 %v3152
        %3199 = vmatpush.bf16.msra.mxu0 %v3148
        %3200 = vmatpush.bf16.msra.mxu0 %v3144
        %3201 = vmatpush.bf16.msra.mxu0 %v3140
        %3202 = vmatpush.bf16.msra.mxu0 %v3136
        %3203 = vmatpush.bf16.msra.mxu0 %v3132
        %3204 = vmatmul.bf16.gmra.mxu0 %v2992
        %v3205 = vpop.f32.mrf.mxu0
        %v3206 = vadd.f32 %v3028, %v3205
        %v3207 = vpop.f32.mrf.mxu0
        %3208 = vdwg.mxu0
        %3209 = vmatpush.bf16.msra.mxu0 %v3161
        %3210 = vmatpush.bf16.msra.mxu0 %v3157
        %3211 = vmatpush.bf16.msra.mxu0 %v3153
        %3212 = vmatpush.bf16.msra.mxu0 %v3149
        %3213 = vmatpush.bf16.msra.mxu0 %v3145
        %3214 = vmatpush.bf16.msra.mxu0 %v3141
        %3215 = vmatpush.bf16.msra.mxu0 %v3137
        %3216 = vmatpush.bf16.msra.mxu0 %v3133
        %3217 = vmatmul.bf16.gmra.mxu0 %v2992
        %v3218 = vpop.f32.mrf.mxu0
        %v3219 = vadd.f32 %v3029, %v3218
        %v3220 = vpop.f32.mrf.mxu0
        %3221 = vdwg.mxu0
        %3222 = vmatpush.bf16.msra.mxu0 %v3162
        %3223 = vmatpush.bf16.msra.mxu0 %v3158
        %3224 = vmatpush.bf16.msra.mxu0 %v3154
        %3225 = vmatpush.bf16.msra.mxu0 %v3150
        %3226 = vmatpush.bf16.msra.mxu0 %v3146
        %3227 = vmatpush.bf16.msra.mxu0 %v3142
        %3228 = vmatpush.bf16.msra.mxu0 %v3138
        %3229 = vmatpush.bf16.msra.mxu0 %v3134
        %3230 = vmatmul.bf16.gmra.mxu0 %v2992
        %v3231 = vpop.f32.mrf.mxu0
        %v3232 = vadd.f32 %v3030, %v3231
        %v3233 = vpop.f32.mrf.mxu0
        %3234 = vdwg.mxu0
        %3235 = vmatpush.bf16.msra.mxu0 %v3163
        %3236 = vmatpush.bf16.msra.mxu0 %v3159
        %3237 = vmatpush.bf16.msra.mxu0 %v3155
        %3238 = vmatpush.bf16.msra.mxu0 %v3151
        %3239 = vmatpush.bf16.msra.mxu0 %v3147
        %3240 = vmatpush.bf16.msra.mxu0 %v3143
        %3241 = vmatpush.bf16.msra.mxu0 %v3139
        %3242 = vmatpush.bf16.msra.mxu0 %v3135
        %3243 = vmatmul.bf16.gmra.mxu0 %v2992
        %v3244 = vpop.f32.mrf.mxu0
        %v3245 = vadd.f32 %v3031, %v3244
        %v3246 = vpop.f32.mrf.mxu0
        %3247 = vdwg.mxu0
        %v3248 = vmax.f32 %v3206, 0.0
        %v3249 = vmax.f32 %v3219, 0.0
        %v3250 = vmax.f32 %v3232, 0.0
        %v3251 = vmax.f32 %v3245, 0.0
        %v3252 = vpack.c.bf16 %v3248, %v3248
        %v3253 = vpack.c.bf16 %v3249, %v3249
        %v3254 = vpack.c.bf16 %v3250, %v3250
        %v3255 = vpack.c.bf16 %v3251, %v3251
        %v3256 = vld [vmem:[#allocation2 + $0x100] sm:$0xff]
        %v3257 = vld [vmem:[#allocation2 + $0x108] sm:$0xff]
        %v3258 = vld [vmem:[#allocation2 + $0x110] sm:$0xff]
        %v3259 = vld [vmem:[#allocation2 + $0x118] sm:$0xff]
        %v3260 = vld [vmem:[#allocation2 + $0x120] sm:$0xff]
        %v3261 = vld [vmem:[#allocation2 + $0x128] sm:$0xff]
        %v3262 = vld [vmem:[#allocation2 + $0x130] sm:$0xff]
        %v3263 = vld [vmem:[#allocation2 + $0x138] sm:$0xff]
        %v3264 = vld [vmem:[#allocation2 + $0x140] sm:$0xff]
        %v3265 = vld [vmem:[#allocation2 + $0x148] sm:$0xff]
        %v3266 = vld [vmem:[#allocation2 + $0x150] sm:$0xff]
        %v3267 = vld [vmem:[#allocation2 + $0x158] sm:$0xff]
        %v3268 = vld [vmem:[#allocation2 + $0x160] sm:$0xff]
        %v3269 = vld [vmem:[#allocation2 + $0x168] sm:$0xff]
        %v3270 = vld [vmem:[#allocation2 + $0x170] sm:$0xff]
        %v3271 = vld [vmem:[#allocation2 + $0x178] sm:$0xff]
        %v3272 = vld [vmem:[#allocation2 + $0x180] sm:$0xff]
        %v3273 = vld [vmem:[#allocation2 + $0x188] sm:$0xff]
        %v3274 = vld [vmem:[#allocation2 + $0x190] sm:$0xff]
        %v3275 = vld [vmem:[#allocation2 + $0x198] sm:$0xff]
        %v3276 = vld [vmem:[#allocation2 + $0x1a0] sm:$0xff]
        %v3277 = vld [vmem:[#allocation2 + $0x1a8] sm:$0xff]
        %v3278 = vld [vmem:[#allocation2 + $0x1b0] sm:$0xff]
        %v3279 = vld [vmem:[#allocation2 + $0x1b8] sm:$0xff]
        %v3280 = vld [vmem:[#allocation2 + $0x1c0] sm:$0xff]
        %v3281 = vld [vmem:[#allocation2 + $0x1c8] sm:$0xff]
        %v3282 = vld [vmem:[#allocation2 + $0x1d0] sm:$0xff]
        %v3283 = vld [vmem:[#allocation2 + $0x1d8] sm:$0xff]
        %v3284 = vld [vmem:[#allocation2 + $0x1e0] sm:$0xff]
        %v3285 = vld [vmem:[#allocation2 + $0x1e8] sm:$0xff]
        %v3286 = vld [vmem:[#allocation2 + $0x1f0] sm:$0xff]
        %v3287 = vld [vmem:[#allocation2 + $0x1f8] sm:$0xff]
        %v3288 = vld [vmem:[#allocation2 + $0x200] sm:$0xff]
        %v3289 = vld [vmem:[#allocation2 + $0x208] sm:$0xff]
        %v3290 = vld [vmem:[#allocation2 + $0x210] sm:$0xff]
        %v3291 = vld [vmem:[#allocation2 + $0x218] sm:$0xff]
        %v3292 = vld [vmem:[#allocation2 + $0x220] sm:$0xff]
        %v3293 = vld [vmem:[#allocation2 + $0x228] sm:$0xff]
        %v3294 = vld [vmem:[#allocation2 + $0x230] sm:$0xff]
        %v3295 = vld [vmem:[#allocation2 + $0x238] sm:$0xff]
        %v3296 = vld [vmem:[#allocation2 + $0x240] sm:$0xff]
        %v3297 = vld [vmem:[#allocation2 + $0x248] sm:$0xff]
        %v3298 = vld [vmem:[#allocation2 + $0x250] sm:$0xff]
        %v3299 = vld [vmem:[#allocation2 + $0x258] sm:$0xff]
        %v3300 = vld [vmem:[#allocation2 + $0x260] sm:$0xff]
        %v3301 = vld [vmem:[#allocation2 + $0x268] sm:$0xff]
        %v3302 = vld [vmem:[#allocation2 + $0x270] sm:$0xff]
        %v3303 = vld [vmem:[#allocation2 + $0x278] sm:$0xff]
        %v3304 = vld [vmem:[#allocation2 + $0x280] sm:$0xff]
        %v3305 = vld [vmem:[#allocation2 + $0x288] sm:$0xff]
        %v3306 = vld [vmem:[#allocation2 + $0x290] sm:$0xff]
        %v3307 = vld [vmem:[#allocation2 + $0x298] sm:$0xff]
        %v3308 = vld [vmem:[#allocation2 + $0x2a0] sm:$0xff]
        %v3309 = vld [vmem:[#allocation2 + $0x2a8] sm:$0xff]
        %v3310 = vld [vmem:[#allocation2 + $0x2b0] sm:$0xff]
        %v3311 = vld [vmem:[#allocation2 + $0x2b8] sm:$0xff]
        %v3312 = vld [vmem:[#allocation2 + $0x2c0] sm:$0xff]
        %v3313 = vld [vmem:[#allocation2 + $0x2c8] sm:$0xff]
        %v3314 = vld [vmem:[#allocation2 + $0x2d0] sm:$0xff]
        %v3315 = vld [vmem:[#allocation2 + $0x2d8] sm:$0xff]
        %v3316 = vld [vmem:[#allocation2 + $0x2e0] sm:$0xff]
        %v3317 = vld [vmem:[#allocation2 + $0x2e8] sm:$0xff]
        %v3318 = vld [vmem:[#allocation2 + $0x2f0] sm:$0xff]
        %v3319 = vld [vmem:[#allocation2 + $0x2f8] sm:$0xff]
        %v3320 = vld [vmem:[#allocation2 + $0x300] sm:$0xff]
        %v3321 = vld [vmem:[#allocation2 + $0x308] sm:$0xff]
        %v3322 = vld [vmem:[#allocation2 + $0x310] sm:$0xff]
        %v3323 = vld [vmem:[#allocation2 + $0x318] sm:$0xff]
        %v3324 = vld [vmem:[#allocation2 + $0x320] sm:$0xff]
        %v3325 = vld [vmem:[#allocation2 + $0x328] sm:$0xff]
        %v3326 = vld [vmem:[#allocation2 + $0x330] sm:$0xff]
        %v3327 = vld [vmem:[#allocation2 + $0x338] sm:$0xff]
        %v3328 = vld [vmem:[#allocation2 + $0x340] sm:$0xff]
        %v3329 = vld [vmem:[#allocation2 + $0x348] sm:$0xff]
        %v3330 = vld [vmem:[#allocation2 + $0x350] sm:$0xff]
        %v3331 = vld [vmem:[#allocation2 + $0x358] sm:$0xff]
        %v3332 = vld [vmem:[#allocation2 + $0x360] sm:$0xff]
        %v3333 = vld [vmem:[#allocation2 + $0x368] sm:$0xff]
        %v3334 = vld [vmem:[#allocation2 + $0x370] sm:$0xff]
        %v3335 = vld [vmem:[#allocation2 + $0x378] sm:$0xff]
        %v3336 = vld [vmem:[#allocation2 + $0x380] sm:$0xff]
        %v3337 = vld [vmem:[#allocation2 + $0x388] sm:$0xff]
        %v3338 = vld [vmem:[#allocation2 + $0x390] sm:$0xff]
        %v3339 = vld [vmem:[#allocation2 + $0x398] sm:$0xff]
        %v3340 = vld [vmem:[#allocation2 + $0x3a0] sm:$0xff]
        %v3341 = vld [vmem:[#allocation2 + $0x3a8] sm:$0xff]
        %v3342 = vld [vmem:[#allocation2 + $0x3b0] sm:$0xff]
        %v3343 = vld [vmem:[#allocation2 + $0x3b8] sm:$0xff]
        %v3344 = vld [vmem:[#allocation2 + $0x3c0] sm:$0xff]
        %v3345 = vld [vmem:[#allocation2 + $0x3c8] sm:$0xff]
        %v3346 = vld [vmem:[#allocation2 + $0x3d0] sm:$0xff]
        %v3347 = vld [vmem:[#allocation2 + $0x3d8] sm:$0xff]
        %v3348 = vld [vmem:[#allocation2 + $0x3e0] sm:$0xff]
        %v3349 = vld [vmem:[#allocation2 + $0x3e8] sm:$0xff]
        %v3350 = vld [vmem:[#allocation2 + $0x3f0] sm:$0xff]
        %v3351 = vld [vmem:[#allocation2 + $0x3f8] sm:$0xff]
        %v3352 = vld [vmem:[#allocation2 + $0x400] sm:$0xff]
        %v3353 = vld [vmem:[#allocation2 + $0x408] sm:$0xff]
        %v3354 = vld [vmem:[#allocation2 + $0x410] sm:$0xff]
        %v3355 = vld [vmem:[#allocation2 + $0x418] sm:$0xff]
        %v3356 = vld [vmem:[#allocation2 + $0x420] sm:$0xff]
        %v3357 = vld [vmem:[#allocation2 + $0x428] sm:$0xff]
        %v3358 = vld [vmem:[#allocation2 + $0x430] sm:$0xff]
        %v3359 = vld [vmem:[#allocation2 + $0x438] sm:$0xff]
        %v3360 = vld [vmem:[#allocation2 + $0x440] sm:$0xff]
        %v3361 = vld [vmem:[#allocation2 + $0x448] sm:$0xff]
        %v3362 = vld [vmem:[#allocation2 + $0x450] sm:$0xff]
        %v3363 = vld [vmem:[#allocation2 + $0x458] sm:$0xff]
        %v3364 = vld [vmem:[#allocation2 + $0x460] sm:$0xff]
        %v3365 = vld [vmem:[#allocation2 + $0x468] sm:$0xff]
        %v3366 = vld [vmem:[#allocation2 + $0x470] sm:$0xff]
        %v3367 = vld [vmem:[#allocation2 + $0x478] sm:$0xff]
        %v3368 = vld [vmem:[#allocation2 + $0x480] sm:$0xff]
        %v3369 = vld [vmem:[#allocation2 + $0x488] sm:$0xff]
        %v3370 = vld [vmem:[#allocation2 + $0x490] sm:$0xff]
        %v3371 = vld [vmem:[#allocation2 + $0x498] sm:$0xff]
        %v3372 = vld [vmem:[#allocation2 + $0x4a0] sm:$0xff]
        %v3373 = vld [vmem:[#allocation2 + $0x4a8] sm:$0xff]
        %v3374 = vld [vmem:[#allocation2 + $0x4b0] sm:$0xff]
        %v3375 = vld [vmem:[#allocation2 + $0x4b8] sm:$0xff]
        %v3376 = vld [vmem:[#allocation2 + $0x4c0] sm:$0xff]
        %v3377 = vld [vmem:[#allocation2 + $0x4c8] sm:$0xff]
        %v3378 = vld [vmem:[#allocation2 + $0x4d0] sm:$0xff]
        %v3379 = vld [vmem:[#allocation2 + $0x4d8] sm:$0xff]
        %v3380 = vld [vmem:[#allocation2 + $0x4e0] sm:$0xff]
        %v3381 = vld [vmem:[#allocation2 + $0x4e8] sm:$0xff]
        %v3382 = vld [vmem:[#allocation2 + $0x4f0] sm:$0xff]
        %v3383 = vld [vmem:[#allocation2 + $0x4f8] sm:$0xff]
        %s3384 = scalar_lea.vmem [#allocation13], 5
        %v3385 = vld [vmem:[%s3384] ss:$8 sm:$0xf]
        %v3387 = vperm.slane %v3385, 0
        %v3388 = vperm.slane %v3385, 1
        %v3389 = vperm.slane %v3385, 2
        %v3390 = vperm.slane %v3385, 3
        %v3523 = vunpack.c.l.b16 %v3256
        %v3524 = vunpack.c.h.b16 %v3256
        %v3525 = vunpack.c.l.b16 %v3257
        %v3526 = vunpack.c.h.b16 %v3257
        %v3527 = vunpack.c.l.b16 %v3258
        %v3528 = vunpack.c.h.b16 %v3258
        %v3529 = vunpack.c.l.b16 %v3259
        %v3530 = vunpack.c.h.b16 %v3259
        %v3531 = vunpack.c.l.b16 %v3260
        %v3532 = vunpack.c.h.b16 %v3260
        %v3533 = vunpack.c.l.b16 %v3261
        %v3534 = vunpack.c.h.b16 %v3261
        %v3535 = vunpack.c.l.b16 %v3262
        %v3536 = vunpack.c.h.b16 %v3262
        %v3537 = vunpack.c.l.b16 %v3263
        %v3538 = vunpack.c.h.b16 %v3263
        %v3539 = vunpack.c.l.b16 %v3264
        %v3540 = vunpack.c.h.b16 %v3264
        %v3541 = vunpack.c.l.b16 %v3265
        %v3542 = vunpack.c.h.b16 %v3265
        %v3543 = vunpack.c.l.b16 %v3266
        %v3544 = vunpack.c.h.b16 %v3266
        %v3545 = vunpack.c.l.b16 %v3267
        %v3546 = vunpack.c.h.b16 %v3267
        %v3547 = vunpack.c.l.b16 %v3268
        %v3548 = vunpack.c.h.b16 %v3268
        %v3549 = vunpack.c.l.b16 %v3269
        %v3550 = vunpack.c.h.b16 %v3269
        %v3551 = vunpack.c.l.b16 %v3270
        %v3552 = vunpack.c.h.b16 %v3270
        %v3553 = vunpack.c.l.b16 %v3271
        %v3554 = vunpack.c.h.b16 %v3271
        %v3555 = vunpack.c.l.b16 %v3272
        %v3556 = vunpack.c.h.b16 %v3272
        %v3557 = vunpack.c.l.b16 %v3273
        %v3558 = vunpack.c.h.b16 %v3273
        %v3559 = vunpack.c.l.b16 %v3274
        %v3560 = vunpack.c.h.b16 %v3274
        %v3561 = vunpack.c.l.b16 %v3275
        %v3562 = vunpack.c.h.b16 %v3275
        %v3563 = vunpack.c.l.b16 %v3276
        %v3564 = vunpack.c.h.b16 %v3276
        %v3565 = vunpack.c.l.b16 %v3277
        %v3566 = vunpack.c.h.b16 %v3277
        %v3567 = vunpack.c.l.b16 %v3278
        %v3568 = vunpack.c.h.b16 %v3278
        %v3569 = vunpack.c.l.b16 %v3279
        %v3570 = vunpack.c.h.b16 %v3279
        %v3571 = vunpack.c.l.b16 %v3280
        %v3572 = vunpack.c.h.b16 %v3280
        %v3573 = vunpack.c.l.b16 %v3281
        %v3574 = vunpack.c.h.b16 %v3281
        %v3575 = vunpack.c.l.b16 %v3282
        %v3576 = vunpack.c.h.b16 %v3282
        %v3577 = vunpack.c.l.b16 %v3283
        %v3578 = vunpack.c.h.b16 %v3283
        %v3579 = vunpack.c.l.b16 %v3284
        %v3580 = vunpack.c.h.b16 %v3284
        %v3581 = vunpack.c.l.b16 %v3285
        %v3582 = vunpack.c.h.b16 %v3285
        %v3583 = vunpack.c.l.b16 %v3286
        %v3584 = vunpack.c.h.b16 %v3286
        %v3585 = vunpack.c.l.b16 %v3287
        %v3586 = vunpack.c.h.b16 %v3287
        %v3587 = vunpack.c.l.b16 %v3288
        %v3588 = vunpack.c.h.b16 %v3288
        %v3589 = vunpack.c.l.b16 %v3289
        %v3590 = vunpack.c.h.b16 %v3289
        %v3591 = vunpack.c.l.b16 %v3290
        %v3592 = vunpack.c.h.b16 %v3290
        %v3593 = vunpack.c.l.b16 %v3291
        %v3594 = vunpack.c.h.b16 %v3291
        %v3595 = vunpack.c.l.b16 %v3292
        %v3596 = vunpack.c.h.b16 %v3292
        %v3597 = vunpack.c.l.b16 %v3293
        %v3598 = vunpack.c.h.b16 %v3293
        %v3599 = vunpack.c.l.b16 %v3294
        %v3600 = vunpack.c.h.b16 %v3294
        %v3601 = vunpack.c.l.b16 %v3295
        %v3602 = vunpack.c.h.b16 %v3295
        %v3603 = vunpack.c.l.b16 %v3296
        %v3604 = vunpack.c.h.b16 %v3296
        %v3605 = vunpack.c.l.b16 %v3297
        %v3606 = vunpack.c.h.b16 %v3297
        %v3607 = vunpack.c.l.b16 %v3298
        %v3608 = vunpack.c.h.b16 %v3298
        %v3609 = vunpack.c.l.b16 %v3299
        %v3610 = vunpack.c.h.b16 %v3299
        %v3611 = vunpack.c.l.b16 %v3300
        %v3612 = vunpack.c.h.b16 %v3300
        %v3613 = vunpack.c.l.b16 %v3301
        %v3614 = vunpack.c.h.b16 %v3301
        %v3615 = vunpack.c.l.b16 %v3302
        %v3616 = vunpack.c.h.b16 %v3302
        %v3617 = vunpack.c.l.b16 %v3303
        %v3618 = vunpack.c.h.b16 %v3303
        %v3619 = vunpack.c.l.b16 %v3304
        %v3620 = vunpack.c.h.b16 %v3304
        %v3621 = vunpack.c.l.b16 %v3305
        %v3622 = vunpack.c.h.b16 %v3305
        %v3623 = vunpack.c.l.b16 %v3306
        %v3624 = vunpack.c.h.b16 %v3306
        %v3625 = vunpack.c.l.b16 %v3307
        %v3626 = vunpack.c.h.b16 %v3307
        %v3627 = vunpack.c.l.b16 %v3308
        %v3628 = vunpack.c.h.b16 %v3308
        %v3629 = vunpack.c.l.b16 %v3309
        %v3630 = vunpack.c.h.b16 %v3309
        %v3631 = vunpack.c.l.b16 %v3310
        %v3632 = vunpack.c.h.b16 %v3310
        %v3633 = vunpack.c.l.b16 %v3311
        %v3634 = vunpack.c.h.b16 %v3311
        %v3635 = vunpack.c.l.b16 %v3312
        %v3636 = vunpack.c.h.b16 %v3312
        %v3637 = vunpack.c.l.b16 %v3313
        %v3638 = vunpack.c.h.b16 %v3313
        %v3639 = vunpack.c.l.b16 %v3314
        %v3640 = vunpack.c.h.b16 %v3314
        %v3641 = vunpack.c.l.b16 %v3315
        %v3642 = vunpack.c.h.b16 %v3315
        %v3643 = vunpack.c.l.b16 %v3316
        %v3644 = vunpack.c.h.b16 %v3316
        %v3645 = vunpack.c.l.b16 %v3317
        %v3646 = vunpack.c.h.b16 %v3317
        %v3647 = vunpack.c.l.b16 %v3318
        %v3648 = vunpack.c.h.b16 %v3318
        %v3649 = vunpack.c.l.b16 %v3319
        %v3650 = vunpack.c.h.b16 %v3319
        %v3651 = vunpack.c.l.b16 %v3320
        %v3652 = vunpack.c.h.b16 %v3320
        %v3653 = vunpack.c.l.b16 %v3321
        %v3654 = vunpack.c.h.b16 %v3321
        %v3655 = vunpack.c.l.b16 %v3322
        %v3656 = vunpack.c.h.b16 %v3322
        %v3657 = vunpack.c.l.b16 %v3323
        %v3658 = vunpack.c.h.b16 %v3323
        %v3659 = vunpack.c.l.b16 %v3324
        %v3660 = vunpack.c.h.b16 %v3324
        %v3661 = vunpack.c.l.b16 %v3325
        %v3662 = vunpack.c.h.b16 %v3325
        %v3663 = vunpack.c.l.b16 %v3326
        %v3664 = vunpack.c.h.b16 %v3326
        %v3665 = vunpack.c.l.b16 %v3327
        %v3666 = vunpack.c.h.b16 %v3327
        %v3667 = vunpack.c.l.b16 %v3328
        %v3668 = vunpack.c.h.b16 %v3328
        %v3669 = vunpack.c.l.b16 %v3329
        %v3670 = vunpack.c.h.b16 %v3329
        %v3671 = vunpack.c.l.b16 %v3330
        %v3672 = vunpack.c.h.b16 %v3330
        %v3673 = vunpack.c.l.b16 %v3331
        %v3674 = vunpack.c.h.b16 %v3331
        %v3675 = vunpack.c.l.b16 %v3332
        %v3676 = vunpack.c.h.b16 %v3332
        %v3677 = vunpack.c.l.b16 %v3333
        %v3678 = vunpack.c.h.b16 %v3333
        %v3679 = vunpack.c.l.b16 %v3334
        %v3680 = vunpack.c.h.b16 %v3334
        %v3681 = vunpack.c.l.b16 %v3335
        %v3682 = vunpack.c.h.b16 %v3335
        %v3683 = vunpack.c.l.b16 %v3336
        %v3684 = vunpack.c.h.b16 %v3336
        %v3685 = vunpack.c.l.b16 %v3337
        %v3686 = vunpack.c.h.b16 %v3337
        %v3687 = vunpack.c.l.b16 %v3338
        %v3688 = vunpack.c.h.b16 %v3338
        %v3689 = vunpack.c.l.b16 %v3339
        %v3690 = vunpack.c.h.b16 %v3339
        %v3691 = vunpack.c.l.b16 %v3340
        %v3692 = vunpack.c.h.b16 %v3340
        %v3693 = vunpack.c.l.b16 %v3341
        %v3694 = vunpack.c.h.b16 %v3341
        %v3695 = vunpack.c.l.b16 %v3342
        %v3696 = vunpack.c.h.b16 %v3342
        %v3697 = vunpack.c.l.b16 %v3343
        %v3698 = vunpack.c.h.b16 %v3343
        %v3699 = vunpack.c.l.b16 %v3344
        %v3700 = vunpack.c.h.b16 %v3344
        %v3701 = vunpack.c.l.b16 %v3345
        %v3702 = vunpack.c.h.b16 %v3345
        %v3703 = vunpack.c.l.b16 %v3346
        %v3704 = vunpack.c.h.b16 %v3346
        %v3705 = vunpack.c.l.b16 %v3347
        %v3706 = vunpack.c.h.b16 %v3347
        %v3707 = vunpack.c.l.b16 %v3348
        %v3708 = vunpack.c.h.b16 %v3348
        %v3709 = vunpack.c.l.b16 %v3349
        %v3710 = vunpack.c.h.b16 %v3349
        %v3711 = vunpack.c.l.b16 %v3350
        %v3712 = vunpack.c.h.b16 %v3350
        %v3713 = vunpack.c.l.b16 %v3351
        %v3714 = vunpack.c.h.b16 %v3351
        %v3715 = vunpack.c.l.b16 %v3352
        %v3716 = vunpack.c.h.b16 %v3352
        %v3717 = vunpack.c.l.b16 %v3353
        %v3718 = vunpack.c.h.b16 %v3353
        %v3719 = vunpack.c.l.b16 %v3354
        %v3720 = vunpack.c.h.b16 %v3354
        %v3721 = vunpack.c.l.b16 %v3355
        %v3722 = vunpack.c.h.b16 %v3355
        %v3723 = vunpack.c.l.b16 %v3356
        %v3724 = vunpack.c.h.b16 %v3356
        %v3725 = vunpack.c.l.b16 %v3357
        %v3726 = vunpack.c.h.b16 %v3357
        %v3727 = vunpack.c.l.b16 %v3358
        %v3728 = vunpack.c.h.b16 %v3358
        %v3729 = vunpack.c.l.b16 %v3359
        %v3730 = vunpack.c.h.b16 %v3359
        %v3731 = vunpack.c.l.b16 %v3360
        %v3732 = vunpack.c.h.b16 %v3360
        %v3733 = vunpack.c.l.b16 %v3361
        %v3734 = vunpack.c.h.b16 %v3361
        %v3735 = vunpack.c.l.b16 %v3362
        %v3736 = vunpack.c.h.b16 %v3362
        %v3737 = vunpack.c.l.b16 %v3363
        %v3738 = vunpack.c.h.b16 %v3363
        %v3739 = vunpack.c.l.b16 %v3364
        %v3740 = vunpack.c.h.b16 %v3364
        %v3741 = vunpack.c.l.b16 %v3365
        %v3742 = vunpack.c.h.b16 %v3365
        %v3743 = vunpack.c.l.b16 %v3366
        %v3744 = vunpack.c.h.b16 %v3366
        %v3745 = vunpack.c.l.b16 %v3367
        %v3746 = vunpack.c.h.b16 %v3367
        %v3747 = vunpack.c.l.b16 %v3368
        %v3748 = vunpack.c.h.b16 %v3368
        %v3749 = vunpack.c.l.b16 %v3369
        %v3750 = vunpack.c.h.b16 %v3369
        %v3751 = vunpack.c.l.b16 %v3370
        %v3752 = vunpack.c.h.b16 %v3370
        %v3753 = vunpack.c.l.b16 %v3371
        %v3754 = vunpack.c.h.b16 %v3371
        %v3755 = vunpack.c.l.b16 %v3372
        %v3756 = vunpack.c.h.b16 %v3372
        %v3757 = vunpack.c.l.b16 %v3373
        %v3758 = vunpack.c.h.b16 %v3373
        %v3759 = vunpack.c.l.b16 %v3374
        %v3760 = vunpack.c.h.b16 %v3374
        %v3761 = vunpack.c.l.b16 %v3375
        %v3762 = vunpack.c.h.b16 %v3375
        %v3763 = vunpack.c.l.b16 %v3376
        %v3764 = vunpack.c.h.b16 %v3376
        %v3765 = vunpack.c.l.b16 %v3377
        %v3766 = vunpack.c.h.b16 %v3377
        %v3767 = vunpack.c.l.b16 %v3378
        %v3768 = vunpack.c.h.b16 %v3378
        %v3769 = vunpack.c.l.b16 %v3379
        %v3770 = vunpack.c.h.b16 %v3379
        %v3771 = vunpack.c.l.b16 %v3380
        %v3772 = vunpack.c.h.b16 %v3380
        %v3773 = vunpack.c.l.b16 %v3381
        %v3774 = vunpack.c.h.b16 %v3381
        %v3775 = vunpack.c.l.b16 %v3382
        %v3776 = vunpack.c.h.b16 %v3382
        %v3777 = vunpack.c.l.b16 %v3383
        %v3778 = vunpack.c.h.b16 %v3383
        %v3779 = vpack.c.b16 %v3527, %v3523
        %v3780 = vpack.c.b16 %v3528, %v3524
        %v3781 = vpack.c.b16 %v3529, %v3525
        %v3782 = vpack.c.b16 %v3530, %v3526
        %v3783 = vpack.c.b16 %v3535, %v3531
        %v3784 = vpack.c.b16 %v3536, %v3532
        %v3785 = vpack.c.b16 %v3537, %v3533
        %v3786 = vpack.c.b16 %v3538, %v3534
        %v3787 = vpack.c.b16 %v3543, %v3539
        %v3788 = vpack.c.b16 %v3544, %v3540
        %v3789 = vpack.c.b16 %v3545, %v3541
        %v3790 = vpack.c.b16 %v3546, %v3542
        %v3791 = vpack.c.b16 %v3551, %v3547
        %v3792 = vpack.c.b16 %v3552, %v3548
        %v3793 = vpack.c.b16 %v3553, %v3549
        %v3794 = vpack.c.b16 %v3554, %v3550
        %v3795 = vpack.c.b16 %v3559, %v3555
        %v3796 = vpack.c.b16 %v3560, %v3556
        %v3797 = vpack.c.b16 %v3561, %v3557
        %v3798 = vpack.c.b16 %v3562, %v3558
        %v3799 = vpack.c.b16 %v3567, %v3563
        %v3800 = vpack.c.b16 %v3568, %v3564
        %v3801 = vpack.c.b16 %v3569, %v3565
        %v3802 = vpack.c.b16 %v3570, %v3566
        %v3803 = vpack.c.b16 %v3575, %v3571
        %v3804 = vpack.c.b16 %v3576, %v3572
        %v3805 = vpack.c.b16 %v3577, %v3573
        %v3806 = vpack.c.b16 %v3578, %v3574
        %v3807 = vpack.c.b16 %v3583, %v3579
        %v3808 = vpack.c.b16 %v3584, %v3580
        %v3809 = vpack.c.b16 %v3585, %v3581
        %v3810 = vpack.c.b16 %v3586, %v3582
        %v3811 = vpack.c.b16 %v3591, %v3587
        %v3812 = vpack.c.b16 %v3592, %v3588
        %v3813 = vpack.c.b16 %v3593, %v3589
        %v3814 = vpack.c.b16 %v3594, %v3590
        %v3815 = vpack.c.b16 %v3599, %v3595
        %v3816 = vpack.c.b16 %v3600, %v3596
        %v3817 = vpack.c.b16 %v3601, %v3597
        %v3818 = vpack.c.b16 %v3602, %v3598
        %v3819 = vpack.c.b16 %v3607, %v3603
        %v3820 = vpack.c.b16 %v3608, %v3604
        %v3821 = vpack.c.b16 %v3609, %v3605
        %v3822 = vpack.c.b16 %v3610, %v3606
        %v3823 = vpack.c.b16 %v3615, %v3611
        %v3824 = vpack.c.b16 %v3616, %v3612
        %v3825 = vpack.c.b16 %v3617, %v3613
        %v3826 = vpack.c.b16 %v3618, %v3614
        %v3827 = vpack.c.b16 %v3623, %v3619
        %v3828 = vpack.c.b16 %v3624, %v3620
        %v3829 = vpack.c.b16 %v3625, %v3621
        %v3830 = vpack.c.b16 %v3626, %v3622
        %v3831 = vpack.c.b16 %v3631, %v3627
        %v3832 = vpack.c.b16 %v3632, %v3628
        %v3833 = vpack.c.b16 %v3633, %v3629
        %v3834 = vpack.c.b16 %v3634, %v3630
        %v3835 = vpack.c.b16 %v3639, %v3635
        %v3836 = vpack.c.b16 %v3640, %v3636
        %v3837 = vpack.c.b16 %v3641, %v3637
        %v3838 = vpack.c.b16 %v3642, %v3638
        %v3839 = vpack.c.b16 %v3647, %v3643
        %v3840 = vpack.c.b16 %v3648, %v3644
        %v3841 = vpack.c.b16 %v3649, %v3645
        %v3842 = vpack.c.b16 %v3650, %v3646
        %v3843 = vpack.c.b16 %v3655, %v3651
        %v3844 = vpack.c.b16 %v3656, %v3652
        %v3845 = vpack.c.b16 %v3657, %v3653
        %v3846 = vpack.c.b16 %v3658, %v3654
        %v3847 = vpack.c.b16 %v3663, %v3659
        %v3848 = vpack.c.b16 %v3664, %v3660
        %v3849 = vpack.c.b16 %v3665, %v3661
        %v3850 = vpack.c.b16 %v3666, %v3662
        %v3851 = vpack.c.b16 %v3671, %v3667
        %v3852 = vpack.c.b16 %v3672, %v3668
        %v3853 = vpack.c.b16 %v3673, %v3669
        %v3854 = vpack.c.b16 %v3674, %v3670
        %v3855 = vpack.c.b16 %v3679, %v3675
        %v3856 = vpack.c.b16 %v3680, %v3676
        %v3857 = vpack.c.b16 %v3681, %v3677
        %v3858 = vpack.c.b16 %v3682, %v3678
        %v3859 = vpack.c.b16 %v3687, %v3683
        %v3860 = vpack.c.b16 %v3688, %v3684
        %v3861 = vpack.c.b16 %v3689, %v3685
        %v3862 = vpack.c.b16 %v3690, %v3686
        %v3863 = vpack.c.b16 %v3695, %v3691
        %v3864 = vpack.c.b16 %v3696, %v3692
        %v3865 = vpack.c.b16 %v3697, %v3693
        %v3866 = vpack.c.b16 %v3698, %v3694
        %v3867 = vpack.c.b16 %v3703, %v3699
        %v3868 = vpack.c.b16 %v3704, %v3700
        %v3869 = vpack.c.b16 %v3705, %v3701
        %v3870 = vpack.c.b16 %v3706, %v3702
        %v3871 = vpack.c.b16 %v3711, %v3707
        %v3872 = vpack.c.b16 %v3712, %v3708
        %v3873 = vpack.c.b16 %v3713, %v3709
        %v3874 = vpack.c.b16 %v3714, %v3710
        %v3875 = vpack.c.b16 %v3719, %v3715
        %v3876 = vpack.c.b16 %v3720, %v3716
        %v3877 = vpack.c.b16 %v3721, %v3717
        %v3878 = vpack.c.b16 %v3722, %v3718
        %v3879 = vpack.c.b16 %v3727, %v3723
        %v3880 = vpack.c.b16 %v3728, %v3724
        %v3881 = vpack.c.b16 %v3729, %v3725
        %v3882 = vpack.c.b16 %v3730, %v3726
        %v3883 = vpack.c.b16 %v3735, %v3731
        %v3884 = vpack.c.b16 %v3736, %v3732
        %v3885 = vpack.c.b16 %v3737, %v3733
        %v3886 = vpack.c.b16 %v3738, %v3734
        %v3887 = vpack.c.b16 %v3743, %v3739
        %v3888 = vpack.c.b16 %v3744, %v3740
        %v3889 = vpack.c.b16 %v3745, %v3741
        %v3890 = vpack.c.b16 %v3746, %v3742
        %v3891 = vpack.c.b16 %v3751, %v3747
        %v3892 = vpack.c.b16 %v3752, %v3748
        %v3893 = vpack.c.b16 %v3753, %v3749
        %v3894 = vpack.c.b16 %v3754, %v3750
        %v3895 = vpack.c.b16 %v3759, %v3755
        %v3896 = vpack.c.b16 %v3760, %v3756
        %v3897 = vpack.c.b16 %v3761, %v3757
        %v3898 = vpack.c.b16 %v3762, %v3758
        %v3899 = vpack.c.b16 %v3767, %v3763
        %v3900 = vpack.c.b16 %v3768, %v3764
        %v3901 = vpack.c.b16 %v3769, %v3765
        %v3902 = vpack.c.b16 %v3770, %v3766
        %v3903 = vpack.c.b16 %v3775, %v3771
        %v3904 = vpack.c.b16 %v3776, %v3772
        %v3905 = vpack.c.b16 %v3777, %v3773
        %v3906 = vpack.c.b16 %v3778, %v3774
        %4035 = vmatpush.bf16.msra.mxu0 %v3807
        %4036 = vmatpush.bf16.msra.mxu0 %v3803
        %4037 = vmatpush.bf16.msra.mxu0 %v3799
        %4038 = vmatpush.bf16.msra.mxu0 %v3795
        %4039 = vmatpush.bf16.msra.mxu0 %v3791
        %4040 = vmatpush.bf16.msra.mxu0 %v3787
        %4041 = vmatpush.bf16.msra.mxu0 %v3783
        %4042 = vmatpush.bf16.msra.mxu0 %v3779
        %4043 = vmatmul.bf16.gmra.mxu0 %v3252
        %v4044 = vpop.f32.mrf.mxu0
        %v4045 = vadd.f32 %v3387, %v4044
        %v4046 = vpop.f32.mrf.mxu0
        %4047 = vdwg.mxu0
        %4048 = vmatpush.bf16.msra.mxu0 %v3839
        %4049 = vmatpush.bf16.msra.mxu0 %v3835
        %4050 = vmatpush.bf16.msra.mxu0 %v3831
        %4051 = vmatpush.bf16.msra.mxu0 %v3827
        %4052 = vmatpush.bf16.msra.mxu0 %v3823
        %4053 = vmatpush.bf16.msra.mxu0 %v3819
        %4054 = vmatpush.bf16.msra.mxu0 %v3815
        %4055 = vmatpush.bf16.msra.mxu0 %v3811
        %4056 = vmatmul.bf16.gmra.mxu0 %v3253
        %v4057 = vpop.f32.mrf.mxu0
        %v4058 = vadd.f32 %v4045, %v4057
        %v4059 = vpop.f32.mrf.mxu0
        %4060 = vdwg.mxu0
        %4061 = vmatpush.bf16.msra.mxu0 %v3871
        %4062 = vmatpush.bf16.msra.mxu0 %v3867
        %4063 = vmatpush.bf16.msra.mxu0 %v3863
        %4064 = vmatpush.bf16.msra.mxu0 %v3859
        %4065 = vmatpush.bf16.msra.mxu0 %v3855
        %4066 = vmatpush.bf16.msra.mxu0 %v3851
        %4067 = vmatpush.bf16.msra.mxu0 %v3847
        %4068 = vmatpush.bf16.msra.mxu0 %v3843
        %4069 = vmatmul.bf16.gmra.mxu0 %v3254
        %v4070 = vpop.f32.mrf.mxu0
        %v4071 = vadd.f32 %v4058, %v4070
        %v4072 = vpop.f32.mrf.mxu0
        %4073 = vdwg.mxu0
        %4074 = vmatpush.bf16.msra.mxu0 %v3903
        %4075 = vmatpush.bf16.msra.mxu0 %v3899
        %4076 = vmatpush.bf16.msra.mxu0 %v3895
        %4077 = vmatpush.bf16.msra.mxu0 %v3891
        %4078 = vmatpush.bf16.msra.mxu0 %v3887
        %4079 = vmatpush.bf16.msra.mxu0 %v3883
        %4080 = vmatpush.bf16.msra.mxu0 %v3879
        %4081 = vmatpush.bf16.msra.mxu0 %v3875
        %4082 = vmatmul.bf16.gmra.mxu0 %v3255
        %v4083 = vpop.f32.mrf.mxu0
        %v4084 = vadd.f32 %v4071, %v4083
        %v4085 = vpop.f32.mrf.mxu0
        %4086 = vdwg.mxu0
        %4087 = vmatpush.bf16.msra.mxu0 %v3808
        %4088 = vmatpush.bf16.msra.mxu0 %v3804
        %4089 = vmatpush.bf16.msra.mxu0 %v3800
        %4090 = vmatpush.bf16.msra.mxu0 %v3796
        %4091 = vmatpush.bf16.msra.mxu0 %v3792
        %4092 = vmatpush.bf16.msra.mxu0 %v3788
        %4093 = vmatpush.bf16.msra.mxu0 %v3784
        %4094 = vmatpush.bf16.msra.mxu0 %v3780
        %4095 = vmatmul.bf16.gmra.mxu0 %v3252
        %v4096 = vpop.f32.mrf.mxu0
        %v4097 = vadd.f32 %v3388, %v4096
        %v4098 = vpop.f32.mrf.mxu0
        %4099 = vdwg.mxu0
        %4100 = vmatpush.bf16.msra.mxu0 %v3840
        %4101 = vmatpush.bf16.msra.mxu0 %v3836
        %4102 = vmatpush.bf16.msra.mxu0 %v3832
        %4103 = vmatpush.bf16.msra.mxu0 %v3828
        %4104 = vmatpush.bf16.msra.mxu0 %v3824
        %4105 = vmatpush.bf16.msra.mxu0 %v3820
        %4106 = vmatpush.bf16.msra.mxu0 %v3816
        %4107 = vmatpush.bf16.msra.mxu0 %v3812
        %4108 = vmatmul.bf16.gmra.mxu0 %v3253
        %v4109 = vpop.f32.mrf.mxu0
        %v4110 = vadd.f32 %v4097, %v4109
        %v4111 = vpop.f32.mrf.mxu0
        %4112 = vdwg.mxu0
        %4113 = vmatpush.bf16.msra.mxu0 %v3872
        %4114 = vmatpush.bf16.msra.mxu0 %v3868
        %4115 = vmatpush.bf16.msra.mxu0 %v3864
        %4116 = vmatpush.bf16.msra.mxu0 %v3860
        %4117 = vmatpush.bf16.msra.mxu0 %v3856
        %4118 = vmatpush.bf16.msra.mxu0 %v3852
        %4119 = vmatpush.bf16.msra.mxu0 %v3848
        %4120 = vmatpush.bf16.msra.mxu0 %v3844
        %4121 = vmatmul.bf16.gmra.mxu0 %v3254
        %v4122 = vpop.f32.mrf.mxu0
        %v4123 = vadd.f32 %v4110, %v4122
        %v4124 = vpop.f32.mrf.mxu0
        %4125 = vdwg.mxu0
        %4126 = vmatpush.bf16.msra.mxu0 %v3904
        %4127 = vmatpush.bf16.msra.mxu0 %v3900
        %4128 = vmatpush.bf16.msra.mxu0 %v3896
        %4129 = vmatpush.bf16.msra.mxu0 %v3892
        %4130 = vmatpush.bf16.msra.mxu0 %v3888
        %4131 = vmatpush.bf16.msra.mxu0 %v3884
        %4132 = vmatpush.bf16.msra.mxu0 %v3880
        %4133 = vmatpush.bf16.msra.mxu0 %v3876
        %4134 = vmatmul.bf16.gmra.mxu0 %v3255
        %v4135 = vpop.f32.mrf.mxu0
        %v4136 = vadd.f32 %v4123, %v4135
        %v4137 = vpop.f32.mrf.mxu0
        %4138 = vdwg.mxu0
        %4139 = vmatpush.bf16.msra.mxu0 %v3809
        %4140 = vmatpush.bf16.msra.mxu0 %v3805
        %4141 = vmatpush.bf16.msra.mxu0 %v3801
        %4142 = vmatpush.bf16.msra.mxu0 %v3797
        %4143 = vmatpush.bf16.msra.mxu0 %v3793
        %4144 = vmatpush.bf16.msra.mxu0 %v3789
        %4145 = vmatpush.bf16.msra.mxu0 %v3785
        %4146 = vmatpush.bf16.msra.mxu0 %v3781
        %4147 = vmatmul.bf16.gmra.mxu0 %v3252
        %v4148 = vpop.f32.mrf.mxu0
        %v4149 = vadd.f32 %v3389, %v4148
        %v4150 = vpop.f32.mrf.mxu0
        %4151 = vdwg.mxu0
        %4152 = vmatpush.bf16.msra.mxu0 %v3841
        %4153 = vmatpush.bf16.msra.mxu0 %v3837
        %4154 = vmatpush.bf16.msra.mxu0 %v3833
        %4155 = vmatpush.bf16.msra.mxu0 %v3829
        %4156 = vmatpush.bf16.msra.mxu0 %v3825
        %4157 = vmatpush.bf16.msra.mxu0 %v3821
        %4158 = vmatpush.bf16.msra.mxu0 %v3817
        %4159 = vmatpush.bf16.msra.mxu0 %v3813
        %4160 = vmatmul.bf16.gmra.mxu0 %v3253
        %v4161 = vpop.f32.mrf.mxu0
        %v4162 = vadd.f32 %v4149, %v4161
        %v4163 = vpop.f32.mrf.mxu0
        %4164 = vdwg.mxu0
        %4165 = vmatpush.bf16.msra.mxu0 %v3873
        %4166 = vmatpush.bf16.msra.mxu0 %v3869
        %4167 = vmatpush.bf16.msra.mxu0 %v3865
        %4168 = vmatpush.bf16.msra.mxu0 %v3861
        %4169 = vmatpush.bf16.msra.mxu0 %v3857
        %4170 = vmatpush.bf16.msra.mxu0 %v3853
        %4171 = vmatpush.bf16.msra.mxu0 %v3849
        %4172 = vmatpush.bf16.msra.mxu0 %v3845
        %4173 = vmatmul.bf16.gmra.mxu0 %v3254
        %v4174 = vpop.f32.mrf.mxu0
        %v4175 = vadd.f32 %v4162, %v4174
        %v4176 = vpop.f32.mrf.mxu0
        %4177 = vdwg.mxu0
        %4178 = vmatpush.bf16.msra.mxu0 %v3905
        %4179 = vmatpush.bf16.msra.mxu0 %v3901
        %4180 = vmatpush.bf16.msra.mxu0 %v3897
        %4181 = vmatpush.bf16.msra.mxu0 %v3893
        %4182 = vmatpush.bf16.msra.mxu0 %v3889
        %4183 = vmatpush.bf16.msra.mxu0 %v3885
        %4184 = vmatpush.bf16.msra.mxu0 %v3881
        %4185 = vmatpush.bf16.msra.mxu0 %v3877
        %4186 = vmatmul.bf16.gmra.mxu0 %v3255
        %v4187 = vpop.f32.mrf.mxu0
        %v4188 = vadd.f32 %v4175, %v4187
        %v4189 = vpop.f32.mrf.mxu0
        %4190 = vdwg.mxu0
        %4191 = vmatpush.bf16.msra.mxu0 %v3810
        %4192 = vmatpush.bf16.msra.mxu0 %v3806
        %4193 = vmatpush.bf16.msra.mxu0 %v3802
        %4194 = vmatpush.bf16.msra.mxu0 %v3798
        %4195 = vmatpush.bf16.msra.mxu0 %v3794
        %4196 = vmatpush.bf16.msra.mxu0 %v3790
        %4197 = vmatpush.bf16.msra.mxu0 %v3786
        %4198 = vmatpush.bf16.msra.mxu0 %v3782
        %4199 = vmatmul.bf16.gmra.mxu0 %v3252
        %v4200 = vpop.f32.mrf.mxu0
        %v4201 = vadd.f32 %v3390, %v4200
        %v4202 = vpop.f32.mrf.mxu0
        %4203 = vdwg.mxu0
        %4204 = vmatpush.bf16.msra.mxu0 %v3842
        %4205 = vmatpush.bf16.msra.mxu0 %v3838
        %4206 = vmatpush.bf16.msra.mxu0 %v3834
        %4207 = vmatpush.bf16.msra.mxu0 %v3830
        %4208 = vmatpush.bf16.msra.mxu0 %v3826
        %4209 = vmatpush.bf16.msra.mxu0 %v3822
        %4210 = vmatpush.bf16.msra.mxu0 %v3818
        %4211 = vmatpush.bf16.msra.mxu0 %v3814
        %4212 = vmatmul.bf16.gmra.mxu0 %v3253
        %v4213 = vpop.f32.mrf.mxu0
        %v4214 = vadd.f32 %v4201, %v4213
        %v4215 = vpop.f32.mrf.mxu0
        %4216 = vdwg.mxu0
        %4217 = vmatpush.bf16.msra.mxu0 %v3874
        %4218 = vmatpush.bf16.msra.mxu0 %v3870
        %4219 = vmatpush.bf16.msra.mxu0 %v3866
        %4220 = vmatpush.bf16.msra.mxu0 %v3862
        %4221 = vmatpush.bf16.msra.mxu0 %v3858
        %4222 = vmatpush.bf16.msra.mxu0 %v3854
        %4223 = vmatpush.bf16.msra.mxu0 %v3850
        %4224 = vmatpush.bf16.msra.mxu0 %v3846
        %4225 = vmatmul.bf16.gmra.mxu0 %v3254
        %v4226 = vpop.f32.mrf.mxu0
        %v4227 = vadd.f32 %v4214, %v4226
        %v4228 = vpop.f32.mrf.mxu0
        %4229 = vdwg.mxu0
        %4230 = vmatpush.bf16.msra.mxu0 %v3906
        %4231 = vmatpush.bf16.msra.mxu0 %v3902
        %4232 = vmatpush.bf16.msra.mxu0 %v3898
        %4233 = vmatpush.bf16.msra.mxu0 %v3894
        %4234 = vmatpush.bf16.msra.mxu0 %v3890
        %4235 = vmatpush.bf16.msra.mxu0 %v3886
        %4236 = vmatpush.bf16.msra.mxu0 %v3882
        %4237 = vmatpush.bf16.msra.mxu0 %v3878
        %4238 = vmatmul.bf16.gmra.mxu0 %v3255
        %v4239 = vpop.f32.mrf.mxu0
        %v4240 = vadd.f32 %v4227, %v4239
        %v4241 = vpop.f32.mrf.mxu0
        %4242 = vdwg.mxu0
        %v4243 = vmax.f32 %v4084, 0.0
        %v4244 = vmax.f32 %v4136, 0.0
        %v4245 = vmax.f32 %v4188, 0.0
        %v4246 = vmax.f32 %v4240, 0.0
        %v4247 = vpack.c.bf16 %v4243, %v4243
        %v4248 = vpack.c.bf16 %v4244, %v4244
        %v4249 = vpack.c.bf16 %v4245, %v4245
        %v4250 = vpack.c.bf16 %v4246, %v4246
        %v4251 = vld [vmem:[#allocation2 + $0x500] sm:$0xff]
        %v4252 = vld [vmem:[#allocation2 + $0x508] sm:$0xff]
        %v4253 = vld [vmem:[#allocation2 + $0x510] sm:$0xff]
        %v4254 = vld [vmem:[#allocation2 + $0x518] sm:$0xff]
        %v4255 = vld [vmem:[#allocation2 + $0x520] sm:$0xff]
        %v4256 = vld [vmem:[#allocation2 + $0x528] sm:$0xff]
        %v4257 = vld [vmem:[#allocation2 + $0x530] sm:$0xff]
        %v4258 = vld [vmem:[#allocation2 + $0x538] sm:$0xff]
        %v4259 = vld [vmem:[#allocation2 + $0x540] sm:$0xff]
        %v4260 = vld [vmem:[#allocation2 + $0x548] sm:$0xff]
        %v4261 = vld [vmem:[#allocation2 + $0x550] sm:$0xff]
        %v4262 = vld [vmem:[#allocation2 + $0x558] sm:$0xff]
        %v4263 = vld [vmem:[#allocation2 + $0x560] sm:$0xff]
        %v4264 = vld [vmem:[#allocation2 + $0x568] sm:$0xff]
        %v4265 = vld [vmem:[#allocation2 + $0x570] sm:$0xff]
        %v4266 = vld [vmem:[#allocation2 + $0x578] sm:$0xff]
        %v4267 = vld [vmem:[#allocation2 + $0x580] sm:$0xff]
        %v4268 = vld [vmem:[#allocation2 + $0x588] sm:$0xff]
        %v4269 = vld [vmem:[#allocation2 + $0x590] sm:$0xff]
        %v4270 = vld [vmem:[#allocation2 + $0x598] sm:$0xff]
        %v4271 = vld [vmem:[#allocation2 + $0x5a0] sm:$0xff]
        %v4272 = vld [vmem:[#allocation2 + $0x5a8] sm:$0xff]
        %v4273 = vld [vmem:[#allocation2 + $0x5b0] sm:$0xff]
        %v4274 = vld [vmem:[#allocation2 + $0x5b8] sm:$0xff]
        %v4275 = vld [vmem:[#allocation2 + $0x5c0] sm:$0xff]
        %v4276 = vld [vmem:[#allocation2 + $0x5c8] sm:$0xff]
        %v4277 = vld [vmem:[#allocation2 + $0x5d0] sm:$0xff]
        %v4278 = vld [vmem:[#allocation2 + $0x5d8] sm:$0xff]
        %v4279 = vld [vmem:[#allocation2 + $0x5e0] sm:$0xff]
        %v4280 = vld [vmem:[#allocation2 + $0x5e8] sm:$0xff]
        %v4281 = vld [vmem:[#allocation2 + $0x5f0] sm:$0xff]
        %v4282 = vld [vmem:[#allocation2 + $0x5f8] sm:$0xff]
        %v4283 = vld [vmem:[#allocation2 + $0x600] sm:$0xff]
        %v4284 = vld [vmem:[#allocation2 + $0x608] sm:$0xff]
        %v4285 = vld [vmem:[#allocation2 + $0x610] sm:$0xff]
        %v4286 = vld [vmem:[#allocation2 + $0x618] sm:$0xff]
        %v4287 = vld [vmem:[#allocation2 + $0x620] sm:$0xff]
        %v4288 = vld [vmem:[#allocation2 + $0x628] sm:$0xff]
        %v4289 = vld [vmem:[#allocation2 + $0x630] sm:$0xff]
        %v4290 = vld [vmem:[#allocation2 + $0x638] sm:$0xff]
        %v4291 = vld [vmem:[#allocation2 + $0x640] sm:$0xff]
        %v4292 = vld [vmem:[#allocation2 + $0x648] sm:$0xff]
        %v4293 = vld [vmem:[#allocation2 + $0x650] sm:$0xff]
        %v4294 = vld [vmem:[#allocation2 + $0x658] sm:$0xff]
        %v4295 = vld [vmem:[#allocation2 + $0x660] sm:$0xff]
        %v4296 = vld [vmem:[#allocation2 + $0x668] sm:$0xff]
        %v4297 = vld [vmem:[#allocation2 + $0x670] sm:$0xff]
        %v4298 = vld [vmem:[#allocation2 + $0x678] sm:$0xff]
        %v4299 = vld [vmem:[#allocation2 + $0x680] sm:$0xff]
        %v4300 = vld [vmem:[#allocation2 + $0x688] sm:$0xff]
        %v4301 = vld [vmem:[#allocation2 + $0x690] sm:$0xff]
        %v4302 = vld [vmem:[#allocation2 + $0x698] sm:$0xff]
        %v4303 = vld [vmem:[#allocation2 + $0x6a0] sm:$0xff]
        %v4304 = vld [vmem:[#allocation2 + $0x6a8] sm:$0xff]
        %v4305 = vld [vmem:[#allocation2 + $0x6b0] sm:$0xff]
        %v4306 = vld [vmem:[#allocation2 + $0x6b8] sm:$0xff]
        %v4307 = vld [vmem:[#allocation2 + $0x6c0] sm:$0xff]
        %v4308 = vld [vmem:[#allocation2 + $0x6c8] sm:$0xff]
        %v4309 = vld [vmem:[#allocation2 + $0x6d0] sm:$0xff]
        %v4310 = vld [vmem:[#allocation2 + $0x6d8] sm:$0xff]
        %v4311 = vld [vmem:[#allocation2 + $0x6e0] sm:$0xff]
        %v4312 = vld [vmem:[#allocation2 + $0x6e8] sm:$0xff]
        %v4313 = vld [vmem:[#allocation2 + $0x6f0] sm:$0xff]
        %v4314 = vld [vmem:[#allocation2 + $0x6f8] sm:$0xff]
        %v4315 = vld [vmem:[#allocation2 + $0x700] sm:$0xff]
        %v4316 = vld [vmem:[#allocation2 + $0x708] sm:$0xff]
        %v4317 = vld [vmem:[#allocation2 + $0x710] sm:$0xff]
        %v4318 = vld [vmem:[#allocation2 + $0x718] sm:$0xff]
        %v4319 = vld [vmem:[#allocation2 + $0x720] sm:$0xff]
        %v4320 = vld [vmem:[#allocation2 + $0x728] sm:$0xff]
        %v4321 = vld [vmem:[#allocation2 + $0x730] sm:$0xff]
        %v4322 = vld [vmem:[#allocation2 + $0x738] sm:$0xff]
        %v4323 = vld [vmem:[#allocation2 + $0x740] sm:$0xff]
        %v4324 = vld [vmem:[#allocation2 + $0x748] sm:$0xff]
        %v4325 = vld [vmem:[#allocation2 + $0x750] sm:$0xff]
        %v4326 = vld [vmem:[#allocation2 + $0x758] sm:$0xff]
        %v4327 = vld [vmem:[#allocation2 + $0x760] sm:$0xff]
        %v4328 = vld [vmem:[#allocation2 + $0x768] sm:$0xff]
        %v4329 = vld [vmem:[#allocation2 + $0x770] sm:$0xff]
        %v4330 = vld [vmem:[#allocation2 + $0x778] sm:$0xff]
        %v4331 = vld [vmem:[#allocation2 + $0x780] sm:$0xff]
        %v4332 = vld [vmem:[#allocation2 + $0x788] sm:$0xff]
        %v4333 = vld [vmem:[#allocation2 + $0x790] sm:$0xff]
        %v4334 = vld [vmem:[#allocation2 + $0x798] sm:$0xff]
        %v4335 = vld [vmem:[#allocation2 + $0x7a0] sm:$0xff]
        %v4336 = vld [vmem:[#allocation2 + $0x7a8] sm:$0xff]
        %v4337 = vld [vmem:[#allocation2 + $0x7b0] sm:$0xff]
        %v4338 = vld [vmem:[#allocation2 + $0x7b8] sm:$0xff]
        %v4339 = vld [vmem:[#allocation2 + $0x7c0] sm:$0xff]
        %v4340 = vld [vmem:[#allocation2 + $0x7c8] sm:$0xff]
        %v4341 = vld [vmem:[#allocation2 + $0x7d0] sm:$0xff]
        %v4342 = vld [vmem:[#allocation2 + $0x7d8] sm:$0xff]
        %v4343 = vld [vmem:[#allocation2 + $0x7e0] sm:$0xff]
        %v4344 = vld [vmem:[#allocation2 + $0x7e8] sm:$0xff]
        %v4345 = vld [vmem:[#allocation2 + $0x7f0] sm:$0xff]
        %v4346 = vld [vmem:[#allocation2 + $0x7f8] sm:$0xff]
        %v4347 = vld [vmem:[#allocation2 + $0x800] sm:$0xff]
        %v4348 = vld [vmem:[#allocation2 + $0x808] sm:$0xff]
        %v4349 = vld [vmem:[#allocation2 + $0x810] sm:$0xff]
        %v4350 = vld [vmem:[#allocation2 + $0x818] sm:$0xff]
        %v4351 = vld [vmem:[#allocation2 + $0x820] sm:$0xff]
        %v4352 = vld [vmem:[#allocation2 + $0x828] sm:$0xff]
        %v4353 = vld [vmem:[#allocation2 + $0x830] sm:$0xff]
        %v4354 = vld [vmem:[#allocation2 + $0x838] sm:$0xff]
        %v4355 = vld [vmem:[#allocation2 + $0x840] sm:$0xff]
        %v4356 = vld [vmem:[#allocation2 + $0x848] sm:$0xff]
        %v4357 = vld [vmem:[#allocation2 + $0x850] sm:$0xff]
        %v4358 = vld [vmem:[#allocation2 + $0x858] sm:$0xff]
        %v4359 = vld [vmem:[#allocation2 + $0x860] sm:$0xff]
        %v4360 = vld [vmem:[#allocation2 + $0x868] sm:$0xff]
        %v4361 = vld [vmem:[#allocation2 + $0x870] sm:$0xff]
        %v4362 = vld [vmem:[#allocation2 + $0x878] sm:$0xff]
        %v4363 = vld [vmem:[#allocation2 + $0x880] sm:$0xff]
        %v4364 = vld [vmem:[#allocation2 + $0x888] sm:$0xff]
        %v4365 = vld [vmem:[#allocation2 + $0x890] sm:$0xff]
        %v4366 = vld [vmem:[#allocation2 + $0x898] sm:$0xff]
        %v4367 = vld [vmem:[#allocation2 + $0x8a0] sm:$0xff]
        %v4368 = vld [vmem:[#allocation2 + $0x8a8] sm:$0xff]
        %v4369 = vld [vmem:[#allocation2 + $0x8b0] sm:$0xff]
        %v4370 = vld [vmem:[#allocation2 + $0x8b8] sm:$0xff]
        %v4371 = vld [vmem:[#allocation2 + $0x8c0] sm:$0xff]
        %v4372 = vld [vmem:[#allocation2 + $0x8c8] sm:$0xff]
        %v4373 = vld [vmem:[#allocation2 + $0x8d0] sm:$0xff]
        %v4374 = vld [vmem:[#allocation2 + $0x8d8] sm:$0xff]
        %v4375 = vld [vmem:[#allocation2 + $0x8e0] sm:$0xff]
        %v4376 = vld [vmem:[#allocation2 + $0x8e8] sm:$0xff]
        %v4377 = vld [vmem:[#allocation2 + $0x8f0] sm:$0xff]
        %v4378 = vld [vmem:[#allocation2 + $0x8f8] sm:$0xff]
        %s4379 = scalar_lea.vmem [#allocation13], 6
        %v4380 = vld [vmem:[%s4379] ss:$8 sm:$0xf]
        %v4382 = vperm.slane %v4380, 0
        %v4383 = vperm.slane %v4380, 1
        %v4384 = vperm.slane %v4380, 2
        %v4385 = vperm.slane %v4380, 3
        %v4518 = vunpack.c.l.b16 %v4251
        %v4519 = vunpack.c.h.b16 %v4251
        %v4520 = vunpack.c.l.b16 %v4252
        %v4521 = vunpack.c.h.b16 %v4252
        %v4522 = vunpack.c.l.b16 %v4253
        %v4523 = vunpack.c.h.b16 %v4253
        %v4524 = vunpack.c.l.b16 %v4254
        %v4525 = vunpack.c.h.b16 %v4254
        %v4526 = vunpack.c.l.b16 %v4255
        %v4527 = vunpack.c.h.b16 %v4255
        %v4528 = vunpack.c.l.b16 %v4256
        %v4529 = vunpack.c.h.b16 %v4256
        %v4530 = vunpack.c.l.b16 %v4257
        %v4531 = vunpack.c.h.b16 %v4257
        %v4532 = vunpack.c.l.b16 %v4258
        %v4533 = vunpack.c.h.b16 %v4258
        %v4534 = vunpack.c.l.b16 %v4259
        %v4535 = vunpack.c.h.b16 %v4259
        %v4536 = vunpack.c.l.b16 %v4260
        %v4537 = vunpack.c.h.b16 %v4260
        %v4538 = vunpack.c.l.b16 %v4261
        %v4539 = vunpack.c.h.b16 %v4261
        %v4540 = vunpack.c.l.b16 %v4262
        %v4541 = vunpack.c.h.b16 %v4262
        %v4542 = vunpack.c.l.b16 %v4263
        %v4543 = vunpack.c.h.b16 %v4263
        %v4544 = vunpack.c.l.b16 %v4264
        %v4545 = vunpack.c.h.b16 %v4264
        %v4546 = vunpack.c.l.b16 %v4265
        %v4547 = vunpack.c.h.b16 %v4265
        %v4548 = vunpack.c.l.b16 %v4266
        %v4549 = vunpack.c.h.b16 %v4266
        %v4550 = vunpack.c.l.b16 %v4267
        %v4551 = vunpack.c.h.b16 %v4267
        %v4552 = vunpack.c.l.b16 %v4268
        %v4553 = vunpack.c.h.b16 %v4268
        %v4554 = vunpack.c.l.b16 %v4269
        %v4555 = vunpack.c.h.b16 %v4269
        %v4556 = vunpack.c.l.b16 %v4270
        %v4557 = vunpack.c.h.b16 %v4270
        %v4558 = vunpack.c.l.b16 %v4271
        %v4559 = vunpack.c.h.b16 %v4271
        %v4560 = vunpack.c.l.b16 %v4272
        %v4561 = vunpack.c.h.b16 %v4272
        %v4562 = vunpack.c.l.b16 %v4273
        %v4563 = vunpack.c.h.b16 %v4273
        %v4564 = vunpack.c.l.b16 %v4274
        %v4565 = vunpack.c.h.b16 %v4274
        %v4566 = vunpack.c.l.b16 %v4275
        %v4567 = vunpack.c.h.b16 %v4275
        %v4568 = vunpack.c.l.b16 %v4276
        %v4569 = vunpack.c.h.b16 %v4276
        %v4570 = vunpack.c.l.b16 %v4277
        %v4571 = vunpack.c.h.b16 %v4277
        %v4572 = vunpack.c.l.b16 %v4278
        %v4573 = vunpack.c.h.b16 %v4278
        %v4574 = vunpack.c.l.b16 %v4279
        %v4575 = vunpack.c.h.b16 %v4279
        %v4576 = vunpack.c.l.b16 %v4280
        %v4577 = vunpack.c.h.b16 %v4280
        %v4578 = vunpack.c.l.b16 %v4281
        %v4579 = vunpack.c.h.b16 %v4281
        %v4580 = vunpack.c.l.b16 %v4282
        %v4581 = vunpack.c.h.b16 %v4282
        %v4582 = vunpack.c.l.b16 %v4283
        %v4583 = vunpack.c.h.b16 %v4283
        %v4584 = vunpack.c.l.b16 %v4284
        %v4585 = vunpack.c.h.b16 %v4284
        %v4586 = vunpack.c.l.b16 %v4285
        %v4587 = vunpack.c.h.b16 %v4285
        %v4588 = vunpack.c.l.b16 %v4286
        %v4589 = vunpack.c.h.b16 %v4286
        %v4590 = vunpack.c.l.b16 %v4287
        %v4591 = vunpack.c.h.b16 %v4287
        %v4592 = vunpack.c.l.b16 %v4288
        %v4593 = vunpack.c.h.b16 %v4288
        %v4594 = vunpack.c.l.b16 %v4289
        %v4595 = vunpack.c.h.b16 %v4289
        %v4596 = vunpack.c.l.b16 %v4290
        %v4597 = vunpack.c.h.b16 %v4290
        %v4598 = vunpack.c.l.b16 %v4291
        %v4599 = vunpack.c.h.b16 %v4291
        %v4600 = vunpack.c.l.b16 %v4292
        %v4601 = vunpack.c.h.b16 %v4292
        %v4602 = vunpack.c.l.b16 %v4293
        %v4603 = vunpack.c.h.b16 %v4293
        %v4604 = vunpack.c.l.b16 %v4294
        %v4605 = vunpack.c.h.b16 %v4294
        %v4606 = vunpack.c.l.b16 %v4295
        %v4607 = vunpack.c.h.b16 %v4295
        %v4608 = vunpack.c.l.b16 %v4296
        %v4609 = vunpack.c.h.b16 %v4296
        %v4610 = vunpack.c.l.b16 %v4297
        %v4611 = vunpack.c.h.b16 %v4297
        %v4612 = vunpack.c.l.b16 %v4298
        %v4613 = vunpack.c.h.b16 %v4298
        %v4614 = vunpack.c.l.b16 %v4299
        %v4615 = vunpack.c.h.b16 %v4299
        %v4616 = vunpack.c.l.b16 %v4300
        %v4617 = vunpack.c.h.b16 %v4300
        %v4618 = vunpack.c.l.b16 %v4301
        %v4619 = vunpack.c.h.b16 %v4301
        %v4620 = vunpack.c.l.b16 %v4302
        %v4621 = vunpack.c.h.b16 %v4302
        %v4622 = vunpack.c.l.b16 %v4303
        %v4623 = vunpack.c.h.b16 %v4303
        %v4624 = vunpack.c.l.b16 %v4304
        %v4625 = vunpack.c.h.b16 %v4304
        %v4626 = vunpack.c.l.b16 %v4305
        %v4627 = vunpack.c.h.b16 %v4305
        %v4628 = vunpack.c.l.b16 %v4306
        %v4629 = vunpack.c.h.b16 %v4306
        %v4630 = vunpack.c.l.b16 %v4307
        %v4631 = vunpack.c.h.b16 %v4307
        %v4632 = vunpack.c.l.b16 %v4308
        %v4633 = vunpack.c.h.b16 %v4308
        %v4634 = vunpack.c.l.b16 %v4309
        %v4635 = vunpack.c.h.b16 %v4309
        %v4636 = vunpack.c.l.b16 %v4310
        %v4637 = vunpack.c.h.b16 %v4310
        %v4638 = vunpack.c.l.b16 %v4311
        %v4639 = vunpack.c.h.b16 %v4311
        %v4640 = vunpack.c.l.b16 %v4312
        %v4641 = vunpack.c.h.b16 %v4312
        %v4642 = vunpack.c.l.b16 %v4313
        %v4643 = vunpack.c.h.b16 %v4313
        %v4644 = vunpack.c.l.b16 %v4314
        %v4645 = vunpack.c.h.b16 %v4314
        %v4646 = vunpack.c.l.b16 %v4315
        %v4647 = vunpack.c.h.b16 %v4315
        %v4648 = vunpack.c.l.b16 %v4316
        %v4649 = vunpack.c.h.b16 %v4316
        %v4650 = vunpack.c.l.b16 %v4317
        %v4651 = vunpack.c.h.b16 %v4317
        %v4652 = vunpack.c.l.b16 %v4318
        %v4653 = vunpack.c.h.b16 %v4318
        %v4654 = vunpack.c.l.b16 %v4319
        %v4655 = vunpack.c.h.b16 %v4319
        %v4656 = vunpack.c.l.b16 %v4320
        %v4657 = vunpack.c.h.b16 %v4320
        %v4658 = vunpack.c.l.b16 %v4321
        %v4659 = vunpack.c.h.b16 %v4321
        %v4660 = vunpack.c.l.b16 %v4322
        %v4661 = vunpack.c.h.b16 %v4322
        %v4662 = vunpack.c.l.b16 %v4323
        %v4663 = vunpack.c.h.b16 %v4323
        %v4664 = vunpack.c.l.b16 %v4324
        %v4665 = vunpack.c.h.b16 %v4324
        %v4666 = vunpack.c.l.b16 %v4325
        %v4667 = vunpack.c.h.b16 %v4325
        %v4668 = vunpack.c.l.b16 %v4326
        %v4669 = vunpack.c.h.b16 %v4326
        %v4670 = vunpack.c.l.b16 %v4327
        %v4671 = vunpack.c.h.b16 %v4327
        %v4672 = vunpack.c.l.b16 %v4328
        %v4673 = vunpack.c.h.b16 %v4328
        %v4674 = vunpack.c.l.b16 %v4329
        %v4675 = vunpack.c.h.b16 %v4329
        %v4676 = vunpack.c.l.b16 %v4330
        %v4677 = vunpack.c.h.b16 %v4330
        %v4678 = vunpack.c.l.b16 %v4331
        %v4679 = vunpack.c.h.b16 %v4331
        %v4680 = vunpack.c.l.b16 %v4332
        %v4681 = vunpack.c.h.b16 %v4332
        %v4682 = vunpack.c.l.b16 %v4333
        %v4683 = vunpack.c.h.b16 %v4333
        %v4684 = vunpack.c.l.b16 %v4334
        %v4685 = vunpack.c.h.b16 %v4334
        %v4686 = vunpack.c.l.b16 %v4335
        %v4687 = vunpack.c.h.b16 %v4335
        %v4688 = vunpack.c.l.b16 %v4336
        %v4689 = vunpack.c.h.b16 %v4336
        %v4690 = vunpack.c.l.b16 %v4337
        %v4691 = vunpack.c.h.b16 %v4337
        %v4692 = vunpack.c.l.b16 %v4338
        %v4693 = vunpack.c.h.b16 %v4338
        %v4694 = vunpack.c.l.b16 %v4339
        %v4695 = vunpack.c.h.b16 %v4339
        %v4696 = vunpack.c.l.b16 %v4340
        %v4697 = vunpack.c.h.b16 %v4340
        %v4698 = vunpack.c.l.b16 %v4341
        %v4699 = vunpack.c.h.b16 %v4341
        %v4700 = vunpack.c.l.b16 %v4342
        %v4701 = vunpack.c.h.b16 %v4342
        %v4702 = vunpack.c.l.b16 %v4343
        %v4703 = vunpack.c.h.b16 %v4343
        %v4704 = vunpack.c.l.b16 %v4344
        %v4705 = vunpack.c.h.b16 %v4344
        %v4706 = vunpack.c.l.b16 %v4345
        %v4707 = vunpack.c.h.b16 %v4345
        %v4708 = vunpack.c.l.b16 %v4346
        %v4709 = vunpack.c.h.b16 %v4346
        %v4710 = vunpack.c.l.b16 %v4347
        %v4711 = vunpack.c.h.b16 %v4347
        %v4712 = vunpack.c.l.b16 %v4348
        %v4713 = vunpack.c.h.b16 %v4348
        %v4714 = vunpack.c.l.b16 %v4349
        %v4715 = vunpack.c.h.b16 %v4349
        %v4716 = vunpack.c.l.b16 %v4350
        %v4717 = vunpack.c.h.b16 %v4350
        %v4718 = vunpack.c.l.b16 %v4351
        %v4719 = vunpack.c.h.b16 %v4351
        %v4720 = vunpack.c.l.b16 %v4352
        %v4721 = vunpack.c.h.b16 %v4352
        %v4722 = vunpack.c.l.b16 %v4353
        %v4723 = vunpack.c.h.b16 %v4353
        %v4724 = vunpack.c.l.b16 %v4354
        %v4725 = vunpack.c.h.b16 %v4354
        %v4726 = vunpack.c.l.b16 %v4355
        %v4727 = vunpack.c.h.b16 %v4355
        %v4728 = vunpack.c.l.b16 %v4356
        %v4729 = vunpack.c.h.b16 %v4356
        %v4730 = vunpack.c.l.b16 %v4357
        %v4731 = vunpack.c.h.b16 %v4357
        %v4732 = vunpack.c.l.b16 %v4358
        %v4733 = vunpack.c.h.b16 %v4358
        %v4734 = vunpack.c.l.b16 %v4359
        %v4735 = vunpack.c.h.b16 %v4359
        %v4736 = vunpack.c.l.b16 %v4360
        %v4737 = vunpack.c.h.b16 %v4360
        %v4738 = vunpack.c.l.b16 %v4361
        %v4739 = vunpack.c.h.b16 %v4361
        %v4740 = vunpack.c.l.b16 %v4362
        %v4741 = vunpack.c.h.b16 %v4362
        %v4742 = vunpack.c.l.b16 %v4363
        %v4743 = vunpack.c.h.b16 %v4363
        %v4744 = vunpack.c.l.b16 %v4364
        %v4745 = vunpack.c.h.b16 %v4364
        %v4746 = vunpack.c.l.b16 %v4365
        %v4747 = vunpack.c.h.b16 %v4365
        %v4748 = vunpack.c.l.b16 %v4366
        %v4749 = vunpack.c.h.b16 %v4366
        %v4750 = vunpack.c.l.b16 %v4367
        %v4751 = vunpack.c.h.b16 %v4367
        %v4752 = vunpack.c.l.b16 %v4368
        %v4753 = vunpack.c.h.b16 %v4368
        %v4754 = vunpack.c.l.b16 %v4369
        %v4755 = vunpack.c.h.b16 %v4369
        %v4756 = vunpack.c.l.b16 %v4370
        %v4757 = vunpack.c.h.b16 %v4370
        %v4758 = vunpack.c.l.b16 %v4371
        %v4759 = vunpack.c.h.b16 %v4371
        %v4760 = vunpack.c.l.b16 %v4372
        %v4761 = vunpack.c.h.b16 %v4372
        %v4762 = vunpack.c.l.b16 %v4373
        %v4763 = vunpack.c.h.b16 %v4373
        %v4764 = vunpack.c.l.b16 %v4374
        %v4765 = vunpack.c.h.b16 %v4374
        %v4766 = vunpack.c.l.b16 %v4375
        %v4767 = vunpack.c.h.b16 %v4375
        %v4768 = vunpack.c.l.b16 %v4376
        %v4769 = vunpack.c.h.b16 %v4376
        %v4770 = vunpack.c.l.b16 %v4377
        %v4771 = vunpack.c.h.b16 %v4377
        %v4772 = vunpack.c.l.b16 %v4378
        %v4773 = vunpack.c.h.b16 %v4378
        %v4774 = vpack.c.b16 %v4522, %v4518
        %v4775 = vpack.c.b16 %v4523, %v4519
        %v4776 = vpack.c.b16 %v4524, %v4520
        %v4777 = vpack.c.b16 %v4525, %v4521
        %v4778 = vpack.c.b16 %v4530, %v4526
        %v4779 = vpack.c.b16 %v4531, %v4527
        %v4780 = vpack.c.b16 %v4532, %v4528
        %v4781 = vpack.c.b16 %v4533, %v4529
        %v4782 = vpack.c.b16 %v4538, %v4534
        %v4783 = vpack.c.b16 %v4539, %v4535
        %v4784 = vpack.c.b16 %v4540, %v4536
        %v4785 = vpack.c.b16 %v4541, %v4537
        %v4786 = vpack.c.b16 %v4546, %v4542
        %v4787 = vpack.c.b16 %v4547, %v4543
        %v4788 = vpack.c.b16 %v4548, %v4544
        %v4789 = vpack.c.b16 %v4549, %v4545
        %v4790 = vpack.c.b16 %v4554, %v4550
        %v4791 = vpack.c.b16 %v4555, %v4551
        %v4792 = vpack.c.b16 %v4556, %v4552
        %v4793 = vpack.c.b16 %v4557, %v4553
        %v4794 = vpack.c.b16 %v4562, %v4558
        %v4795 = vpack.c.b16 %v4563, %v4559
        %v4796 = vpack.c.b16 %v4564, %v4560
        %v4797 = vpack.c.b16 %v4565, %v4561
        %v4798 = vpack.c.b16 %v4570, %v4566
        %v4799 = vpack.c.b16 %v4571, %v4567
        %v4800 = vpack.c.b16 %v4572, %v4568
        %v4801 = vpack.c.b16 %v4573, %v4569
        %v4802 = vpack.c.b16 %v4578, %v4574
        %v4803 = vpack.c.b16 %v4579, %v4575
        %v4804 = vpack.c.b16 %v4580, %v4576
        %v4805 = vpack.c.b16 %v4581, %v4577
        %v4806 = vpack.c.b16 %v4586, %v4582
        %v4807 = vpack.c.b16 %v4587, %v4583
        %v4808 = vpack.c.b16 %v4588, %v4584
        %v4809 = vpack.c.b16 %v4589, %v4585
        %v4810 = vpack.c.b16 %v4594, %v4590
        %v4811 = vpack.c.b16 %v4595, %v4591
        %v4812 = vpack.c.b16 %v4596, %v4592
        %v4813 = vpack.c.b16 %v4597, %v4593
        %v4814 = vpack.c.b16 %v4602, %v4598
        %v4815 = vpack.c.b16 %v4603, %v4599
        %v4816 = vpack.c.b16 %v4604, %v4600
        %v4817 = vpack.c.b16 %v4605, %v4601
        %v4818 = vpack.c.b16 %v4610, %v4606
        %v4819 = vpack.c.b16 %v4611, %v4607
        %v4820 = vpack.c.b16 %v4612, %v4608
        %v4821 = vpack.c.b16 %v4613, %v4609
        %v4822 = vpack.c.b16 %v4618, %v4614
        %v4823 = vpack.c.b16 %v4619, %v4615
        %v4824 = vpack.c.b16 %v4620, %v4616
        %v4825 = vpack.c.b16 %v4621, %v4617
        %v4826 = vpack.c.b16 %v4626, %v4622
        %v4827 = vpack.c.b16 %v4627, %v4623
        %v4828 = vpack.c.b16 %v4628, %v4624
        %v4829 = vpack.c.b16 %v4629, %v4625
        %v4830 = vpack.c.b16 %v4634, %v4630
        %v4831 = vpack.c.b16 %v4635, %v4631
        %v4832 = vpack.c.b16 %v4636, %v4632
        %v4833 = vpack.c.b16 %v4637, %v4633
        %v4834 = vpack.c.b16 %v4642, %v4638
        %v4835 = vpack.c.b16 %v4643, %v4639
        %v4836 = vpack.c.b16 %v4644, %v4640
        %v4837 = vpack.c.b16 %v4645, %v4641
        %v4838 = vpack.c.b16 %v4650, %v4646
        %v4839 = vpack.c.b16 %v4651, %v4647
        %v4840 = vpack.c.b16 %v4652, %v4648
        %v4841 = vpack.c.b16 %v4653, %v4649
        %v4842 = vpack.c.b16 %v4658, %v4654
        %v4843 = vpack.c.b16 %v4659, %v4655
        %v4844 = vpack.c.b16 %v4660, %v4656
        %v4845 = vpack.c.b16 %v4661, %v4657
        %v4846 = vpack.c.b16 %v4666, %v4662
        %v4847 = vpack.c.b16 %v4667, %v4663
        %v4848 = vpack.c.b16 %v4668, %v4664
        %v4849 = vpack.c.b16 %v4669, %v4665
        %v4850 = vpack.c.b16 %v4674, %v4670
        %v4851 = vpack.c.b16 %v4675, %v4671
        %v4852 = vpack.c.b16 %v4676, %v4672
        %v4853 = vpack.c.b16 %v4677, %v4673
        %v4854 = vpack.c.b16 %v4682, %v4678
        %v4855 = vpack.c.b16 %v4683, %v4679
        %v4856 = vpack.c.b16 %v4684, %v4680
        %v4857 = vpack.c.b16 %v4685, %v4681
        %v4858 = vpack.c.b16 %v4690, %v4686
        %v4859 = vpack.c.b16 %v4691, %v4687
        %v4860 = vpack.c.b16 %v4692, %v4688
        %v4861 = vpack.c.b16 %v4693, %v4689
        %v4862 = vpack.c.b16 %v4698, %v4694
        %v4863 = vpack.c.b16 %v4699, %v4695
        %v4864 = vpack.c.b16 %v4700, %v4696
        %v4865 = vpack.c.b16 %v4701, %v4697
        %v4866 = vpack.c.b16 %v4706, %v4702
        %v4867 = vpack.c.b16 %v4707, %v4703
        %v4868 = vpack.c.b16 %v4708, %v4704
        %v4869 = vpack.c.b16 %v4709, %v4705
        %v4870 = vpack.c.b16 %v4714, %v4710
        %v4871 = vpack.c.b16 %v4715, %v4711
        %v4872 = vpack.c.b16 %v4716, %v4712
        %v4873 = vpack.c.b16 %v4717, %v4713
        %v4874 = vpack.c.b16 %v4722, %v4718
        %v4875 = vpack.c.b16 %v4723, %v4719
        %v4876 = vpack.c.b16 %v4724, %v4720
        %v4877 = vpack.c.b16 %v4725, %v4721
        %v4878 = vpack.c.b16 %v4730, %v4726
        %v4879 = vpack.c.b16 %v4731, %v4727
        %v4880 = vpack.c.b16 %v4732, %v4728
        %v4881 = vpack.c.b16 %v4733, %v4729
        %v4882 = vpack.c.b16 %v4738, %v4734
        %v4883 = vpack.c.b16 %v4739, %v4735
        %v4884 = vpack.c.b16 %v4740, %v4736
        %v4885 = vpack.c.b16 %v4741, %v4737
        %v4886 = vpack.c.b16 %v4746, %v4742
        %v4887 = vpack.c.b16 %v4747, %v4743
        %v4888 = vpack.c.b16 %v4748, %v4744
        %v4889 = vpack.c.b16 %v4749, %v4745
        %v4890 = vpack.c.b16 %v4754, %v4750
        %v4891 = vpack.c.b16 %v4755, %v4751
        %v4892 = vpack.c.b16 %v4756, %v4752
        %v4893 = vpack.c.b16 %v4757, %v4753
        %v4894 = vpack.c.b16 %v4762, %v4758
        %v4895 = vpack.c.b16 %v4763, %v4759
        %v4896 = vpack.c.b16 %v4764, %v4760
        %v4897 = vpack.c.b16 %v4765, %v4761
        %v4898 = vpack.c.b16 %v4770, %v4766
        %v4899 = vpack.c.b16 %v4771, %v4767
        %v4900 = vpack.c.b16 %v4772, %v4768
        %v4901 = vpack.c.b16 %v4773, %v4769
        %5030 = vmatpush.bf16.msra.mxu0 %v4802
        %5031 = vmatpush.bf16.msra.mxu0 %v4798
        %5032 = vmatpush.bf16.msra.mxu0 %v4794
        %5033 = vmatpush.bf16.msra.mxu0 %v4790
        %5034 = vmatpush.bf16.msra.mxu0 %v4786
        %5035 = vmatpush.bf16.msra.mxu0 %v4782
        %5036 = vmatpush.bf16.msra.mxu0 %v4778
        %5037 = vmatpush.bf16.msra.mxu0 %v4774
        %5038 = vmatmul.bf16.gmra.mxu0 %v4247
        %v5039 = vpop.f32.mrf.mxu0
        %v5040 = vadd.f32 %v4382, %v5039
        %v5041 = vpop.f32.mrf.mxu0
        %5042 = vdwg.mxu0
        %5043 = vmatpush.bf16.msra.mxu0 %v4834
        %5044 = vmatpush.bf16.msra.mxu0 %v4830
        %5045 = vmatpush.bf16.msra.mxu0 %v4826
        %5046 = vmatpush.bf16.msra.mxu0 %v4822
        %5047 = vmatpush.bf16.msra.mxu0 %v4818
        %5048 = vmatpush.bf16.msra.mxu0 %v4814
        %5049 = vmatpush.bf16.msra.mxu0 %v4810
        %5050 = vmatpush.bf16.msra.mxu0 %v4806
        %5051 = vmatmul.bf16.gmra.mxu0 %v4248
        %v5052 = vpop.f32.mrf.mxu0
        %v5053 = vadd.f32 %v5040, %v5052
        %v5054 = vpop.f32.mrf.mxu0
        %5055 = vdwg.mxu0
        %5056 = vmatpush.bf16.msra.mxu0 %v4866
        %5057 = vmatpush.bf16.msra.mxu0 %v4862
        %5058 = vmatpush.bf16.msra.mxu0 %v4858
        %5059 = vmatpush.bf16.msra.mxu0 %v4854
        %5060 = vmatpush.bf16.msra.mxu0 %v4850
        %5061 = vmatpush.bf16.msra.mxu0 %v4846
        %5062 = vmatpush.bf16.msra.mxu0 %v4842
        %5063 = vmatpush.bf16.msra.mxu0 %v4838
        %5064 = vmatmul.bf16.gmra.mxu0 %v4249
        %v5065 = vpop.f32.mrf.mxu0
        %v5066 = vadd.f32 %v5053, %v5065
        %v5067 = vpop.f32.mrf.mxu0
        %5068 = vdwg.mxu0
        %5069 = vmatpush.bf16.msra.mxu0 %v4898
        %5070 = vmatpush.bf16.msra.mxu0 %v4894
        %5071 = vmatpush.bf16.msra.mxu0 %v4890
        %5072 = vmatpush.bf16.msra.mxu0 %v4886
        %5073 = vmatpush.bf16.msra.mxu0 %v4882
        %5074 = vmatpush.bf16.msra.mxu0 %v4878
        %5075 = vmatpush.bf16.msra.mxu0 %v4874
        %5076 = vmatpush.bf16.msra.mxu0 %v4870
        %5077 = vmatmul.bf16.gmra.mxu0 %v4250
        %v5078 = vpop.f32.mrf.mxu0
        %v5079 = vadd.f32 %v5066, %v5078
        %v5080 = vpop.f32.mrf.mxu0
        %5081 = vdwg.mxu0
        %5082 = vmatpush.bf16.msra.mxu0 %v4803
        %5083 = vmatpush.bf16.msra.mxu0 %v4799
        %5084 = vmatpush.bf16.msra.mxu0 %v4795
        %5085 = vmatpush.bf16.msra.mxu0 %v4791
        %5086 = vmatpush.bf16.msra.mxu0 %v4787
        %5087 = vmatpush.bf16.msra.mxu0 %v4783
        %5088 = vmatpush.bf16.msra.mxu0 %v4779
        %5089 = vmatpush.bf16.msra.mxu0 %v4775
        %5090 = vmatmul.bf16.gmra.mxu0 %v4247
        %v5091 = vpop.f32.mrf.mxu0
        %v5092 = vadd.f32 %v4383, %v5091
        %v5093 = vpop.f32.mrf.mxu0
        %5094 = vdwg.mxu0
        %5095 = vmatpush.bf16.msra.mxu0 %v4835
        %5096 = vmatpush.bf16.msra.mxu0 %v4831
        %5097 = vmatpush.bf16.msra.mxu0 %v4827
        %5098 = vmatpush.bf16.msra.mxu0 %v4823
        %5099 = vmatpush.bf16.msra.mxu0 %v4819
        %5100 = vmatpush.bf16.msra.mxu0 %v4815
        %5101 = vmatpush.bf16.msra.mxu0 %v4811
        %5102 = vmatpush.bf16.msra.mxu0 %v4807
        %5103 = vmatmul.bf16.gmra.mxu0 %v4248
        %v5104 = vpop.f32.mrf.mxu0
        %v5105 = vadd.f32 %v5092, %v5104
        %v5106 = vpop.f32.mrf.mxu0
        %5107 = vdwg.mxu0
        %5108 = vmatpush.bf16.msra.mxu0 %v4867
        %5109 = vmatpush.bf16.msra.mxu0 %v4863
        %5110 = vmatpush.bf16.msra.mxu0 %v4859
        %5111 = vmatpush.bf16.msra.mxu0 %v4855
        %5112 = vmatpush.bf16.msra.mxu0 %v4851
        %5113 = vmatpush.bf16.msra.mxu0 %v4847
        %5114 = vmatpush.bf16.msra.mxu0 %v4843
        %5115 = vmatpush.bf16.msra.mxu0 %v4839
        %5116 = vmatmul.bf16.gmra.mxu0 %v4249
        %v5117 = vpop.f32.mrf.mxu0
        %v5118 = vadd.f32 %v5105, %v5117
        %v5119 = vpop.f32.mrf.mxu0
        %5120 = vdwg.mxu0
        %5121 = vmatpush.bf16.msra.mxu0 %v4899
        %5122 = vmatpush.bf16.msra.mxu0 %v4895
        %5123 = vmatpush.bf16.msra.mxu0 %v4891
        %5124 = vmatpush.bf16.msra.mxu0 %v4887
        %5125 = vmatpush.bf16.msra.mxu0 %v4883
        %5126 = vmatpush.bf16.msra.mxu0 %v4879
        %5127 = vmatpush.bf16.msra.mxu0 %v4875
        %5128 = vmatpush.bf16.msra.mxu0 %v4871
        %5129 = vmatmul.bf16.gmra.mxu0 %v4250
        %v5130 = vpop.f32.mrf.mxu0
        %v5131 = vadd.f32 %v5118, %v5130
        %v5132 = vpop.f32.mrf.mxu0
        %5133 = vdwg.mxu0
        %5134 = vmatpush.bf16.msra.mxu0 %v4804
        %5135 = vmatpush.bf16.msra.mxu0 %v4800
        %5136 = vmatpush.bf16.msra.mxu0 %v4796
        %5137 = vmatpush.bf16.msra.mxu0 %v4792
        %5138 = vmatpush.bf16.msra.mxu0 %v4788
        %5139 = vmatpush.bf16.msra.mxu0 %v4784
        %5140 = vmatpush.bf16.msra.mxu0 %v4780
        %5141 = vmatpush.bf16.msra.mxu0 %v4776
        %5142 = vmatmul.bf16.gmra.mxu0 %v4247
        %v5143 = vpop.f32.mrf.mxu0
        %v5144 = vadd.f32 %v4384, %v5143
        %v5145 = vpop.f32.mrf.mxu0
        %5146 = vdwg.mxu0
        %5147 = vmatpush.bf16.msra.mxu0 %v4836
        %5148 = vmatpush.bf16.msra.mxu0 %v4832
        %5149 = vmatpush.bf16.msra.mxu0 %v4828
        %5150 = vmatpush.bf16.msra.mxu0 %v4824
        %5151 = vmatpush.bf16.msra.mxu0 %v4820
        %5152 = vmatpush.bf16.msra.mxu0 %v4816
        %5153 = vmatpush.bf16.msra.mxu0 %v4812
        %5154 = vmatpush.bf16.msra.mxu0 %v4808
        %5155 = vmatmul.bf16.gmra.mxu0 %v4248
        %v5156 = vpop.f32.mrf.mxu0
        %v5157 = vadd.f32 %v5144, %v5156
        %v5158 = vpop.f32.mrf.mxu0
        %5159 = vdwg.mxu0
        %5160 = vmatpush.bf16.msra.mxu0 %v4868
        %5161 = vmatpush.bf16.msra.mxu0 %v4864
        %5162 = vmatpush.bf16.msra.mxu0 %v4860
        %5163 = vmatpush.bf16.msra.mxu0 %v4856
        %5164 = vmatpush.bf16.msra.mxu0 %v4852
        %5165 = vmatpush.bf16.msra.mxu0 %v4848
        %5166 = vmatpush.bf16.msra.mxu0 %v4844
        %5167 = vmatpush.bf16.msra.mxu0 %v4840
        %5168 = vmatmul.bf16.gmra.mxu0 %v4249
        %v5169 = vpop.f32.mrf.mxu0
        %v5170 = vadd.f32 %v5157, %v5169
        %v5171 = vpop.f32.mrf.mxu0
        %5172 = vdwg.mxu0
        %5173 = vmatpush.bf16.msra.mxu0 %v4900
        %5174 = vmatpush.bf16.msra.mxu0 %v4896
        %5175 = vmatpush.bf16.msra.mxu0 %v4892
        %5176 = vmatpush.bf16.msra.mxu0 %v4888
        %5177 = vmatpush.bf16.msra.mxu0 %v4884
        %5178 = vmatpush.bf16.msra.mxu0 %v4880
        %5179 = vmatpush.bf16.msra.mxu0 %v4876
        %5180 = vmatpush.bf16.msra.mxu0 %v4872
        %5181 = vmatmul.bf16.gmra.mxu0 %v4250
        %v5182 = vpop.f32.mrf.mxu0
        %v5183 = vadd.f32 %v5170, %v5182
        %v5184 = vpop.f32.mrf.mxu0
        %5185 = vdwg.mxu0
        %5186 = vmatpush.bf16.msra.mxu0 %v4805
        %5187 = vmatpush.bf16.msra.mxu0 %v4801
        %5188 = vmatpush.bf16.msra.mxu0 %v4797
        %5189 = vmatpush.bf16.msra.mxu0 %v4793
        %5190 = vmatpush.bf16.msra.mxu0 %v4789
        %5191 = vmatpush.bf16.msra.mxu0 %v4785
        %5192 = vmatpush.bf16.msra.mxu0 %v4781
        %5193 = vmatpush.bf16.msra.mxu0 %v4777
        %5194 = vmatmul.bf16.gmra.mxu0 %v4247
        %v5195 = vpop.f32.mrf.mxu0
        %v5196 = vadd.f32 %v4385, %v5195
        %v5197 = vpop.f32.mrf.mxu0
        %5198 = vdwg.mxu0
        %5199 = vmatpush.bf16.msra.mxu0 %v4837
        %5200 = vmatpush.bf16.msra.mxu0 %v4833
        %5201 = vmatpush.bf16.msra.mxu0 %v4829
        %5202 = vmatpush.bf16.msra.mxu0 %v4825
        %5203 = vmatpush.bf16.msra.mxu0 %v4821
        %5204 = vmatpush.bf16.msra.mxu0 %v4817
        %5205 = vmatpush.bf16.msra.mxu0 %v4813
        %5206 = vmatpush.bf16.msra.mxu0 %v4809
        %5207 = vmatmul.bf16.gmra.mxu0 %v4248
        %v5208 = vpop.f32.mrf.mxu0
        %v5209 = vadd.f32 %v5196, %v5208
        %v5210 = vpop.f32.mrf.mxu0
        %5211 = vdwg.mxu0
        %5212 = vmatpush.bf16.msra.mxu0 %v4869
        %5213 = vmatpush.bf16.msra.mxu0 %v4865
        %5214 = vmatpush.bf16.msra.mxu0 %v4861
        %5215 = vmatpush.bf16.msra.mxu0 %v4857
        %5216 = vmatpush.bf16.msra.mxu0 %v4853
        %5217 = vmatpush.bf16.msra.mxu0 %v4849
        %5218 = vmatpush.bf16.msra.mxu0 %v4845
        %5219 = vmatpush.bf16.msra.mxu0 %v4841
        %5220 = vmatmul.bf16.gmra.mxu0 %v4249
        %v5221 = vpop.f32.mrf.mxu0
        %v5222 = vadd.f32 %v5209, %v5221
        %v5223 = vpop.f32.mrf.mxu0
        %5224 = vdwg.mxu0
        %5225 = vmatpush.bf16.msra.mxu0 %v4901
        %5226 = vmatpush.bf16.msra.mxu0 %v4897
        %5227 = vmatpush.bf16.msra.mxu0 %v4893
        %5228 = vmatpush.bf16.msra.mxu0 %v4889
        %5229 = vmatpush.bf16.msra.mxu0 %v4885
        %5230 = vmatpush.bf16.msra.mxu0 %v4881
        %5231 = vmatpush.bf16.msra.mxu0 %v4877
        %5232 = vmatpush.bf16.msra.mxu0 %v4873
        %5233 = vmatmul.bf16.gmra.mxu0 %v4250
        %v5234 = vpop.f32.mrf.mxu0
        %v5235 = vadd.f32 %v5222, %v5234
        %v5236 = vpop.f32.mrf.mxu0
        %5237 = vdwg.mxu0
        %v5238 = vmax.f32 %v5079, 0.0
        %v5239 = vmax.f32 %v5131, 0.0
        %v5240 = vmax.f32 %v5183, 0.0
        %v5241 = vmax.f32 %v5235, 0.0
        %v5242 = vpack.c.bf16 %v5238, %v5238
        %v5243 = vpack.c.bf16 %v5239, %v5239
        %v5244 = vpack.c.bf16 %v5240, %v5240
        %v5245 = vpack.c.bf16 %v5241, %v5241
        %v5246 = vld [vmem:[#allocation3] sm:$0xf]
        %v5247 = vld [vmem:[#allocation3 + $0x4] sm:$0xf]
        %v5248 = vld [vmem:[#allocation3 + $0x8] sm:$0xf]
        %v5249 = vld [vmem:[#allocation3 + $0xc] sm:$0xf]
        %v5250 = vld [vmem:[#allocation3 + $0x10] sm:$0xf]
        %v5251 = vld [vmem:[#allocation3 + $0x14] sm:$0xf]
        %v5252 = vld [vmem:[#allocation3 + $0x18] sm:$0xf]
        %v5253 = vld [vmem:[#allocation3 + $0x1c] sm:$0xf]
        %v5254 = vld [vmem:[#allocation3 + $0x20] sm:$0xf]
        %v5255 = vld [vmem:[#allocation3 + $0x24] sm:$0xf]
        %v5256 = vld [vmem:[#allocation3 + $0x28] sm:$0xf]
        %v5257 = vld [vmem:[#allocation3 + $0x2c] sm:$0xf]
        %v5258 = vld [vmem:[#allocation3 + $0x30] sm:$0xf]
        %v5259 = vld [vmem:[#allocation3 + $0x34] sm:$0xf]
        %v5260 = vld [vmem:[#allocation3 + $0x38] sm:$0xf]
        %v5261 = vld [vmem:[#allocation3 + $0x3c] sm:$0xf]
        %v5262 = vld [vmem:[#allocation3 + $0x40] sm:$0xf]
        %v5263 = vld [vmem:[#allocation3 + $0x44] sm:$0xf]
        %v5264 = vld [vmem:[#allocation3 + $0x48] sm:$0xf]
        %v5265 = vld [vmem:[#allocation3 + $0x4c] sm:$0xf]
        %v5266 = vld [vmem:[#allocation3 + $0x50] sm:$0xf]
        %v5267 = vld [vmem:[#allocation3 + $0x54] sm:$0xf]
        %v5268 = vld [vmem:[#allocation3 + $0x58] sm:$0xf]
        %v5269 = vld [vmem:[#allocation3 + $0x5c] sm:$0xf]
        %v5270 = vld [vmem:[#allocation3 + $0x60] sm:$0xf]
        %v5271 = vld [vmem:[#allocation3 + $0x64] sm:$0xf]
        %v5272 = vld [vmem:[#allocation3 + $0x68] sm:$0xf]
        %v5273 = vld [vmem:[#allocation3 + $0x6c] sm:$0xf]
        %v5274 = vld [vmem:[#allocation3 + $0x70] sm:$0xf]
        %v5275 = vld [vmem:[#allocation3 + $0x74] sm:$0xf]
        %v5276 = vld [vmem:[#allocation3 + $0x78] sm:$0xf]
        %v5277 = vld [vmem:[#allocation3 + $0x7c] sm:$0xf]
        %v5278 = vld [vmem:[#allocation3 + $0x80] sm:$0xf]
        %v5279 = vld [vmem:[#allocation3 + $0x84] sm:$0xf]
        %v5280 = vld [vmem:[#allocation3 + $0x88] sm:$0xf]
        %v5281 = vld [vmem:[#allocation3 + $0x8c] sm:$0xf]
        %v5282 = vld [vmem:[#allocation3 + $0x90] sm:$0xf]
        %v5283 = vld [vmem:[#allocation3 + $0x94] sm:$0xf]
        %v5284 = vld [vmem:[#allocation3 + $0x98] sm:$0xf]
        %v5285 = vld [vmem:[#allocation3 + $0x9c] sm:$0xf]
        %v5286 = vld [vmem:[#allocation3 + $0xa0] sm:$0xf]
        %v5287 = vld [vmem:[#allocation3 + $0xa4] sm:$0xf]
        %v5288 = vld [vmem:[#allocation3 + $0xa8] sm:$0xf]
        %v5289 = vld [vmem:[#allocation3 + $0xac] sm:$0xf]
        %v5290 = vld [vmem:[#allocation3 + $0xb0] sm:$0xf]
        %v5291 = vld [vmem:[#allocation3 + $0xb4] sm:$0xf]
        %v5292 = vld [vmem:[#allocation3 + $0xb8] sm:$0xf]
        %v5293 = vld [vmem:[#allocation3 + $0xbc] sm:$0xf]
        %v5294 = vld [vmem:[#allocation3 + $0xc0] sm:$0xf]
        %v5295 = vld [vmem:[#allocation3 + $0xc4] sm:$0xf]
        %v5296 = vld [vmem:[#allocation3 + $0xc8] sm:$0xf]
        %v5297 = vld [vmem:[#allocation3 + $0xcc] sm:$0xf]
        %v5298 = vld [vmem:[#allocation3 + $0xd0] sm:$0xf]
        %v5299 = vld [vmem:[#allocation3 + $0xd4] sm:$0xf]
        %v5300 = vld [vmem:[#allocation3 + $0xd8] sm:$0xf]
        %v5301 = vld [vmem:[#allocation3 + $0xdc] sm:$0xf]
        %v5302 = vld [vmem:[#allocation3 + $0xe0] sm:$0xf]
        %v5303 = vld [vmem:[#allocation3 + $0xe4] sm:$0xf]
        %v5304 = vld [vmem:[#allocation3 + $0xe8] sm:$0xf]
        %v5305 = vld [vmem:[#allocation3 + $0xec] sm:$0xf]
        %v5306 = vld [vmem:[#allocation3 + $0xf0] sm:$0xf]
        %v5307 = vld [vmem:[#allocation3 + $0xf4] sm:$0xf]
        %v5308 = vld [vmem:[#allocation3 + $0xf8] sm:$0xf]
        %v5309 = vld [vmem:[#allocation3 + $0xfc] sm:$0xf]
        %v5310 = vld [vmem:[#allocation13 + $0x7] ss:$0 sm:$0xff]
        %v5375 = vunpack.c.l.b16 %v5246
        %v5376 = vunpack.c.l.b16 %v5247
        %v5377 = vunpack.c.l.b16 %v5248
        %v5378 = vunpack.c.l.b16 %v5249
        %v5379 = vunpack.c.l.b16 %v5250
        %v5380 = vunpack.c.l.b16 %v5251
        %v5381 = vunpack.c.l.b16 %v5252
        %v5382 = vunpack.c.l.b16 %v5253
        %v5383 = vunpack.c.l.b16 %v5254
        %v5384 = vunpack.c.l.b16 %v5255
        %v5385 = vunpack.c.l.b16 %v5256
        %v5386 = vunpack.c.l.b16 %v5257
        %v5387 = vunpack.c.l.b16 %v5258
        %v5388 = vunpack.c.l.b16 %v5259
        %v5389 = vunpack.c.l.b16 %v5260
        %v5390 = vunpack.c.l.b16 %v5261
        %v5391 = vunpack.c.l.b16 %v5262
        %v5392 = vunpack.c.l.b16 %v5263
        %v5393 = vunpack.c.l.b16 %v5264
        %v5394 = vunpack.c.l.b16 %v5265
        %v5395 = vunpack.c.l.b16 %v5266
        %v5396 = vunpack.c.l.b16 %v5267
        %v5397 = vunpack.c.l.b16 %v5268
        %v5398 = vunpack.c.l.b16 %v5269
        %v5399 = vunpack.c.l.b16 %v5270
        %v5400 = vunpack.c.l.b16 %v5271
        %v5401 = vunpack.c.l.b16 %v5272
        %v5402 = vunpack.c.l.b16 %v5273
        %v5403 = vunpack.c.l.b16 %v5274
        %v5404 = vunpack.c.l.b16 %v5275
        %v5405 = vunpack.c.l.b16 %v5276
        %v5406 = vunpack.c.l.b16 %v5277
        %v5407 = vunpack.c.l.b16 %v5278
        %v5408 = vunpack.c.l.b16 %v5279
        %v5409 = vunpack.c.l.b16 %v5280
        %v5410 = vunpack.c.l.b16 %v5281
        %v5411 = vunpack.c.l.b16 %v5282
        %v5412 = vunpack.c.l.b16 %v5283
        %v5413 = vunpack.c.l.b16 %v5284
        %v5414 = vunpack.c.l.b16 %v5285
        %v5415 = vunpack.c.l.b16 %v5286
        %v5416 = vunpack.c.l.b16 %v5287
        %v5417 = vunpack.c.l.b16 %v5288
        %v5418 = vunpack.c.l.b16 %v5289
        %v5419 = vunpack.c.l.b16 %v5290
        %v5420 = vunpack.c.l.b16 %v5291
        %v5421 = vunpack.c.l.b16 %v5292
        %v5422 = vunpack.c.l.b16 %v5293
        %v5423 = vunpack.c.l.b16 %v5294
        %v5424 = vunpack.c.l.b16 %v5295
        %v5425 = vunpack.c.l.b16 %v5296
        %v5426 = vunpack.c.l.b16 %v5297
        %v5427 = vunpack.c.l.b16 %v5298
        %v5428 = vunpack.c.l.b16 %v5299
        %v5429 = vunpack.c.l.b16 %v5300
        %v5430 = vunpack.c.l.b16 %v5301
        %v5431 = vunpack.c.l.b16 %v5302
        %v5432 = vunpack.c.l.b16 %v5303
        %v5433 = vunpack.c.l.b16 %v5304
        %v5434 = vunpack.c.l.b16 %v5305
        %v5435 = vunpack.c.l.b16 %v5306
        %v5436 = vunpack.c.l.b16 %v5307
        %v5437 = vunpack.c.l.b16 %v5308
        %v5438 = vunpack.c.l.b16 %v5309
        %v5439 = vpack.c.b16 %v5376, %v5375
        %v5440 = vpack.c.b16 %v5378, %v5377
        %v5441 = vpack.c.b16 %v5380, %v5379
        %v5442 = vpack.c.b16 %v5382, %v5381
        %v5443 = vpack.c.b16 %v5384, %v5383
        %v5444 = vpack.c.b16 %v5386, %v5385
        %v5445 = vpack.c.b16 %v5388, %v5387
        %v5446 = vpack.c.b16 %v5390, %v5389
        %v5447 = vpack.c.b16 %v5392, %v5391
        %v5448 = vpack.c.b16 %v5394, %v5393
        %v5449 = vpack.c.b16 %v5396, %v5395
        %v5450 = vpack.c.b16 %v5398, %v5397
        %v5451 = vpack.c.b16 %v5400, %v5399
        %v5452 = vpack.c.b16 %v5402, %v5401
        %v5453 = vpack.c.b16 %v5404, %v5403
        %v5454 = vpack.c.b16 %v5406, %v5405
        %v5455 = vpack.c.b16 %v5408, %v5407
        %v5456 = vpack.c.b16 %v5410, %v5409
        %v5457 = vpack.c.b16 %v5412, %v5411
        %v5458 = vpack.c.b16 %v5414, %v5413
        %v5459 = vpack.c.b16 %v5416, %v5415
        %v5460 = vpack.c.b16 %v5418, %v5417
        %v5461 = vpack.c.b16 %v5420, %v5419
        %v5462 = vpack.c.b16 %v5422, %v5421
        %v5463 = vpack.c.b16 %v5424, %v5423
        %v5464 = vpack.c.b16 %v5426, %v5425
        %v5465 = vpack.c.b16 %v5428, %v5427
        %v5466 = vpack.c.b16 %v5430, %v5429
        %v5467 = vpack.c.b16 %v5432, %v5431
        %v5468 = vpack.c.b16 %v5434, %v5433
        %v5469 = vpack.c.b16 %v5436, %v5435
        %v5470 = vpack.c.b16 %v5438, %v5437
        %5503 = vmatpush.bf16.msra.mxu0 %v5446
        %5504 = vmatpush.bf16.msra.mxu0 %v5445
        %5505 = vmatpush.bf16.msra.mxu0 %v5444
        %5506 = vmatpush.bf16.msra.mxu0 %v5443
        %5507 = vmatpush.bf16.msra.mxu0 %v5442
        %5508 = vmatpush.bf16.msra.mxu0 %v5441
        %5509 = vmatpush.bf16.msra.mxu0 %v5440
        %5510 = vmatpush.bf16.msra.mxu0 %v5439
        %5511 = vmatmul.bf16.gmra.mxu0 %v5242
        %v5512 = vpop.f32.mrf.mxu0
        %v5513 = vadd.f32 %v5310, %v5512
        %v5514 = vpop.f32.mrf.mxu0
        %5515 = vdwg.mxu0
        %5516 = vmatpush.bf16.msra.mxu0 %v5454
        %5517 = vmatpush.bf16.msra.mxu0 %v5453
        %5518 = vmatpush.bf16.msra.mxu0 %v5452
        %5519 = vmatpush.bf16.msra.mxu0 %v5451
        %5520 = vmatpush.bf16.msra.mxu0 %v5450
        %5521 = vmatpush.bf16.msra.mxu0 %v5449
        %5522 = vmatpush.bf16.msra.mxu0 %v5448
        %5523 = vmatpush.bf16.msra.mxu0 %v5447
        %5524 = vmatmul.bf16.gmra.mxu0 %v5243
        %v5525 = vpop.f32.mrf.mxu0
        %v5526 = vadd.f32 %v5513, %v5525
        %v5527 = vpop.f32.mrf.mxu0
        %5528 = vdwg.mxu0
        %5529 = vmatpush.bf16.msra.mxu0 %v5462
        %5530 = vmatpush.bf16.msra.mxu0 %v5461
        %5531 = vmatpush.bf16.msra.mxu0 %v5460
        %5532 = vmatpush.bf16.msra.mxu0 %v5459
        %5533 = vmatpush.bf16.msra.mxu0 %v5458
        %5534 = vmatpush.bf16.msra.mxu0 %v5457
        %5535 = vmatpush.bf16.msra.mxu0 %v5456
        %5536 = vmatpush.bf16.msra.mxu0 %v5455
        %5537 = vmatmul.bf16.gmra.mxu0 %v5244
        %v5538 = vpop.f32.mrf.mxu0
        %v5539 = vadd.f32 %v5526, %v5538
        %v5540 = vpop.f32.mrf.mxu0
        %5541 = vdwg.mxu0
        %5542 = vmatpush.bf16.msra.mxu0 %v5470
        %5543 = vmatpush.bf16.msra.mxu0 %v5469
        %5544 = vmatpush.bf16.msra.mxu0 %v5468
        %5545 = vmatpush.bf16.msra.mxu0 %v5467
        %5546 = vmatpush.bf16.msra.mxu0 %v5466
        %5547 = vmatpush.bf16.msra.mxu0 %v5465
        %5548 = vmatpush.bf16.msra.mxu0 %v5464
        %5549 = vmatpush.bf16.msra.mxu0 %v5463
        %5550 = vmatmul.bf16.gmra.mxu0 %v5245
        %v5551 = vpop.f32.mrf.mxu0
        %v5552 = vadd.f32 %v5539, %v5551
        %v5553 = vpop.f32.mrf.mxu0
        %5554 = vdwg.mxu0
        %5555 = vst [vmem:[%s367] sm:$0xff] %v5552
        %s5556 = sand.u32 %s156, 1
        %s5557 = scalar_lea.sflag [#allocation7], %s5556
        %s5558 = sand.u32 %s156, 1
        %s5559 = smul.addr %s5558, 8
        %s5560 = scalar_lea.vmem [#allocation14], %s5559
        %s5561 = sand.u32 %s182, 1
        %s5562 = scalar_lea.sflag [#allocation16], %s5561
        %s5563 = sand.u32 %s182, 1
        %s5564 = smul.addr %s5563, 8
        %s5565 = scalar_lea.vmem [#allocation15], %s5564
        // Predicated region
        $region77: #{tpu_custom_call.1} parent=39 // pred_check
          %p5566 = pneg %p166
        $region78: #{tpu_custom_call.1} parent=39 // pred_check_branch
          %5568 = sbr.rel (%p5566) target = $region80
        $region79: #{tpu_custom_call.1} parent=39 // pred_region
          %5570 = vsyncadd %s5557, 0
          %s5571 = smul.addr %s33, 8
          %s5572 = scalar_lea.hbm %s7, %s5571
          %s5574 = sshll.u32 %s5560, 4
          %s5575 = int_to_ptr.vmem [resolvable:$true] %s5574
          %s5576 = sshll.u32 %s5572, 4
          %s5577 = int_to_ptr.hbm [resolvable:$true] %s5576
          %5579 = dma.vmem_to_hbm [thread:$0]  %s5575, 128, %s5577, %s5557
        $region80: #{tpu_custom_call.1} parent=39 // pred_fallthru
          _
        // Predicated region
        $region81: #{tpu_custom_call.1} parent=39 // pred_check
          %p5580 = pneg %p192
        $region82: #{tpu_custom_call.1} parent=39 // pred_check_branch
          %5582 = sbr.rel (%p5580) target = $region84
        $region83: #{tpu_custom_call.1} parent=39 // pred_region
          %5584 = vsyncadd %s5562, 0
          %s5585 = smul.addr %s33, 8
          %s5586 = scalar_lea.hbm %s8, %s5585
          %s5588 = sshll.u32 %s5565, 4
          %s5589 = int_to_ptr.vmem [resolvable:$true] %s5588
          %s5590 = sshll.u32 %s5586, 4
          %s5591 = int_to_ptr.hbm [resolvable:$true] %s5590
          %5593 = dma.vmem_to_hbm [thread:$0]  %s5589, 128, %s5591, %s5562
        $region84: #{tpu_custom_call.1} parent=39 // pred_fallthru
          _
      $region40: #{tpu_custom_call.1} parent=5 // pred_fallthru
        _
      %p5594 = scmp.le.s32.totalorder 2, %s28
      // Predicated region
      $region85: #{tpu_custom_call.1} parent=5 // pred_check
        %p5595 = pneg %p5594
      $region86: #{tpu_custom_call.1} parent=5 // pred_check_branch
        %5597 = sbr.rel (%p5595) target = $region88
      $region87: #{tpu_custom_call.1} parent=5 // pred_region
        %s5598 = ssub.s32 %s28, 2
        // Predicated region
        $region89: #{tpu_custom_call.1} parent=87 // pred_check
          %p5599 = pneg %p172
        $region90: #{tpu_custom_call.1} parent=87 // pred_check_branch
          %5601 = sbr.rel (%p5599) target = $region92
        $region91: #{tpu_custom_call.1} parent=87 // pred_region
          %s5602 = sand.u32 %s157, 1
          %s5603 = scalar_lea.sflag [#allocation7], %s5602
          %s5604 = sand.u32 %s157, 1
          %s5605 = smul.addr %s5604, 8
          %s5606 = scalar_lea.vmem [#allocation14], %s5605
          %5608 = dma.done %s5603, 128
        $region92: #{tpu_custom_call.1} parent=87 // pred_fallthru
          _
        // Predicated region
        $region93: #{tpu_custom_call.1} parent=87 // pred_check
          %p5609 = pneg %p198
        $region94: #{tpu_custom_call.1} parent=87 // pred_check_branch
          %5611 = sbr.rel (%p5609) target = $region96
        $region95: #{tpu_custom_call.1} parent=87 // pred_region
          %s5612 = sand.u32 %s183, 1
          %s5613 = scalar_lea.sflag [#allocation16], %s5612
          %s5614 = sand.u32 %s183, 1
          %s5615 = smul.addr %s5614, 8
          %s5616 = scalar_lea.vmem [#allocation15], %s5615
          %5618 = dma.done %s5613, 128
        $region96: #{tpu_custom_call.1} parent=87 // pred_fallthru
          _
      $region88: #{tpu_custom_call.1} parent=5 // pred_fallthru
        _
    $region6: #{tpu_custom_call.1} parent=1 // loop_footer
      %s32 = sadd.s32 1, %s28
    $region7: #{tpu_custom_call.1} parent=1 // loop_footer_branch
      %27 = sbr.rel target = $region3
    $region8: #{tpu_custom_call.1} parent=1 // loop_exit
      _
    %5619 = vsyncpa [#allocation6], 1
    %s5620 = scalar_lea.sflag [#allocation6], 1
    %5621 = vsyncpa %s5620, 1
    %5622 = vsyncpa [#allocation9], 1
    %s5623 = scalar_lea.sflag [#allocation9], 1
    %5624 = vsyncpa %s5623, 1
    %5625 = vsyncpa [#allocation12], 1
    %5626 = vsyncpa [#allocation7], 1
    %s5627 = scalar_lea.sflag [#allocation7], 1
    %5628 = vsyncpa %s5627, 1
    %5629 = vsyncpa [#allocation16], 1
    %s5630 = scalar_lea.sflag [#allocation16], 1
    %5631 = vsyncpa %s5630, 1
  %5632 = vsyncmov [#allocation4]
  %s5633 = vpop.sfrf %5632
  %p5634 = scmp.eq.s32.totalorder %s5633, 0
  %p5635 = pneg %p5634
  %5637 = shalt.err (%p5635)
  %s5638 = scalar_lea.sflag [#allocation4], 1
  %5639 = vsyncmov %s5638
  %s5640 = vpop.sfrf %5639
  %p5641 = scmp.eq.s32.totalorder %s5640, 0
  %p5642 = pneg %p5641
  %5644 = shalt.err (%p5642)

</llo_original>
